<compile_context>
chip_gen: v7x
topology: tpu7x:2x2x1
jax: 0.10.0
libtpu: 0.0.40
codegen_flags: <defaults>
</compile_context>

<pallas_src>
import jax
import jax.numpy as jnp
import numpy as np
from jax import lax
from jax.experimental import pallas as pl
from jax.experimental.pallas import tpu as pltpu


# ------------------------------ block kernel ------------------------------
def vim_block_kernel(x_ref, ln_g_ref, ln_b_ref,
                     Wzx_ref, bzx_ref, Wc_ref, bc_ref,
                     Wf_f_ref, bdt_f_ref, AT_f_ref, Dp_f_ref,
                     Wf_b_ref, bdt_b_ref, AT_b_ref, Dp_b_ref,
                     out_ref,
                     dA_f, st_f, dA_b, st_b):
    S = x_ref.shape[1]
    D = x_ref.shape[2]            # == dim == dim_inner
    N = AT_f_ref.shape[0]         # d_state

    x = x_ref[0]                                              # (S, D) f32 skip

    # ---- LayerNorm over D (f32, lane reduction) ----
    mean = jnp.mean(x, axis=-1, keepdims=True)
    cen = x - mean
    var = jnp.mean(cen * cen, axis=-1, keepdims=True)
    xn = cen * lax.rsqrt(var + 1e-5) * ln_g_ref[...] + ln_b_ref[...]

    # ---- fused z / x projections (bf16 operands, f32 accumulate) ----
    zx = jnp.dot(xn.astype(jnp.bfloat16), Wzx_ref[...],
                 preferred_element_type=jnp.float32) + bzx_ref[...]   # (S, 2D)
    z1 = zx[:, :D]
    xp = zx[:, D:]

    # ---- fused fwd/bwd Conv1d(k=1) + softplus ----
    uu = jax.nn.softplus(
        jnp.dot(xp.astype(jnp.bfloat16), Wc_ref[...],
                preferred_element_type=jnp.float32) + bc_ref[...])    # (S, 2D)
    u_f = uu[:, :D]
    u_b = uu[:, D:]

    # ---- per-direction SSM prologue: one fused matmul, then batched
    #      precompute of exp(delta*A) and delta*u*B for ALL timesteps ----
    def prep(u, Wf_ref, bdt_ref, AT_ref, dA_ref, st_ref):
        fused = jnp.dot(u.astype(jnp.bfloat16), Wf_ref[...],
                        preferred_element_type=jnp.float32)   # (S, D + 2N)
        delta = jax.nn.softplus(fused[:, :D] + bdt_ref[...])  # (S, D)
        Bm = fused[:, D:D + N]                                 # (S, N)
        Cm = fused[:, D + N:D + 2 * N]                         # (S, N)
        # dA[t, n, d]  = exp(delta[t, d] * A[d, n])   (A^T stored as (N, D))
        dA_ref[...] = jnp.exp(delta[:, None, :] * AT_ref[...][None, :, :])
        # dBu[t, n, d] = delta[t, d] * u[t, d] * B[t, n]; st_ref holds dBu on
        # entry to the scan and the per-step state h[t] on exit (in place).
        st_ref[...] = (delta * u)[:, None, :] * Bm[:, :, None]
        return Cm

    C_f = prep(u_f, Wf_f_ref, bdt_f_ref, AT_f_ref, dA_f, st_f)
    C_b = prep(u_b, Wf_b_ref, bdt_b_ref, AT_b_ref, dA_b, st_b)

    # ---- interleaved forward / reversed-time selective scans ----
    # Pure VPU fma per step; no exp, no one-hot, no cross-lane work.
    def step(t, carry):
        sf, sb = carry
        tb = S - 1 - t
        sf = dA_f[t] * sf + st_f[t]        # (N, D)
        st_f[t] = sf
        sb = dA_b[tb] * sb + st_b[tb]      # (N, D)
        st_b[tb] = sb
        return sf, sb

    state0 = jnp.zeros((N, D), jnp.float32)
    lax.fori_loop(0, S, step, (state0, state0), unroll=max(1, min(8, S)))

    # ---- epilogue: y[t, d] = sum_n h[t, n, d] * C[t, n]  (batched, XLU) ----
    y_f = jnp.sum(st_f[...] * C_f[:, :, None], axis=1)        # (S, D)
    y_b = jnp.sum(st_b[...] * C_b[:, :, None], axis=1)        # (S, D)

    x1 = y_f + u_f * Dp_f_ref[...]
    x2 = y_b + u_b * Dp_b_ref[...]
    z = jax.nn.silu(z1)
    out_ref[0] = (x1 + x2) * z + x


# ------------------------------ host wrapper ------------------------------
_KP_ORDER = ['ln_g', 'ln_b', 'Wzx', 'bzx', 'Wc', 'bc',
             'Wf_f', 'bdt_f', 'AT_f', 'D_f',
             'Wf_b', 'bdt_b', 'AT_b', 'D_b']


def vision_mamba_block(x, kp):
    B, S, D = x.shape
    N = kp['AT_f'].shape[0]
    # The reference selective_scan requires dim_inner == dim.
    assert kp['AT_f'].shape[1] == D, "dim_inner must equal dim for VisionMambaBlock"
    assert kp['Wf_f'].shape == (D, D + 2 * N)

    args = [x] + [kp[k] for k in _KP_ORDER]
    in_specs = [pl.BlockSpec((1, S, D), lambda b: (b, 0, 0))]
    in_specs += [pl.BlockSpec(kp[k].shape, lambda b: (0, 0)) for k in _KP_ORDER]
    scratch = [pltpu.VMEM((S, N, D), jnp.float32),   # dA  (forward)
               pltpu.VMEM((S, N, D), jnp.float32),   # dBu / state (forward)
               pltpu.VMEM((S, N, D), jnp.float32),   # dA  (backward)
               pltpu.VMEM((S, N, D), jnp.float32)]   # dBu / state (backward)

    # VMEM budget derived from actual sizes (double-buffered blocks + weights
    # + scratch + headroom for prologue temporaries), capped at 64 MiB so it
    # stays within v7x physical VMEM as well.
    blk_bytes = 2 * 2 * S * D * 4                                   # x + out
    w_bytes = 2 * sum(int(kp[k].size) * kp[k].dtype.itemsize for k in _KP_ORDER)
    scr_bytes = 4 * S * N * D * 4
    interm_bytes = 12 * S * max(D + 2 * N, 2 * D) * 4
    vmem_limit = int(min(64 * 2**20,
                         max(16 * 2**20,
                             blk_bytes + w_bytes + scr_bytes + interm_bytes
                             + (4 << 20))))

    return pl.pallas_call(
        vim_block_kernel,
        out_shape=jax.ShapeDtypeStruct((B, S, D), jnp.float32),
        grid_spec=pltpu.PrefetchScalarGridSpec(
            num_scalar_prefetch=0,
            grid=(B,),
            in_specs=in_specs,
            out_specs=pl.BlockSpec((1, S, D), lambda b: (b, 0, 0)),
            scratch_shapes=scratch,
        ),
        compiler_params=pltpu.CompilerParams(
            dimension_semantics=("parallel",),
            vmem_limit_bytes=vmem_limit),
    )(*args)


# --------------------- parameters (torch layout + packing) ---------------------
def make_params(key, dim, dt_rank, dim_inner, d_state):
    assert dim_inner == dim, "reference selective_scan requires dim_inner == dim"
    ks = jax.random.split(key, 14)

    def u(k, shape, fan_in):
        lim = 1.0 / np.sqrt(fan_in)
        return jax.random.uniform(k, shape, jnp.float32, -lim, lim)

    r2n = dt_rank + 2 * d_state
    alog = jnp.log(jnp.arange(1, d_state + 1, dtype=jnp.float32))      # (N,)
    p = {
        'ln_g': jnp.ones((1, dim), jnp.float32),
        'ln_b': jnp.zeros((1, dim), jnp.float32),
        # Linear / Conv1d(k=1) weights stored pre-transposed: out = x @ W + b
        'Wz': u(ks[0], (dim, dim), dim),   'bz': u(ks[1], (1, dim), dim),
        'Wx': u(ks[2], (dim, dim), dim),   'bx': u(ks[3], (1, dim), dim),
        'Wcf': u(ks[4], (dim, dim), dim),  'bcf': u(ks[5], (1, dim), dim),
        'Wcb': u(ks[6], (dim, dim), dim),  'bcb': u(ks[7], (1, dim), dim),
        # SSM forward
        'Wdbc_f': u(ks[8], (dim, r2n), dim),
        'Wdt_f': u(ks[9], (dt_rank, dim_inner), dt_rank),
        'bdt_f': u(ks[10], (1, dim_inner), dt_rank),
        'AlogT_f': jnp.tile(alog[:, None], (1, dim_inner)),            # (N, Din)
        'D_f': jnp.ones((1, dim_inner), jnp.float32),
        # SSM backward
        'Wdbc_b': u(ks[11], (dim, r2n), dim),
        'Wdt_b': u(ks[12], (dt_rank, dim_inner), dt_rank),
        'bdt_b': u(ks[13], (1, dim_inner), dt_rank),
        'AlogT_b': jnp.tile(alog[:, None], (1, dim_inner)),
        'D_b': jnp.ones((1, dim_inner), jnp.float32),
    }
    return p


def pack_params(p):
    """Fuse / pre-transform torch-layout params into kernel params."""
    R = p['Wdt_f'].shape[0]

    def fuse_dbc(Wdbc, Wdt):
        # W_delta = Wdbc[:, :R] @ Wdt  -> fused [W_delta | W_B | W_C]
        Wdelta = jnp.dot(Wdbc[:, :R], Wdt, precision='highest')
        return jnp.concatenate([Wdelta, Wdbc[:, R:]], axis=1)

    bf16 = jnp.bfloat16
    return {
        'ln_g': p['ln_g'], 'ln_b': p['ln_b'],
        'Wzx': jnp.concatenate([p['Wz'], p['Wx']], axis=1).astype(bf16),
        'bzx': jnp.concatenate([p['bz'], p['bx']], axis=1),
        'Wc': jnp.concatenate([p['Wcf'], p['Wcb']], axis=1).astype(bf16),
        'bc': jnp.concatenate([p['bcf'], p['bcb']], axis=1),
        'Wf_f': fuse_dbc(p['Wdbc_f'], p['Wdt_f']).astype(bf16),
        'bdt_f': p['bdt_f'],
        'AT_f': -jnp.exp(p['AlogT_f']),          # A^T, (N, Din), f32
        'D_f': p['D_f'],
        'Wf_b': fuse_dbc(p['Wdbc_b'], p['Wdt_b']).astype(bf16),
        'bdt_b': p['bdt_b'],
        'AT_b': -jnp.exp(p['AlogT_b']),
        'D_b': p['D_b'],
    }


# ------------------- pure-JAX reference (torch semantics) -------------------
def ref_forward(x, p):
    dt_rank = p['Wdt_f'].shape[0]
    n = p['AlogT_f'].shape[0]
    mean = jnp.mean(x, axis=-1, keepdims=True)
    var = jnp.mean((x - mean) ** 2, axis=-1, keepdims=True)
    xn = (x - mean) / jnp.sqrt(var + 1e-5) * p['ln_g'][0] + p['ln_b'][0]
    z1 = xn @ p['Wz'] + p['bz'][0]
    xp = xn @ p['Wx'] + p['bx'][0]

    def ssm(u, Wdbc, Wdt, bdt, AlogT, Dp):
        A = -jnp.exp(jnp.transpose(AlogT))                 # (Din, N)
        dbc = u @ Wdbc
        delta = jax.nn.softplus(dbc[..., :dt_rank] @ Wdt + bdt[0])
        Bm = dbc[..., dt_rank:dt_rank + n]
        Cm = dbc[..., dt_rank + n:dt_rank + 2 * n]
        dA = jnp.exp(jnp.einsum('bld,dn->bldn', delta, A))
        dBu = jnp.einsum('bld,bln,bld->bldn', delta, Bm, u)
        b, l, Din = u.shape
        state = jnp.zeros((b, Din, n), jnp.float32)
        ys = []
        for i in range(l):
            state = dA[:, i] * state + dBu[:, i]
            ys.append(jnp.einsum('bdn,bn->bd', state, Cm[:, i]))
        return jnp.stack(ys, 1) + u * Dp[0]

    x1 = jax.nn.softplus(xp @ p['Wcf'] + p['bcf'][0])
    x1 = ssm(x1, p['Wdbc_f'], p['Wdt_f'], p['bdt_f'], p['AlogT_f'], p['D_f'])
    x2 = jnp.flip(xp, axis=1)
    x2 = jax.nn.softplus(x2 @ p['Wcb'] + p['bcb'][0])
    x2 = ssm(x2, p['Wdbc_b'], p['Wdt_b'], p['bdt_b'], p['AlogT_b'], p['D_b'])
    x2 = jnp.flip(x2, axis=1)
    z = jax.nn.silu(z1)
    return x1 * z + x2 * z + x


if __name__ == "__main__":
    dim, dt_rank, dim_inner, d_state = 32, 8, 32, 16   # dim_inner must equal dim
    B, S = 2, 8
    key = jax.random.PRNGKey(0)
    kx, kp_key = jax.random.split(key)
    x = jax.random.normal(kx, (B, S, dim), jnp.float32)
    params = make_params(kp_key, dim, dt_rank, dim_inner, d_state)
    kparams = pack_params(params)

    out = vision_mamba_block(x, kparams)
    out = jax.block_until_ready(out)

    with jax.default_matmul_precision("highest"):
        ref = ref_forward(x, params)
    # bf16 matmul operands (f32 accumulation) + host-fused W_delta -> looser tol.
    np.testing.assert_allclose(np.asarray(out), np.asarray(ref), rtol=2.5e-2, atol=2.5e-2)
    print("KERNEL_OK")
</pallas_src>

<mosaic_0001>
module attributes {stable_mosaic.version = 11 : i64} {
  func.func @vim_block_kernel(%arg0: i32, %arg1: memref<1x8x32xf32, #tpu.memory_space<vmem>>, %arg2: memref<1x32xf32, #tpu.memory_space<vmem>>, %arg3: memref<1x32xf32, #tpu.memory_space<vmem>>, %arg4: memref<32x64xbf16, #tpu.memory_space<vmem>>, %arg5: memref<1x64xf32, #tpu.memory_space<vmem>>, %arg6: memref<32x64xbf16, #tpu.memory_space<vmem>>, %arg7: memref<1x64xf32, #tpu.memory_space<vmem>>, %arg8: memref<32x64xbf16, #tpu.memory_space<vmem>>, %arg9: memref<1x32xf32, #tpu.memory_space<vmem>>, %arg10: memref<16x32xf32, #tpu.memory_space<vmem>>, %arg11: memref<1x32xf32, #tpu.memory_space<vmem>>, %arg12: memref<32x64xbf16, #tpu.memory_space<vmem>>, %arg13: memref<1x32xf32, #tpu.memory_space<vmem>>, %arg14: memref<16x32xf32, #tpu.memory_space<vmem>>, %arg15: memref<1x32xf32, #tpu.memory_space<vmem>>, %arg16: memref<1x8x32xf32, #tpu.memory_space<vmem>>, %arg17: memref<8x16x32xf32, #tpu.memory_space<vmem>>, %arg18: memref<8x16x32xf32, #tpu.memory_space<vmem>>, %arg19: memref<8x16x32xf32, #tpu.memory_space<vmem>>, %arg20: memref<8x16x32xf32, #tpu.memory_space<vmem>>) attributes {dimension_semantics = [#tpu.dimension_semantics<parallel>], iteration_bounds = array<i64: 2>, scalar_prefetch = 0 : i64, scratch_operands = 4 : i64, tpu.core_type = #tpu.core_type<tc>, window_params = [{transform_indices = @transform_0, window_bounds = array<i64: 1, 8, 32>}, {pipeline_mode = #tpu.pipeline_mode<synchronous>, transform_indices = @transform_1, window_bounds = array<i64: 1, 32>}, {pipeline_mode = #tpu.pipeline_mode<synchronous>, transform_indices = @transform_2, window_bounds = array<i64: 1, 32>}, {pipeline_mode = #tpu.pipeline_mode<synchronous>, transform_indices = @transform_3, window_bounds = array<i64: 32, 64>}, {pipeline_mode = #tpu.pipeline_mode<synchronous>, transform_indices = @transform_4, window_bounds = array<i64: 1, 64>}, {pipeline_mode = #tpu.pipeline_mode<synchronous>, transform_indices = @transform_5, window_bounds = array<i64: 32, 64>}, {pipeline_mode = #tpu.pipeline_mode<synchronous>, transform_indices = @transform_6, window_bounds = array<i64: 1, 64>}, {pipeline_mode = #tpu.pipeline_mode<synchronous>, transform_indices = @transform_7, window_bounds = array<i64: 32, 64>}, {pipeline_mode = #tpu.pipeline_mode<synchronous>, transform_indices = @transform_8, window_bounds = array<i64: 1, 32>}, {pipeline_mode = #tpu.pipeline_mode<synchronous>, transform_indices = @transform_9, window_bounds = array<i64: 16, 32>}, {pipeline_mode = #tpu.pipeline_mode<synchronous>, transform_indices = @transform_10, window_bounds = array<i64: 1, 32>}, {pipeline_mode = #tpu.pipeline_mode<synchronous>, transform_indices = @transform_11, window_bounds = array<i64: 32, 64>}, {pipeline_mode = #tpu.pipeline_mode<synchronous>, transform_indices = @transform_12, window_bounds = array<i64: 1, 32>}, {pipeline_mode = #tpu.pipeline_mode<synchronous>, transform_indices = @transform_13, window_bounds = array<i64: 16, 32>}, {pipeline_mode = #tpu.pipeline_mode<synchronous>, transform_indices = @transform_14, window_bounds = array<i64: 1, 32>}, {transform_indices = @transform_15, window_bounds = array<i64: 1, 8, 32>}]} {
    %c0 = arith.constant 0 : index
    %c0_0 = arith.constant 0 : index
    %c0_1 = arith.constant 0 : index
    %0 = vector.load %arg1[%c0, %c0_0, %c0_1] : memref<1x8x32xf32, #tpu.memory_space<vmem>>, vector<1x8x32xf32>
    %1 = vector.shape_cast %0 : vector<1x8x32xf32> to vector<8x32xf32>
    %cst = arith.constant dense<0.000000e+00> : vector<8xf32>
    %2 = vector.multi_reduction <add>, %1, %cst [1] : vector<8x32xf32> to vector<8xf32>
    %3 = vector.shape_cast %2 : vector<8xf32> to vector<8x1xf32>
    %cst_2 = arith.constant 3.200000e+01 : f32
    %4 = vector.broadcast %cst_2 : f32 to vector<8x1xf32>
    %5 = arith.divf %3, %4 : vector<8x1xf32>
    %6 = vector.broadcast %5 : vector<8x1xf32> to vector<8x32xf32>
    %7 = arith.subf %1, %6 : vector<8x32xf32>
    %8 = arith.mulf %7, %7 : vector<8x32xf32>
    %cst_3 = arith.constant dense<0.000000e+00> : vector<8xf32>
    %9 = vector.multi_reduction <add>, %8, %cst_3 [1] : vector<8x32xf32> to vector<8xf32>
    %10 = vector.shape_cast %9 : vector<8xf32> to vector<8x1xf32>
    %cst_4 = arith.constant 3.200000e+01 : f32
    %11 = vector.broadcast %cst_4 : f32 to vector<8x1xf32>
    %12 = arith.divf %10, %11 : vector<8x1xf32>
    %cst_5 = arith.constant 9.99999974E-6 : f32
    %13 = vector.broadcast %cst_5 : f32 to vector<8x1xf32>
    %14 = arith.addf %12, %13 : vector<8x1xf32>
    %15 = math.rsqrt %14 : vector<8x1xf32>
    %16 = vector.broadcast %15 : vector<8x1xf32> to vector<8x32xf32>
    %17 = arith.mulf %7, %16 : vector<8x32xf32>
    %c0_6 = arith.constant 0 : index
    %c0_7 = arith.constant 0 : index
    %18 = vector.load %arg2[%c0_6, %c0_7] : memref<1x32xf32, #tpu.memory_space<vmem>>, vector<1x32xf32>
    %19 = vector.broadcast %18 : vector<1x32xf32> to vector<8x32xf32>
    %20 = arith.mulf %17, %19 : vector<8x32xf32>
    %c0_8 = arith.constant 0 : index
    %c0_9 = arith.constant 0 : index
    %21 = vector.load %arg3[%c0_8, %c0_9] : memref<1x32xf32, #tpu.memory_space<vmem>>, vector<1x32xf32>
    %22 = vector.broadcast %21 : vector<1x32xf32> to vector<8x32xf32>
    %23 = arith.addf %20, %22 : vector<8x32xf32>
    %24 = arith.truncf %23 : vector<8x32xf32> to vector<8x32xbf16>
    %c0_10 = arith.constant 0 : index
    %c0_11 = arith.constant 0 : index
    %25 = vector.load %arg4[%c0_10, %c0_11] : memref<32x64xbf16, #tpu.memory_space<vmem>>, vector<32x64xbf16>
    %cst_12 = arith.constant dense<0.000000e+00> : vector<8x64xf32>
    %26 = tpu.matmul %24, %25, %cst_12 {dimension_numbers = #tpu.dot_dimension_numbers<[1], [0], [0], [1], [0, 0, 1, 1], [], []>} : vector<8x32xbf16>, vector<32x64xbf16>, vector<8x64xf32> -> vector<8x64xf32>
    %c0_13 = arith.constant 0 : index
    %c0_14 = arith.constant 0 : index
    %27 = vector.load %arg5[%c0_13, %c0_14] : memref<1x64xf32, #tpu.memory_space<vmem>>, vector<1x64xf32>
    %28 = vector.broadcast %27 : vector<1x64xf32> to vector<8x64xf32>
    %29 = arith.addf %26, %28 : vector<8x64xf32>
    %30 = vector.extract_strided_slice %29 {offsets = [0, 0], sizes = [8, 32], strides = [1, 1]} : vector<8x64xf32> to vector<8x32xf32>
    %31 = vector.extract_strided_slice %29 {offsets = [0, 32], sizes = [8, 32], strides = [1, 1]} : vector<8x64xf32> to vector<8x32xf32>
    %32 = arith.truncf %31 : vector<8x32xf32> to vector<8x32xbf16>
    %c0_15 = arith.constant 0 : index
    %c0_16 = arith.constant 0 : index
    %33 = vector.load %arg6[%c0_15, %c0_16] : memref<32x64xbf16, #tpu.memory_space<vmem>>, vector<32x64xbf16>
    %cst_17 = arith.constant dense<0.000000e+00> : vector<8x64xf32>
    %34 = tpu.matmul %32, %33, %cst_17 {dimension_numbers = #tpu.dot_dimension_numbers<[1], [0], [0], [1], [0, 0, 1, 1], [], []>} : vector<8x32xbf16>, vector<32x64xbf16>, vector<8x64xf32> -> vector<8x64xf32>
    %c0_18 = arith.constant 0 : index
    %c0_19 = arith.constant 0 : index
    %35 = vector.load %arg7[%c0_18, %c0_19] : memref<1x64xf32, #tpu.memory_space<vmem>>, vector<1x64xf32>
    %36 = vector.broadcast %35 : vector<1x64xf32> to vector<8x64xf32>
    %37 = arith.addf %34, %36 : vector<8x64xf32>
    %cst_20 = arith.constant 0.000000e+00 : f32
    %38 = vector.broadcast %cst_20 : f32 to vector<8x64xf32>
    %39 = arith.maximumf %37, %38 : vector<8x64xf32>
    %40 = vector.broadcast %cst_20 : f32 to vector<8x64xf32>
    %41 = arith.subf %37, %40 : vector<8x64xf32>
    %42 = arith.cmpf one, %41, %41 : vector<8x64xf32>
    %43 = vector.broadcast %cst_20 : f32 to vector<8x64xf32>
    %44 = arith.addf %37, %43 : vector<8x64xf32>
    %45 = math.absf %41 : vector<8x64xf32>
    %cst_21 = arith.constant 0.000000e+00 : f32
    %46 = vector.broadcast %cst_21 : f32 to vector<8x64xf32>
    %47 = arith.subf %46, %45 : vector<8x64xf32>
    %48 = math.exp %47 : vector<8x64xf32>
    %49 = math.log1p %48 : vector<8x64xf32>
    %50 = arith.addf %39, %49 : vector<8x64xf32>
    %51 = arith.select %42, %44, %50 : vector<8x64xi1>, vector<8x64xf32>
    %52 = vector.extract_strided_slice %51 {offsets = [0, 0], sizes = [8, 32], strides = [1, 1]} : vector<8x64xf32> to vector<8x32xf32>
    %53 = vector.extract_strided_slice %51 {offsets = [0, 32], sizes = [8, 32], strides = [1, 1]} : vector<8x64xf32> to vector<8x32xf32>
    %54 = arith.truncf %52 : vector<8x32xf32> to vector<8x32xbf16>
    %c0_22 = arith.constant 0 : index
    %c0_23 = arith.constant 0 : index
    %55 = vector.load %arg8[%c0_22, %c0_23] : memref<32x64xbf16, #tpu.memory_space<vmem>>, vector<32x64xbf16>
    %cst_24 = arith.constant dense<0.000000e+00> : vector<8x64xf32>
    %56 = tpu.matmul %54, %55, %cst_24 {dimension_numbers = #tpu.dot_dimension_numbers<[1], [0], [0], [1], [0, 0, 1, 1], [], []>} : vector<8x32xbf16>, vector<32x64xbf16>, vector<8x64xf32> -> vector<8x64xf32>
    %57 = vector.extract_strided_slice %56 {offsets = [0, 0], sizes = [8, 32], strides = [1, 1]} : vector<8x64xf32> to vector<8x32xf32>
    %c0_25 = arith.constant 0 : index
    %c0_26 = arith.constant 0 : index
    %58 = vector.load %arg9[%c0_25, %c0_26] : memref<1x32xf32, #tpu.memory_space<vmem>>, vector<1x32xf32>
    %59 = vector.broadcast %58 : vector<1x32xf32> to vector<8x32xf32>
    %60 = arith.addf %57, %59 : vector<8x32xf32>
    %cst_27 = arith.constant 0.000000e+00 : f32
    %61 = vector.broadcast %cst_27 : f32 to vector<8x32xf32>
    %62 = arith.maximumf %60, %61 : vector<8x32xf32>
    %63 = vector.broadcast %cst_27 : f32 to vector<8x32xf32>
    %64 = arith.subf %60, %63 : vector<8x32xf32>
    %65 = arith.cmpf one, %64, %64 : vector<8x32xf32>
    %66 = vector.broadcast %cst_27 : f32 to vector<8x32xf32>
    %67 = arith.addf %60, %66 : vector<8x32xf32>
    %68 = math.absf %64 : vector<8x32xf32>
    %cst_28 = arith.constant 0.000000e+00 : f32
    %69 = vector.broadcast %cst_28 : f32 to vector<8x32xf32>
    %70 = arith.subf %69, %68 : vector<8x32xf32>
    %71 = math.exp %70 : vector<8x32xf32>
    %72 = math.log1p %71 : vector<8x32xf32>
    %73 = arith.addf %62, %72 : vector<8x32xf32>
    %74 = arith.select %65, %67, %73 : vector<8x32xi1>, vector<8x32xf32>
    %75 = vector.extract_strided_slice %56 {offsets = [0, 32], sizes = [8, 16], strides = [1, 1]} : vector<8x64xf32> to vector<8x16xf32>
    %76 = vector.extract_strided_slice %56 {offsets = [0, 48], sizes = [8, 16], strides = [1, 1]} : vector<8x64xf32> to vector<8x16xf32>
    %77 = vector.shape_cast %74 : vector<8x32xf32> to vector<8x1x32xf32>
    %c0_29 = arith.constant 0 : index
    %c0_30 = arith.constant 0 : index
    %78 = vector.load %arg10[%c0_29, %c0_30] : memref<16x32xf32, #tpu.memory_space<vmem>>, vector<16x32xf32>
    %79 = vector.shape_cast %78 : vector<16x32xf32> to vector<1x16x32xf32>
    %80 = vector.broadcast %77 : vector<8x1x32xf32> to vector<8x16x32xf32>
    %81 = vector.broadcast %79 : vector<1x16x32xf32> to vector<8x16x32xf32>
    %82 = arith.mulf %80, %81 : vector<8x16x32xf32>
    %83 = math.exp %82 : vector<8x16x32xf32>
    %c0_31 = arith.constant 0 : index
    %c0_32 = arith.constant 0 : index
    %c0_33 = arith.constant 0 : index
    %84 = vector.load %arg17[%c0_31, %c0_32, %c0_33] : memref<8x16x32xf32, #tpu.memory_space<vmem>>, vector<8x16x32xf32>
    tpu.vector_store %arg17[%c0_31, %c0_32, %c0_33], %83 {strides = array<i32>} : memref<8x16x32xf32, #tpu.memory_space<vmem>>, vector<8x16x32xf32>,
    %85 = arith.mulf %74, %52 : vector<8x32xf32>
    %86 = vector.shape_cast %85 : vector<8x32xf32> to vector<8x1x32xf32>
    %87 = vector.shape_cast %75 : vector<8x16xf32> to vector<8x16x1xf32>
    %88 = vector.broadcast %86 : vector<8x1x32xf32> to vector<8x16x32xf32>
    %89 = vector.broadcast %87 : vector<8x16x1xf32> to vector<8x16x32xf32>
    %90 = arith.mulf %88, %89 : vector<8x16x32xf32>
    %c0_34 = arith.constant 0 : index
    %c0_35 = arith.constant 0 : index
    %c0_36 = arith.constant 0 : index
    %91 = vector.load %arg18[%c0_34, %c0_35, %c0_36] : memref<8x16x32xf32, #tpu.memory_space<vmem>>, vector<8x16x32xf32>
    tpu.vector_store %arg18[%c0_34, %c0_35, %c0_36], %90 {strides = array<i32>} : memref<8x16x32xf32, #tpu.memory_space<vmem>>, vector<8x16x32xf32>,
    %92 = arith.truncf %53 : vector<8x32xf32> to vector<8x32xbf16>
    %c0_37 = arith.constant 0 : index
    %c0_38 = arith.constant 0 : index
    %93 = vector.load %arg12[%c0_37, %c0_38] : memref<32x64xbf16, #tpu.memory_space<vmem>>, vector<32x64xbf16>
    %cst_39 = arith.constant dense<0.000000e+00> : vector<8x64xf32>
    %94 = tpu.matmul %92, %93, %cst_39 {dimension_numbers = #tpu.dot_dimension_numbers<[1], [0], [0], [1], [0, 0, 1, 1], [], []>} : vector<8x32xbf16>, vector<32x64xbf16>, vector<8x64xf32> -> vector<8x64xf32>
    %95 = vector.extract_strided_slice %94 {offsets = [0, 0], sizes = [8, 32], strides = [1, 1]} : vector<8x64xf32> to vector<8x32xf32>
    %c0_40 = arith.constant 0 : index
    %c0_41 = arith.constant 0 : index
    %96 = vector.load %arg13[%c0_40, %c0_41] : memref<1x32xf32, #tpu.memory_space<vmem>>, vector<1x32xf32>
    %97 = vector.broadcast %96 : vector<1x32xf32> to vector<8x32xf32>
    %98 = arith.addf %95, %97 : vector<8x32xf32>
    %cst_42 = arith.constant 0.000000e+00 : f32
    %99 = vector.broadcast %cst_42 : f32 to vector<8x32xf32>
    %100 = arith.maximumf %98, %99 : vector<8x32xf32>
    %101 = vector.broadcast %cst_42 : f32 to vector<8x32xf32>
    %102 = arith.subf %98, %101 : vector<8x32xf32>
    %103 = arith.cmpf one, %102, %102 : vector<8x32xf32>
    %104 = vector.broadcast %cst_42 : f32 to vector<8x32xf32>
    %105 = arith.addf %98, %104 : vector<8x32xf32>
    %106 = math.absf %102 : vector<8x32xf32>
    %cst_43 = arith.constant 0.000000e+00 : f32
    %107 = vector.broadcast %cst_43 : f32 to vector<8x32xf32>
    %108 = arith.subf %107, %106 : vector<8x32xf32>
    %109 = math.exp %108 : vector<8x32xf32>
    %110 = math.log1p %109 : vector<8x32xf32>
    %111 = arith.addf %100, %110 : vector<8x32xf32>
    %112 = arith.select %103, %105, %111 : vector<8x32xi1>, vector<8x32xf32>
    %113 = vector.extract_strided_slice %94 {offsets = [0, 32], sizes = [8, 16], strides = [1, 1]} : vector<8x64xf32> to vector<8x16xf32>
    %114 = vector.extract_strided_slice %94 {offsets = [0, 48], sizes = [8, 16], strides = [1, 1]} : vector<8x64xf32> to vector<8x16xf32>
    %115 = vector.shape_cast %112 : vector<8x32xf32> to vector<8x1x32xf32>
    %c0_44 = arith.constant 0 : index
    %c0_45 = arith.constant 0 : index
    %116 = vector.load %arg14[%c0_44, %c0_45] : memref<16x32xf32, #tpu.memory_space<vmem>>, vector<16x32xf32>
    %117 = vector.shape_cast %116 : vector<16x32xf32> to vector<1x16x32xf32>
    %118 = vector.broadcast %115 : vector<8x1x32xf32> to vector<8x16x32xf32>
    %119 = vector.broadcast %117 : vector<1x16x32xf32> to vector<8x16x32xf32>
    %120 = arith.mulf %118, %119 : vector<8x16x32xf32>
    %121 = math.exp %120 : vector<8x16x32xf32>
    %c0_46 = arith.constant 0 : index
    %c0_47 = arith.constant 0 : index
    %c0_48 = arith.constant 0 : index
    %122 = vector.load %arg19[%c0_46, %c0_47, %c0_48] : memref<8x16x32xf32, #tpu.memory_space<vmem>>, vector<8x16x32xf32>
    tpu.vector_store %arg19[%c0_46, %c0_47, %c0_48], %121 {strides = array<i32>} : memref<8x16x32xf32, #tpu.memory_space<vmem>>, vector<8x16x32xf32>,
    %123 = arith.mulf %112, %53 : vector<8x32xf32>
    %124 = vector.shape_cast %123 : vector<8x32xf32> to vector<8x1x32xf32>
    %125 = vector.shape_cast %113 : vector<8x16xf32> to vector<8x16x1xf32>
    %126 = vector.broadcast %124 : vector<8x1x32xf32> to vector<8x16x32xf32>
    %127 = vector.broadcast %125 : vector<8x16x1xf32> to vector<8x16x32xf32>
    %128 = arith.mulf %126, %127 : vector<8x16x32xf32>
    %c0_49 = arith.constant 0 : index
    %c0_50 = arith.constant 0 : index
    %c0_51 = arith.constant 0 : index
    %129 = vector.load %arg20[%c0_49, %c0_50, %c0_51] : memref<8x16x32xf32, #tpu.memory_space<vmem>>, vector<8x16x32xf32>
    tpu.vector_store %arg20[%c0_49, %c0_50, %c0_51], %128 {strides = array<i32>} : memref<8x16x32xf32, #tpu.memory_space<vmem>>, vector<8x16x32xf32>,
    %cst_52 = arith.constant 0.000000e+00 : f32
    %130 = vector.broadcast %cst_52 : f32 to vector<16x32xf32>
    %c0_i32 = arith.constant 0 : i32
    %c7_i32 = arith.constant 7 : i32
    %131 = arith.subi %c7_i32, %c0_i32 : i32
    %132 = arith.index_cast %c0_i32 : i32 to index
    %c0_53 = arith.constant 0 : index
    %c0_54 = arith.constant 0 : index
    %133 = vector.load %arg17[%132, %c0_53, %c0_54] : memref<8x16x32xf32, #tpu.memory_space<vmem>>, vector<1x16x32xf32>
    %134 = vector.shape_cast %133 : vector<1x16x32xf32> to vector<16x32xf32>
    %135 = arith.mulf %134, %130 : vector<16x32xf32>
    %136 = arith.index_cast %c0_i32 : i32 to index
    %c0_55 = arith.constant 0 : index
    %c0_56 = arith.constant 0 : index
    %137 = vector.load %arg18[%136, %c0_55, %c0_56] : memref<8x16x32xf32, #tpu.memory_space<vmem>>, vector<1x16x32xf32>
    %138 = vector.shape_cast %137 : vector<1x16x32xf32> to vector<16x32xf32>
    %139 = arith.addf %135, %138 : vector<16x32xf32>
    %140 = arith.index_cast %c0_i32 : i32 to index
    %c0_57 = arith.constant 0 : index
    %c0_58 = arith.constant 0 : index
    %141 = vector.load %arg18[%140, %c0_57, %c0_58] : memref<8x16x32xf32, #tpu.memory_space<vmem>>, vector<1x16x32xf32>
    %142 = vector.shape_cast %141 : vector<1x16x32xf32> to vector<16x32xf32>
    %143 = vector.shape_cast %139 : vector<16x32xf32> to vector<1x16x32xf32>
    tpu.vector_store %arg18[%140, %c0_57, %c0_58], %143 {strides = array<i32>} : memref<8x16x32xf32, #tpu.memory_space<vmem>>, vector<1x16x32xf32>,
    %144 = arith.index_cast %131 : i32 to index
    %c0_59 = arith.constant 0 : index
    %c0_60 = arith.constant 0 : index
    %145 = vector.load %arg19[%144, %c0_59, %c0_60] : memref<8x16x32xf32, #tpu.memory_space<vmem>>, vector<1x16x32xf32>
    %146 = vector.shape_cast %145 : vector<1x16x32xf32> to vector<16x32xf32>
    %147 = arith.mulf %146, %130 : vector<16x32xf32>
    %148 = arith.index_cast %131 : i32 to index
    %c0_61 = arith.constant 0 : index
    %c0_62 = arith.constant 0 : index
    %149 = vector.load %arg20[%148, %c0_61, %c0_62] : memref<8x16x32xf32, #tpu.memory_space<vmem>>, vector<1x16x32xf32>
    %150 = vector.shape_cast %149 : vector<1x16x32xf32> to vector<16x32xf32>
    %151 = arith.addf %147, %150 : vector<16x32xf32>
    %152 = arith.index_cast %131 : i32 to index
    %c0_63 = arith.constant 0 : index
    %c0_64 = arith.constant 0 : index
    %153 = vector.load %arg20[%152, %c0_63, %c0_64] : memref<8x16x32xf32, #tpu.memory_space<vmem>>, vector<1x16x32xf32>
    %154 = vector.shape_cast %153 : vector<1x16x32xf32> to vector<16x32xf32>
    %155 = vector.shape_cast %151 : vector<16x32xf32> to vector<1x16x32xf32>
    tpu.vector_store %arg20[%152, %c0_63, %c0_64], %155 {strides = array<i32>} : memref<8x16x32xf32, #tpu.memory_space<vmem>>, vector<1x16x32xf32>,
    %c1_i32 = arith.constant 1 : i32
    %c7_i32_65 = arith.constant 7 : i32
    %156 = arith.subi %c7_i32_65, %c1_i32 : i32
    %157 = arith.index_cast %c1_i32 : i32 to index
    %c0_66 = arith.constant 0 : index
    %c0_67 = arith.constant 0 : index
    %158 = vector.load %arg17[%157, %c0_66, %c0_67] : memref<8x16x32xf32, #tpu.memory_space<vmem>>, vector<1x16x32xf32>
    %159 = vector.shape_cast %158 : vector<1x16x32xf32> to vector<16x32xf32>
    %160 = arith.mulf %159, %139 : vector<16x32xf32>
    %161 = arith.index_cast %c1_i32 : i32 to index
    %c0_68 = arith.constant 0 : index
    %c0_69 = arith.constant 0 : index
    %162 = vector.load %arg18[%161, %c0_68, %c0_69] : memref<8x16x32xf32, #tpu.memory_space<vmem>>, vector<1x16x32xf32>
    %163 = vector.shape_cast %162 : vector<1x16x32xf32> to vector<16x32xf32>
    %164 = arith.addf %160, %163 : vector<16x32xf32>
    %165 = arith.index_cast %c1_i32 : i32 to index
    %c0_70 = arith.constant 0 : index
    %c0_71 = arith.constant 0 : index
    %166 = vector.load %arg18[%165, %c0_70, %c0_71] : memref<8x16x32xf32, #tpu.memory_space<vmem>>, vector<1x16x32xf32>
    %167 = vector.shape_cast %166 : vector<1x16x32xf32> to vector<16x32xf32>
    %168 = vector.shape_cast %164 : vector<16x32xf32> to vector<1x16x32xf32>
    tpu.vector_store %arg18[%165, %c0_70, %c0_71], %168 {strides = array<i32>} : memref<8x16x32xf32, #tpu.memory_space<vmem>>, vector<1x16x32xf32>,
    %169 = arith.index_cast %156 : i32 to index
    %c0_72 = arith.constant 0 : index
    %c0_73 = arith.constant 0 : index
    %170 = vector.load %arg19[%169, %c0_72, %c0_73] : memref<8x16x32xf32, #tpu.memory_space<vmem>>, vector<1x16x32xf32>
    %171 = vector.shape_cast %170 : vector<1x16x32xf32> to vector<16x32xf32>
    %172 = arith.mulf %171, %151 : vector<16x32xf32>
    %173 = arith.index_cast %156 : i32 to index
    %c0_74 = arith.constant 0 : index
    %c0_75 = arith.constant 0 : index
    %174 = vector.load %arg20[%173, %c0_74, %c0_75] : memref<8x16x32xf32, #tpu.memory_space<vmem>>, vector<1x16x32xf32>
    %175 = vector.shape_cast %174 : vector<1x16x32xf32> to vector<16x32xf32>
    %176 = arith.addf %172, %175 : vector<16x32xf32>
    %177 = arith.index_cast %156 : i32 to index
    %c0_76 = arith.constant 0 : index
    %c0_77 = arith.constant 0 : index
    %178 = vector.load %arg20[%177, %c0_76, %c0_77] : memref<8x16x32xf32, #tpu.memory_space<vmem>>, vector<1x16x32xf32>
    %179 = vector.shape_cast %178 : vector<1x16x32xf32> to vector<16x32xf32>
    %180 = vector.shape_cast %176 : vector<16x32xf32> to vector<1x16x32xf32>
    tpu.vector_store %arg20[%177, %c0_76, %c0_77], %180 {strides = array<i32>} : memref<8x16x32xf32, #tpu.memory_space<vmem>>, vector<1x16x32xf32>,
    %c2_i32 = arith.constant 2 : i32
    %c7_i32_78 = arith.constant 7 : i32
    %181 = arith.subi %c7_i32_78, %c2_i32 : i32
    %182 = arith.index_cast %c2_i32 : i32 to index
    %c0_79 = arith.constant 0 : index
    %c0_80 = arith.constant 0 : index
    %183 = vector.load %arg17[%182, %c0_79, %c0_80] : memref<8x16x32xf32, #tpu.memory_space<vmem>>, vector<1x16x32xf32>
    %184 = vector.shape_cast %183 : vector<1x16x32xf32> to vector<16x32xf32>
    %185 = arith.mulf %184, %164 : vector<16x32xf32>
    %186 = arith.index_cast %c2_i32 : i32 to index
    %c0_81 = arith.constant 0 : index
    %c0_82 = arith.constant 0 : index
    %187 = vector.load %arg18[%186, %c0_81, %c0_82] : memref<8x16x32xf32, #tpu.memory_space<vmem>>, vector<1x16x32xf32>
    %188 = vector.shape_cast %187 : vector<1x16x32xf32> to vector<16x32xf32>
    %189 = arith.addf %185, %188 : vector<16x32xf32>
    %190 = arith.index_cast %c2_i32 : i32 to index
    %c0_83 = arith.constant 0 : index
    %c0_84 = arith.constant 0 : index
    %191 = vector.load %arg18[%190, %c0_83, %c0_84] : memref<8x16x32xf32, #tpu.memory_space<vmem>>, vector<1x16x32xf32>
    %192 = vector.shape_cast %191 : vector<1x16x32xf32> to vector<16x32xf32>
    %193 = vector.shape_cast %189 : vector<16x32xf32> to vector<1x16x32xf32>
    tpu.vector_store %arg18[%190, %c0_83, %c0_84], %193 {strides = array<i32>} : memref<8x16x32xf32, #tpu.memory_space<vmem>>, vector<1x16x32xf32>,
    %194 = arith.index_cast %181 : i32 to index
    %c0_85 = arith.constant 0 : index
    %c0_86 = arith.constant 0 : index
    %195 = vector.load %arg19[%194, %c0_85, %c0_86] : memref<8x16x32xf32, #tpu.memory_space<vmem>>, vector<1x16x32xf32>
    %196 = vector.shape_cast %195 : vector<1x16x32xf32> to vector<16x32xf32>
    %197 = arith.mulf %196, %176 : vector<16x32xf32>
    %198 = arith.index_cast %181 : i32 to index
    %c0_87 = arith.constant 0 : index
    %c0_88 = arith.constant 0 : index
    %199 = vector.load %arg20[%198, %c0_87, %c0_88] : memref<8x16x32xf32, #tpu.memory_space<vmem>>, vector<1x16x32xf32>
    %200 = vector.shape_cast %199 : vector<1x16x32xf32> to vector<16x32xf32>
    %201 = arith.addf %197, %200 : vector<16x32xf32>
    %202 = arith.index_cast %181 : i32 to index
    %c0_89 = arith.constant 0 : index
    %c0_90 = arith.constant 0 : index
    %203 = vector.load %arg20[%202, %c0_89, %c0_90] : memref<8x16x32xf32, #tpu.memory_space<vmem>>, vector<1x16x32xf32>
    %204 = vector.shape_cast %203 : vector<1x16x32xf32> to vector<16x32xf32>
    %205 = vector.shape_cast %201 : vector<16x32xf32> to vector<1x16x32xf32>
    tpu.vector_store %arg20[%202, %c0_89, %c0_90], %205 {strides = array<i32>} : memref<8x16x32xf32, #tpu.memory_space<vmem>>, vector<1x16x32xf32>,
    %c3_i32 = arith.constant 3 : i32
    %c7_i32_91 = arith.constant 7 : i32
    %206 = arith.subi %c7_i32_91, %c3_i32 : i32
    %207 = arith.index_cast %c3_i32 : i32 to index
    %c0_92 = arith.constant 0 : index
    %c0_93 = arith.constant 0 : index
    %208 = vector.load %arg17[%207, %c0_92, %c0_93] : memref<8x16x32xf32, #tpu.memory_space<vmem>>, vector<1x16x32xf32>
    %209 = vector.shape_cast %208 : vector<1x16x32xf32> to vector<16x32xf32>
    %210 = arith.mulf %209, %189 : vector<16x32xf32>
    %211 = arith.index_cast %c3_i32 : i32 to index
    %c0_94 = arith.constant 0 : index
    %c0_95 = arith.constant 0 : index
    %212 = vector.load %arg18[%211, %c0_94, %c0_95] : memref<8x16x32xf32, #tpu.memory_space<vmem>>, vector<1x16x32xf32>
    %213 = vector.shape_cast %212 : vector<1x16x32xf32> to vector<16x32xf32>
    %214 = arith.addf %210, %213 : vector<16x32xf32>
    %215 = arith.index_cast %c3_i32 : i32 to index
    %c0_96 = arith.constant 0 : index
    %c0_97 = arith.constant 0 : index
    %216 = vector.load %arg18[%215, %c0_96, %c0_97] : memref<8x16x32xf32, #tpu.memory_space<vmem>>, vector<1x16x32xf32>
    %217 = vector.shape_cast %216 : vector<1x16x32xf32> to vector<16x32xf32>
    %218 = vector.shape_cast %214 : vector<16x32xf32> to vector<1x16x32xf32>
    tpu.vector_store %arg18[%215, %c0_96, %c0_97], %218 {strides = array<i32>} : memref<8x16x32xf32, #tpu.memory_space<vmem>>, vector<1x16x32xf32>,
    %219 = arith.index_cast %206 : i32 to index
    %c0_98 = arith.constant 0 : index
    %c0_99 = arith.constant 0 : index
    %220 = vector.load %arg19[%219, %c0_98, %c0_99] : memref<8x16x32xf32, #tpu.memory_space<vmem>>, vector<1x16x32xf32>
    %221 = vector.shape_cast %220 : vector<1x16x32xf32> to vector<16x32xf32>
    %222 = arith.mulf %221, %201 : vector<16x32xf32>
    %223 = arith.index_cast %206 : i32 to index
    %c0_100 = arith.constant 0 : index
    %c0_101 = arith.constant 0 : index
    %224 = vector.load %arg20[%223, %c0_100, %c0_101] : memref<8x16x32xf32, #tpu.memory_space<vmem>>, vector<1x16x32xf32>
    %225 = vector.shape_cast %224 : vector<1x16x32xf32> to vector<16x32xf32>
    %226 = arith.addf %222, %225 : vector<16x32xf32>
    %227 = arith.index_cast %206 : i32 to index
    %c0_102 = arith.constant 0 : index
    %c0_103 = arith.constant 0 : index
    %228 = vector.load %arg20[%227, %c0_102, %c0_103] : memref<8x16x32xf32, #tpu.memory_space<vmem>>, vector<1x16x32xf32>
    %229 = vector.shape_cast %228 : vector<1x16x32xf32> to vector<16x32xf32>
    %230 = vector.shape_cast %226 : vector<16x32xf32> to vector<1x16x32xf32>
    tpu.vector_store %arg20[%227, %c0_102, %c0_103], %230 {strides = array<i32>} : memref<8x16x32xf32, #tpu.memory_space<vmem>>, vector<1x16x32xf32>,
    %c4_i32 = arith.constant 4 : i32
    %c7_i32_104 = arith.constant 7 : i32
    %231 = arith.subi %c7_i32_104, %c4_i32 : i32
    %232 = arith.index_cast %c4_i32 : i32 to index
    %c0_105 = arith.constant 0 : index
    %c0_106 = arith.constant 0 : index
    %233 = vector.load %arg17[%232, %c0_105, %c0_106] : memref<8x16x32xf32, #tpu.memory_space<vmem>>, vector<1x16x32xf32>
    %234 = vector.shape_cast %233 : vector<1x16x32xf32> to vector<16x32xf32>
    %235 = arith.mulf %234, %214 : vector<16x32xf32>
    %236 = arith.index_cast %c4_i32 : i32 to index
    %c0_107 = arith.constant 0 : index
    %c0_108 = arith.constant 0 : index
    %237 = vector.load %arg18[%236, %c0_107, %c0_108] : memref<8x16x32xf32, #tpu.memory_space<vmem>>, vector<1x16x32xf32>
    %238 = vector.shape_cast %237 : vector<1x16x32xf32> to vector<16x32xf32>
    %239 = arith.addf %235, %238 : vector<16x32xf32>
    %240 = arith.index_cast %c4_i32 : i32 to index
    %c0_109 = arith.constant 0 : index
    %c0_110 = arith.constant 0 : index
    %241 = vector.load %arg18[%240, %c0_109, %c0_110] : memref<8x16x32xf32, #tpu.memory_space<vmem>>, vector<1x16x32xf32>
    %242 = vector.shape_cast %241 : vector<1x16x32xf32> to vector<16x32xf32>
    %243 = vector.shape_cast %239 : vector<16x32xf32> to vector<1x16x32xf32>
    tpu.vector_store %arg18[%240, %c0_109, %c0_110], %243 {strides = array<i32>} : memref<8x16x32xf32, #tpu.memory_space<vmem>>, vector<1x16x32xf32>,
    %244 = arith.index_cast %231 : i32 to index
    %c0_111 = arith.constant 0 : index
    %c0_112 = arith.constant 0 : index
    %245 = vector.load %arg19[%244, %c0_111, %c0_112] : memref<8x16x32xf32, #tpu.memory_space<vmem>>, vector<1x16x32xf32>
    %246 = vector.shape_cast %245 : vector<1x16x32xf32> to vector<16x32xf32>
    %247 = arith.mulf %246, %226 : vector<16x32xf32>
    %248 = arith.index_cast %231 : i32 to index
    %c0_113 = arith.constant 0 : index
    %c0_114 = arith.constant 0 : index
    %249 = vector.load %arg20[%248, %c0_113, %c0_114] : memref<8x16x32xf32, #tpu.memory_space<vmem>>, vector<1x16x32xf32>
    %250 = vector.shape_cast %249 : vector<1x16x32xf32> to vector<16x32xf32>
    %251 = arith.addf %247, %250 : vector<16x32xf32>
    %252 = arith.index_cast %231 : i32 to index
    %c0_115 = arith.constant 0 : index
    %c0_116 = arith.constant 0 : index
    %253 = vector.load %arg20[%252, %c0_115, %c0_116] : memref<8x16x32xf32, #tpu.memory_space<vmem>>, vector<1x16x32xf32>
    %254 = vector.shape_cast %253 : vector<1x16x32xf32> to vector<16x32xf32>
    %255 = vector.shape_cast %251 : vector<16x32xf32> to vector<1x16x32xf32>
    tpu.vector_store %arg20[%252, %c0_115, %c0_116], %255 {strides = array<i32>} : memref<8x16x32xf32, #tpu.memory_space<vmem>>, vector<1x16x32xf32>,
    %c5_i32 = arith.constant 5 : i32
    %c7_i32_117 = arith.constant 7 : i32
    %256 = arith.subi %c7_i32_117, %c5_i32 : i32
    %257 = arith.index_cast %c5_i32 : i32 to index
    %c0_118 = arith.constant 0 : index
    %c0_119 = arith.constant 0 : index
    %258 = vector.load %arg17[%257, %c0_118, %c0_119] : memref<8x16x32xf32, #tpu.memory_space<vmem>>, vector<1x16x32xf32>
    %259 = vector.shape_cast %258 : vector<1x16x32xf32> to vector<16x32xf32>
    %260 = arith.mulf %259, %239 : vector<16x32xf32>
    %261 = arith.index_cast %c5_i32 : i32 to index
    %c0_120 = arith.constant 0 : index
    %c0_121 = arith.constant 0 : index
    %262 = vector.load %arg18[%261, %c0_120, %c0_121] : memref<8x16x32xf32, #tpu.memory_space<vmem>>, vector<1x16x32xf32>
    %263 = vector.shape_cast %262 : vector<1x16x32xf32> to vector<16x32xf32>
    %264 = arith.addf %260, %263 : vector<16x32xf32>
    %265 = arith.index_cast %c5_i32 : i32 to index
    %c0_122 = arith.constant 0 : index
    %c0_123 = arith.constant 0 : index
    %266 = vector.load %arg18[%265, %c0_122, %c0_123] : memref<8x16x32xf32, #tpu.memory_space<vmem>>, vector<1x16x32xf32>
    %267 = vector.shape_cast %266 : vector<1x16x32xf32> to vector<16x32xf32>
    %268 = vector.shape_cast %264 : vector<16x32xf32> to vector<1x16x32xf32>
    tpu.vector_store %arg18[%265, %c0_122, %c0_123], %268 {strides = array<i32>} : memref<8x16x32xf32, #tpu.memory_space<vmem>>, vector<1x16x32xf32>,
    %269 = arith.index_cast %256 : i32 to index
    %c0_124 = arith.constant 0 : index
    %c0_125 = arith.constant 0 : index
    %270 = vector.load %arg19[%269, %c0_124, %c0_125] : memref<8x16x32xf32, #tpu.memory_space<vmem>>, vector<1x16x32xf32>
    %271 = vector.shape_cast %270 : vector<1x16x32xf32> to vector<16x32xf32>
    %272 = arith.mulf %271, %251 : vector<16x32xf32>
    %273 = arith.index_cast %256 : i32 to index
    %c0_126 = arith.constant 0 : index
    %c0_127 = arith.constant 0 : index
    %274 = vector.load %arg20[%273, %c0_126, %c0_127] : memref<8x16x32xf32, #tpu.memory_space<vmem>>, vector<1x16x32xf32>
    %275 = vector.shape_cast %274 : vector<1x16x32xf32> to vector<16x32xf32>
    %276 = arith.addf %272, %275 : vector<16x32xf32>
    %277 = arith.index_cast %256 : i32 to index
    %c0_128 = arith.constant 0 : index
    %c0_129 = arith.constant 0 : index
    %278 = vector.load %arg20[%277, %c0_128, %c0_129] : memref<8x16x32xf32, #tpu.memory_space<vmem>>, vector<1x16x32xf32>
    %279 = vector.shape_cast %278 : vector<1x16x32xf32> to vector<16x32xf32>
    %280 = vector.shape_cast %276 : vector<16x32xf32> to vector<1x16x32xf32>
    tpu.vector_store %arg20[%277, %c0_128, %c0_129], %280 {strides = array<i32>} : memref<8x16x32xf32, #tpu.memory_space<vmem>>, vector<1x16x32xf32>,
    %c6_i32 = arith.constant 6 : i32
    %c7_i32_130 = arith.constant 7 : i32
    %281 = arith.subi %c7_i32_130, %c6_i32 : i32
    %282 = arith.index_cast %c6_i32 : i32 to index
    %c0_131 = arith.constant 0 : index
    %c0_132 = arith.constant 0 : index
    %283 = vector.load %arg17[%282, %c0_131, %c0_132] : memref<8x16x32xf32, #tpu.memory_space<vmem>>, vector<1x16x32xf32>
    %284 = vector.shape_cast %283 : vector<1x16x32xf32> to vector<16x32xf32>
    %285 = arith.mulf %284, %264 : vector<16x32xf32>
    %286 = arith.index_cast %c6_i32 : i32 to index
    %c0_133 = arith.constant 0 : index
    %c0_134 = arith.constant 0 : index
    %287 = vector.load %arg18[%286, %c0_133, %c0_134] : memref<8x16x32xf32, #tpu.memory_space<vmem>>, vector<1x16x32xf32>
    %288 = vector.shape_cast %287 : vector<1x16x32xf32> to vector<16x32xf32>
    %289 = arith.addf %285, %288 : vector<16x32xf32>
    %290 = arith.index_cast %c6_i32 : i32 to index
    %c0_135 = arith.constant 0 : index
    %c0_136 = arith.constant 0 : index
    %291 = vector.load %arg18[%290, %c0_135, %c0_136] : memref<8x16x32xf32, #tpu.memory_space<vmem>>, vector<1x16x32xf32>
    %292 = vector.shape_cast %291 : vector<1x16x32xf32> to vector<16x32xf32>
    %293 = vector.shape_cast %289 : vector<16x32xf32> to vector<1x16x32xf32>
    tpu.vector_store %arg18[%290, %c0_135, %c0_136], %293 {strides = array<i32>} : memref<8x16x32xf32, #tpu.memory_space<vmem>>, vector<1x16x32xf32>,
    %294 = arith.index_cast %281 : i32 to index
    %c0_137 = arith.constant 0 : index
    %c0_138 = arith.constant 0 : index
    %295 = vector.load %arg19[%294, %c0_137, %c0_138] : memref<8x16x32xf32, #tpu.memory_space<vmem>>, vector<1x16x32xf32>
    %296 = vector.shape_cast %295 : vector<1x16x32xf32> to vector<16x32xf32>
    %297 = arith.mulf %296, %276 : vector<16x32xf32>
    %298 = arith.index_cast %281 : i32 to index
    %c0_139 = arith.constant 0 : index
    %c0_140 = arith.constant 0 : index
    %299 = vector.load %arg20[%298, %c0_139, %c0_140] : memref<8x16x32xf32, #tpu.memory_space<vmem>>, vector<1x16x32xf32>
    %300 = vector.shape_cast %299 : vector<1x16x32xf32> to vector<16x32xf32>
    %301 = arith.addf %297, %300 : vector<16x32xf32>
    %302 = arith.index_cast %281 : i32 to index
    %c0_141 = arith.constant 0 : index
    %c0_142 = arith.constant 0 : index
    %303 = vector.load %arg20[%302, %c0_141, %c0_142] : memref<8x16x32xf32, #tpu.memory_space<vmem>>, vector<1x16x32xf32>
    %304 = vector.shape_cast %303 : vector<1x16x32xf32> to vector<16x32xf32>
    %305 = vector.shape_cast %301 : vector<16x32xf32> to vector<1x16x32xf32>
    tpu.vector_store %arg20[%302, %c0_141, %c0_142], %305 {strides = array<i32>} : memref<8x16x32xf32, #tpu.memory_space<vmem>>, vector<1x16x32xf32>,
    %c7_i32_143 = arith.constant 7 : i32
    %c7_i32_144 = arith.constant 7 : i32
    %306 = arith.subi %c7_i32_144, %c7_i32_143 : i32
    %307 = arith.index_cast %c7_i32_143 : i32 to index
    %c0_145 = arith.constant 0 : index
    %c0_146 = arith.constant 0 : index
    %308 = vector.load %arg17[%307, %c0_145, %c0_146] : memref<8x16x32xf32, #tpu.memory_space<vmem>>, vector<1x16x32xf32>
    %309 = vector.shape_cast %308 : vector<1x16x32xf32> to vector<16x32xf32>
    %310 = arith.mulf %309, %289 : vector<16x32xf32>
    %311 = arith.index_cast %c7_i32_143 : i32 to index
    %c0_147 = arith.constant 0 : index
    %c0_148 = arith.constant 0 : index
    %312 = vector.load %arg18[%311, %c0_147, %c0_148] : memref<8x16x32xf32, #tpu.memory_space<vmem>>, vector<1x16x32xf32>
    %313 = vector.shape_cast %312 : vector<1x16x32xf32> to vector<16x32xf32>
    %314 = arith.addf %310, %313 : vector<16x32xf32>
    %315 = arith.index_cast %c7_i32_143 : i32 to index
    %c0_149 = arith.constant 0 : index
    %c0_150 = arith.constant 0 : index
    %316 = vector.load %arg18[%315, %c0_149, %c0_150] : memref<8x16x32xf32, #tpu.memory_space<vmem>>, vector<1x16x32xf32>
    %317 = vector.shape_cast %316 : vector<1x16x32xf32> to vector<16x32xf32>
    %318 = vector.shape_cast %314 : vector<16x32xf32> to vector<1x16x32xf32>
    tpu.vector_store %arg18[%315, %c0_149, %c0_150], %318 {strides = array<i32>} : memref<8x16x32xf32, #tpu.memory_space<vmem>>, vector<1x16x32xf32>,
    %319 = arith.index_cast %306 : i32 to index
    %c0_151 = arith.constant 0 : index
    %c0_152 = arith.constant 0 : index
    %320 = vector.load %arg19[%319, %c0_151, %c0_152] : memref<8x16x32xf32, #tpu.memory_space<vmem>>, vector<1x16x32xf32>
    %321 = vector.shape_cast %320 : vector<1x16x32xf32> to vector<16x32xf32>
    %322 = arith.mulf %321, %301 : vector<16x32xf32>
    %323 = arith.index_cast %306 : i32 to index
    %c0_153 = arith.constant 0 : index
    %c0_154 = arith.constant 0 : index
    %324 = vector.load %arg20[%323, %c0_153, %c0_154] : memref<8x16x32xf32, #tpu.memory_space<vmem>>, vector<1x16x32xf32>
    %325 = vector.shape_cast %324 : vector<1x16x32xf32> to vector<16x32xf32>
    %326 = arith.addf %322, %325 : vector<16x32xf32>
    %327 = arith.index_cast %306 : i32 to index
    %c0_155 = arith.constant 0 : index
    %c0_156 = arith.constant 0 : index
    %328 = vector.load %arg20[%327, %c0_155, %c0_156] : memref<8x16x32xf32, #tpu.memory_space<vmem>>, vector<1x16x32xf32>
    %329 = vector.shape_cast %328 : vector<1x16x32xf32> to vector<16x32xf32>
    %330 = vector.shape_cast %326 : vector<16x32xf32> to vector<1x16x32xf32>
    tpu.vector_store %arg20[%327, %c0_155, %c0_156], %330 {strides = array<i32>} : memref<8x16x32xf32, #tpu.memory_space<vmem>>, vector<1x16x32xf32>,
    %c8_i32 = arith.constant 8 : i32
    %c0_157 = arith.constant 0 : index
    %c0_158 = arith.constant 0 : index
    %c0_159 = arith.constant 0 : index
    %331 = vector.load %arg18[%c0_157, %c0_158, %c0_159] : memref<8x16x32xf32, #tpu.memory_space<vmem>>, vector<8x16x32xf32>
    %332 = vector.shape_cast %76 : vector<8x16xf32> to vector<8x16x1xf32>
    %333 = vector.broadcast %332 : vector<8x16x1xf32> to vector<8x16x32xf32>
    %334 = arith.mulf %331, %333 : vector<8x16x32xf32>
    %cst_160 = arith.constant dense<0.000000e+00> : vector<8x32xf32>
    %335 = vector.multi_reduction <add>, %334, %cst_160 [1] : vector<8x16x32xf32> to vector<8x32xf32>
    %c0_161 = arith.constant 0 : index
    %c0_162 = arith.constant 0 : index
    %c0_163 = arith.constant 0 : index
    %336 = vector.load %arg20[%c0_161, %c0_162, %c0_163] : memref<8x16x32xf32, #tpu.memory_space<vmem>>, vector<8x16x32xf32>
    %337 = vector.shape_cast %114 : vector<8x16xf32> to vector<8x16x1xf32>
    %338 = vector.broadcast %337 : vector<8x16x1xf32> to vector<8x16x32xf32>
    %339 = arith.mulf %336, %338 : vector<8x16x32xf32>
    %cst_164 = arith.constant dense<0.000000e+00> : vector<8x32xf32>
    %340 = vector.multi_reduction <add>, %339, %cst_164 [1] : vector<8x16x32xf32> to vector<8x32xf32>
    %c0_165 = arith.constant 0 : index
    %c0_166 = arith.constant 0 : index
    %341 = vector.load %arg11[%c0_165, %c0_166] : memref<1x32xf32, #tpu.memory_space<vmem>>, vector<1x32xf32>
    %342 = vector.broadcast %341 : vector<1x32xf32> to vector<8x32xf32>
    %343 = arith.mulf %52, %342 : vector<8x32xf32>
    %344 = arith.addf %335, %343 : vector<8x32xf32>
    %c0_167 = arith.constant 0 : index
    %c0_168 = arith.constant 0 : index
    %345 = vector.load %arg15[%c0_167, %c0_168] : memref<1x32xf32, #tpu.memory_space<vmem>>, vector<1x32xf32>
    %346 = vector.broadcast %345 : vector<1x32xf32> to vector<8x32xf32>
    %347 = arith.mulf %53, %346 : vector<8x32xf32>
    %348 = arith.addf %340, %347 : vector<8x32xf32>
    %349 = arith.negf %30 : vector<8x32xf32>
    %350 = math.exp %349 : vector<8x32xf32>
    %cst_169 = arith.constant 1.000000e+00 : f32
    %351 = vector.broadcast %cst_169 : f32 to vector<8x32xf32>
    %352 = arith.addf %351, %350 : vector<8x32xf32>
    %353 = arith.divf %351, %352 : vector<8x32xf32>
    %354 = arith.mulf %30, %353 : vector<8x32xf32>
    %355 = arith.addf %344, %348 : vector<8x32xf32>
    %356 = arith.mulf %355, %354 : vector<8x32xf32>
    %357 = arith.addf %356, %1 : vector<8x32xf32>
    %c0_170 = arith.constant 0 : index
    %c0_171 = arith.constant 0 : index
    %c0_172 = arith.constant 0 : index
    %358 = vector.load %arg16[%c0_170, %c0_171, %c0_172] : memref<1x8x32xf32, #tpu.memory_space<vmem>>, vector<1x8x32xf32>
    %359 = vector.shape_cast %358 : vector<1x8x32xf32> to vector<8x32xf32>
    %360 = vector.shape_cast %357 : vector<8x32xf32> to vector<1x8x32xf32>
    tpu.vector_store %arg16[%c0_170, %c0_171, %c0_172], %360 {strides = array<i32>} : memref<1x8x32xf32, #tpu.memory_space<vmem>>, vector<1x8x32xf32>,
    return
  }
  func.func @transform_0(%arg0: i32) -> (i32, i32, i32) {
    %c0_i32 = arith.constant 0 : i32
    %c0_i32_0 = arith.constant 0 : i32
    %c0_i32_1 = arith.constant 0 : i32
    return %arg0, %c0_i32, %c0_i32_0 : i32, i32, i32
  }
  func.func @transform_1(%arg0: i32) -> (i32, i32) {
    %c0_i32 = arith.constant 0 : i32
    %c0_i32_0 = arith.constant 0 : i32
    %c0_i32_1 = arith.constant 0 : i32
    return %c0_i32, %c0_i32_0 : i32, i32
  }
  func.func @transform_2(%arg0: i32) -> (i32, i32) {
    %c0_i32 = arith.constant 0 : i32
    %c0_i32_0 = arith.constant 0 : i32
    %c0_i32_1 = arith.constant 0 : i32
    return %c0_i32, %c0_i32_0 : i32, i32
  }
  func.func @transform_3(%arg0: i32) -> (i32, i32) {
    %c0_i32 = arith.constant 0 : i32
    %c0_i32_0 = arith.constant 0 : i32
    %c0_i32_1 = arith.constant 0 : i32
    return %c0_i32, %c0_i32_0 : i32, i32
  }
  func.func @transform_4(%arg0: i32) -> (i32, i32) {
    %c0_i32 = arith.constant 0 : i32
    %c0_i32_0 = arith.constant 0 : i32
    %c0_i32_1 = arith.constant 0 : i32
    return %c0_i32, %c0_i32_0 : i32, i32
  }
  func.func @transform_5(%arg0: i32) -> (i32, i32) {
    %c0_i32 = arith.constant 0 : i32
    %c0_i32_0 = arith.constant 0 : i32
    %c0_i32_1 = arith.constant 0 : i32
    return %c0_i32, %c0_i32_0 : i32, i32
  }
  func.func @transform_6(%arg0: i32) -> (i32, i32) {
    %c0_i32 = arith.constant 0 : i32
    %c0_i32_0 = arith.constant 0 : i32
    %c0_i32_1 = arith.constant 0 : i32
    return %c0_i32, %c0_i32_0 : i32, i32
  }
  func.func @transform_7(%arg0: i32) -> (i32, i32) {
    %c0_i32 = arith.constant 0 : i32
    %c0_i32_0 = arith.constant 0 : i32
    %c0_i32_1 = arith.constant 0 : i32
    return %c0_i32, %c0_i32_0 : i32, i32
  }
  func.func @transform_8(%arg0: i32) -> (i32, i32) {
    %c0_i32 = arith.constant 0 : i32
    %c0_i32_0 = arith.constant 0 : i32
    %c0_i32_1 = arith.constant 0 : i32
    return %c0_i32, %c0_i32_0 : i32, i32
  }
  func.func @transform_9(%arg0: i32) -> (i32, i32) {
    %c0_i32 = arith.constant 0 : i32
    %c0_i32_0 = arith.constant 0 : i32
    %c0_i32_1 = arith.constant 0 : i32
    return %c0_i32, %c0_i32_0 : i32, i32
  }
  func.func @transform_10(%arg0: i32) -> (i32, i32) {
    %c0_i32 = arith.constant 0 : i32
    %c0_i32_0 = arith.constant 0 : i32
    %c0_i32_1 = arith.constant 0 : i32
    return %c0_i32, %c0_i32_0 : i32, i32
  }
  func.func @transform_11(%arg0: i32) -> (i32, i32) {
    %c0_i32 = arith.constant 0 : i32
    %c0_i32_0 = arith.constant 0 : i32
    %c0_i32_1 = arith.constant 0 : i32
    return %c0_i32, %c0_i32_0 : i32, i32
  }
  func.func @transform_12(%arg0: i32) -> (i32, i32) {
    %c0_i32 = arith.constant 0 : i32
    %c0_i32_0 = arith.constant 0 : i32
    %c0_i32_1 = arith.constant 0 : i32
    return %c0_i32, %c0_i32_0 : i32, i32
  }
  func.func @transform_13(%arg0: i32) -> (i32, i32) {
    %c0_i32 = arith.constant 0 : i32
    %c0_i32_0 = arith.constant 0 : i32
    %c0_i32_1 = arith.constant 0 : i32
    return %c0_i32, %c0_i32_0 : i32, i32
  }
  func.func @transform_14(%arg0: i32) -> (i32, i32) {
    %c0_i32 = arith.constant 0 : i32
    %c0_i32_0 = arith.constant 0 : i32
    %c0_i32_1 = arith.constant 0 : i32
    return %c0_i32, %c0_i32_0 : i32, i32
  }
  func.func @transform_15(%arg0: i32) -> (i32, i32, i32) {
    %c0_i32 = arith.constant 0 : i32
    %c0_i32_0 = arith.constant 0 : i32
    %c0_i32_1 = arith.constant 0 : i32
    return %arg0, %c0_i32, %c0_i32_0 : i32, i32, i32
  }
}

</mosaic_0001>

<llo_original>
// kernel: tpu_custom_call.1
$region0: #{tpu_custom_call.1}
  #allocation0 [shape = 'u32[]', space=smem, size = 0x4, offset = 0x4, fixed_abs, tag = 'smem constant byte address 0x4 - core index']
  #allocation1 [shape = 'u32[144,128]{1,0:T(1,128)}', space=vmem, size = 0x12000, scoped, tag = 'internal scratch']
  #allocation2 [shape = 'f32[8,16,32]{2,1,0:T(8,128)}', space=vmem, size = 0x10000, scoped, tag = 'scratch operand']
  #allocation3 [shape = 'f32[8,16,32]{2,1,0:T(8,128)}', space=vmem, size = 0x10000, scoped, tag = 'scratch operand']
  #allocation4 [shape = 'f32[8,16,32]{2,1,0:T(8,128)}', space=vmem, size = 0x10000, scoped, tag = 'scratch operand']
  #allocation5 [shape = 'f32[8,16,32]{2,1,0:T(8,128)}', space=vmem, size = 0x10000, scoped, tag = 'scratch operand']
  %s0 = inlined_call_operand.hbm [shape: f32[2,8,32], index: 0, kind: input, shape index: {}]
  %s1 = inlined_call_operand.vmem [shape: f32[1,32], index: 1, kind: input, shape index: {}]
  %s2 = inlined_call_operand.hbm [shape: f32[1,32], index: 2, kind: input, shape index: {}]
  %s3 = inlined_call_operand.hbm [shape: bf16[32,64], index: 3, kind: input, shape index: {}]
  %s4 = inlined_call_operand.hbm [shape: f32[1,64], index: 4, kind: input, shape index: {}]
  %s5 = inlined_call_operand.vmem [shape: bf16[32,64], index: 5, kind: input, shape index: {}]
  %s6 = inlined_call_operand.hbm [shape: f32[1,64], index: 6, kind: input, shape index: {}]
  %s7 = inlined_call_operand.hbm [shape: bf16[32,64], index: 7, kind: input, shape index: {}]
  %s8 = inlined_call_operand.hbm [shape: f32[1,32], index: 8, kind: input, shape index: {}]
  %s9 = inlined_call_operand.vmem [shape: f32[16,32], index: 9, kind: input, shape index: {}]
  %s10 = inlined_call_operand.hbm [shape: f32[1,32], index: 10, kind: input, shape index: {}]
  %s11 = inlined_call_operand.hbm [shape: bf16[32,64], index: 11, kind: input, shape index: {}]
  %s12 = inlined_call_operand.hbm [shape: f32[1,32], index: 12, kind: input, shape index: {}]
  %s13 = inlined_call_operand.vmem [shape: f32[16,32], index: 13, kind: input, shape index: {}]
  %s14 = inlined_call_operand.vmem [shape: f32[1,32], index: 14, kind: input, shape index: {}]
  %s15 = inlined_call_operand.hbm [shape: f32[2,8,32], index: 15, kind: output, shape index: {}]
  %s16 = sld [smem:[#allocation0]]
  $region133: #{tpu_custom_call.1} parent=0
    _
  %s18 = ssub.s32 1, %s16
  %s19 = scalar_select 0, %s18, %s16
  $region1: #{tpu_custom_call.1} parent=0
    #allocation6 [shape = 'u8[8192]{0}', space=vmem, size = 0x2000, scoped, tag = 'input window, operand 0']
    #allocation7 [shape = 's32[2]{0}', space=sflag, size = 0x8, scoped, tag = 'scoped memory for tpu_custom_call.1']
    #allocation8 [shape = 's32[2]{0}', space=sflag, size = 0x8, scoped, tag = 'scoped memory for tpu_custom_call.1']
    #allocation9 [shape = 'u8[512]{0}', space=vmem, size = 0x400, scoped, tag = 'input window, operand 2, single buffered']
    #allocation10 [shape = 's32[1]{0}', space=sflag, size = 0x4, scoped, tag = 'scoped memory for tpu_custom_call.1']
    #allocation11 [shape = 'u8[8192]{0}', space=vmem, size = 0x2000, scoped, tag = 'input window, operand 3, single buffered']
    #allocation12 [shape = 'u8[512]{0}', space=vmem, size = 0x400, scoped, tag = 'input window, operand 4, single buffered']
    #allocation13 [shape = 's32[1]{0}', space=sflag, size = 0x4, scoped, tag = 'scoped memory for tpu_custom_call.1']
    #allocation14 [shape = 'u8[512]{0}', space=vmem, size = 0x400, scoped, tag = 'input window, operand 6, single buffered']
    #allocation15 [shape = 'u8[8192]{0}', space=vmem, size = 0x2000, scoped, tag = 'input window, operand 7, single buffered']
    #allocation16 [shape = 's32[1]{0}', space=sflag, size = 0x4, scoped, tag = 'scoped memory for tpu_custom_call.1']
    #allocation17 [shape = 'u8[512]{0}', space=vmem, size = 0x400, scoped, tag = 'input window, operand 8, single buffered']
    #allocation18 [shape = 'u8[512]{0}', space=vmem, size = 0x400, scoped, tag = 'input window, operand 10, single buffered']
    #allocation19 [shape = 's32[1]{0}', space=sflag, size = 0x4, scoped, tag = 'scoped memory for tpu_custom_call.1']
    #allocation20 [shape = 'u8[8192]{0}', space=vmem, size = 0x2000, scoped, tag = 'input window, operand 11, single buffered']
    #allocation21 [shape = 'u8[512]{0}', space=vmem, size = 0x400, scoped, tag = 'input window, operand 12, single buffered']
    #allocation22 [shape = 's32[1]{0}', space=sflag, size = 0x4, scoped, tag = 'scoped memory for tpu_custom_call.1']
    #allocation23 [shape = 'u8[8192]{0}', space=vmem, size = 0x2000, scoped, tag = 'output window, operand 0']
    %20 = vsyncpa [#allocation7], 0
    %s21 = scalar_lea.sflag [#allocation7], 1
    %22 = vsyncpa %s21, 0
    %23 = vsyncpa [#allocation10], 0
    %24 = vsyncpa [#allocation13], 0
    %25 = vsyncpa [#allocation16], 0
    %26 = vsyncpa [#allocation19], 0
    %27 = vsyncpa [#allocation22], 0
    %28 = vsyncpa [#allocation8], 0
    %s29 = scalar_lea.sflag [#allocation8], 1
    %30 = vsyncpa %s29, 0
    loop: start=0, step=1, limit=4
    $region2: #{tpu_custom_call.1} parent=1 // loop_pre_header
      _
    $region3: #{tpu_custom_call.1} parent=1 // loop_header
      %s32 = sphi 0, %s36
      %p33 = scmp.ge.s32.totalorder %s32, 4
      %s42 = sphi 0, %s44
      %s45 = sphi 0, %s42
      %s46 = sphi 0, %s45
      %s62 = sphi 0, %s46
      %s66 = sphi 0, %s66
      %s68 = sphi 0, %s66
      %s69 = sphi 0, %s68
      %s83 = sphi 0, %s69
      %s87 = sphi 0, %s87
      %s89 = sphi 0, %s87
      %s90 = sphi 0, %s89
      %s104 = sphi 0, %s90
      %s108 = sphi 0, %s108
      %s110 = sphi 0, %s108
      %s111 = sphi 0, %s110
      %s125 = sphi 0, %s111
      %s129 = sphi 0, %s129
      %s131 = sphi 0, %s129
      %s132 = sphi 0, %s131
      %s146 = sphi 0, %s132
      %s150 = sphi 0, %s150
      %s152 = sphi 0, %s150
      %s153 = sphi 0, %s152
      %s167 = sphi 0, %s153
      %s171 = sphi 0, %s171
      %s173 = sphi 0, %s171
      %s174 = sphi 0, %s173
      %s188 = sphi 0, %s174
      %s192 = sphi 0, %s192
      %s194 = sphi 0, %s192
      %s195 = sphi 0, %s194
      %s209 = sphi 0, %s195
      %s213 = sphi 0, %s213
      %s215 = sphi 0, %s213
      %s216 = sphi 0, %s215
      %s230 = sphi 0, %s216
      %s234 = sphi 0, %s234
      %s236 = sphi 0, %s234
      %s237 = sphi 0, %s236
      %s251 = sphi 0, %s237
      %s255 = sphi 0, %s255
      %s257 = sphi 0, %s255
      %s258 = sphi 0, %s257
      %s272 = sphi 0, %s258
      %s276 = sphi 0, %s276
      %s278 = sphi 0, %s276
      %s279 = sphi 0, %s278
      %s293 = sphi 0, %s279
      %s297 = sphi 0, %s297
      %s299 = sphi 0, %s297
      %s300 = sphi 0, %s299
      %s314 = sphi 0, %s300
      %s318 = sphi 0, %s318
      %s320 = sphi 0, %s318
      %s321 = sphi 0, %s320
      %s335 = sphi 0, %s321
      %s339 = sphi 0, %s339
      %s341 = sphi 0, %s339
      %s342 = sphi 0, %s341
      %s356 = sphi 0, %s342
      %s362 = sphi 0, %s364
      %s365 = sphi 0, %s362
      %s366 = sphi 0, %s365
      %s382 = sphi 0, %s366
    $region4: #{tpu_custom_call.1} parent=1 // loop_header_branch
      %35 = sbr.rel (%p33) target = $region8
    $region5: #{tpu_custom_call.1} parent=1 // loop_body
      %s37 = ssub.s32 %s32, 1
      %s38 = ssub.s32 %s32, 2
      %s39 = sadd.s32 %s32, 1
      %s40 = ssub.s32 %s32, %s39
      %p41 = scmp.eq.s32.totalorder %s40, 0
      %s43 = sadd.s32 %s42, 1
      %s44 = scalar_select %p41, %s42, %s43
      %p47 = pneg %p41
      %p48 = scmp.eq.s32.totalorder %s32, 1
      %p49 = por %p47, %p48
      %p50 = scmp.ne.s32.totalorder %s42, %s45
      %p51 = scmp.eq.s32.totalorder %s32, 0
      %p52 = por %p50, %p51
      %p53 = scmp.ne.s32.totalorder %s42, %s45
      %p54 = scmp.eq.s32.totalorder %s37, 1
      %p55 = por %p53, %p54
      %p56 = scmp.ne.s32.totalorder %s45, %s46
      %p57 = scmp.eq.s32.totalorder %s37, 0
      %p58 = por %p56, %p57
      %p59 = scmp.ne.s32.totalorder %s45, %s46
      %p60 = scmp.eq.s32.totalorder %s38, 1
      %p61 = por %p59, %p60
      %p63 = scmp.ne.s32.totalorder %s46, %s62
      %p64 = scmp.eq.s32.totalorder %s38, 0
      %p65 = por %p63, %p64
      %s67 = sadd.s32 %s66, 1
      %p70 = scmp.eq.s32.totalorder %s32, 1
      %p71 = scmp.ne.s32.totalorder %s66, %s68
      %p72 = scmp.eq.s32.totalorder %s32, 0
      %p73 = por %p71, %p72
      %p74 = scmp.ne.s32.totalorder %s66, %s68
      %p75 = scmp.eq.s32.totalorder %s37, 1
      %p76 = por %p74, %p75
      %p77 = scmp.ne.s32.totalorder %s68, %s69
      %p78 = scmp.eq.s32.totalorder %s37, 0
      %p79 = por %p77, %p78
      %p80 = scmp.ne.s32.totalorder %s68, %s69
      %p81 = scmp.eq.s32.totalorder %s38, 1
      %p82 = por %p80, %p81
      %p84 = scmp.ne.s32.totalorder %s69, %s83
      %p85 = scmp.eq.s32.totalorder %s38, 0
      %p86 = por %p84, %p85
      %s88 = sadd.s32 %s87, 1
      %p91 = scmp.eq.s32.totalorder %s32, 1
      %p92 = scmp.ne.s32.totalorder %s87, %s89
      %p93 = scmp.eq.s32.totalorder %s32, 0
      %p94 = por %p92, %p93
      %p95 = scmp.ne.s32.totalorder %s87, %s89
      %p96 = scmp.eq.s32.totalorder %s37, 1
      %p97 = por %p95, %p96
      %p98 = scmp.ne.s32.totalorder %s89, %s90
      %p99 = scmp.eq.s32.totalorder %s37, 0
      %p100 = por %p98, %p99
      %p101 = scmp.ne.s32.totalorder %s89, %s90
      %p102 = scmp.eq.s32.totalorder %s38, 1
      %p103 = por %p101, %p102
      %p105 = scmp.ne.s32.totalorder %s90, %s104
      %p106 = scmp.eq.s32.totalorder %s38, 0
      %p107 = por %p105, %p106
      %s109 = sadd.s32 %s108, 1
      %p112 = scmp.eq.s32.totalorder %s32, 1
      %p113 = scmp.ne.s32.totalorder %s108, %s110
      %p114 = scmp.eq.s32.totalorder %s32, 0
      %p115 = por %p113, %p114
      %p116 = scmp.ne.s32.totalorder %s108, %s110
      %p117 = scmp.eq.s32.totalorder %s37, 1
      %p118 = por %p116, %p117
      %p119 = scmp.ne.s32.totalorder %s110, %s111
      %p120 = scmp.eq.s32.totalorder %s37, 0
      %p121 = por %p119, %p120
      %p122 = scmp.ne.s32.totalorder %s110, %s111
      %p123 = scmp.eq.s32.totalorder %s38, 1
      %p124 = por %p122, %p123
      %p126 = scmp.ne.s32.totalorder %s111, %s125
      %p127 = scmp.eq.s32.totalorder %s38, 0
      %p128 = por %p126, %p127
      %s130 = sadd.s32 %s129, 1
      %p133 = scmp.eq.s32.totalorder %s32, 1
      %p134 = scmp.ne.s32.totalorder %s129, %s131
      %p135 = scmp.eq.s32.totalorder %s32, 0
      %p136 = por %p134, %p135
      %p137 = scmp.ne.s32.totalorder %s129, %s131
      %p138 = scmp.eq.s32.totalorder %s37, 1
      %p139 = por %p137, %p138
      %p140 = scmp.ne.s32.totalorder %s131, %s132
      %p141 = scmp.eq.s32.totalorder %s37, 0
      %p142 = por %p140, %p141
      %p143 = scmp.ne.s32.totalorder %s131, %s132
      %p144 = scmp.eq.s32.totalorder %s38, 1
      %p145 = por %p143, %p144
      %p147 = scmp.ne.s32.totalorder %s132, %s146
      %p148 = scmp.eq.s32.totalorder %s38, 0
      %p149 = por %p147, %p148
      %s151 = sadd.s32 %s150, 1
      %p154 = scmp.eq.s32.totalorder %s32, 1
      %p155 = scmp.ne.s32.totalorder %s150, %s152
      %p156 = scmp.eq.s32.totalorder %s32, 0
      %p157 = por %p155, %p156
      %p158 = scmp.ne.s32.totalorder %s150, %s152
      %p159 = scmp.eq.s32.totalorder %s37, 1
      %p160 = por %p158, %p159
      %p161 = scmp.ne.s32.totalorder %s152, %s153
      %p162 = scmp.eq.s32.totalorder %s37, 0
      %p163 = por %p161, %p162
      %p164 = scmp.ne.s32.totalorder %s152, %s153
      %p165 = scmp.eq.s32.totalorder %s38, 1
      %p166 = por %p164, %p165
      %p168 = scmp.ne.s32.totalorder %s153, %s167
      %p169 = scmp.eq.s32.totalorder %s38, 0
      %p170 = por %p168, %p169
      %s172 = sadd.s32 %s171, 1
      %p175 = scmp.eq.s32.totalorder %s32, 1
      %p176 = scmp.ne.s32.totalorder %s171, %s173
      %p177 = scmp.eq.s32.totalorder %s32, 0
      %p178 = por %p176, %p177
      %p179 = scmp.ne.s32.totalorder %s171, %s173
      %p180 = scmp.eq.s32.totalorder %s37, 1
      %p181 = por %p179, %p180
      %p182 = scmp.ne.s32.totalorder %s173, %s174
      %p183 = scmp.eq.s32.totalorder %s37, 0
      %p184 = por %p182, %p183
      %p185 = scmp.ne.s32.totalorder %s173, %s174
      %p186 = scmp.eq.s32.totalorder %s38, 1
      %p187 = por %p185, %p186
      %p189 = scmp.ne.s32.totalorder %s174, %s188
      %p190 = scmp.eq.s32.totalorder %s38, 0
      %p191 = por %p189, %p190
      %s193 = sadd.s32 %s192, 1
      %p196 = scmp.eq.s32.totalorder %s32, 1
      %p197 = scmp.ne.s32.totalorder %s192, %s194
      %p198 = scmp.eq.s32.totalorder %s32, 0
      %p199 = por %p197, %p198
      %p200 = scmp.ne.s32.totalorder %s192, %s194
      %p201 = scmp.eq.s32.totalorder %s37, 1
      %p202 = por %p200, %p201
      %p203 = scmp.ne.s32.totalorder %s194, %s195
      %p204 = scmp.eq.s32.totalorder %s37, 0
      %p205 = por %p203, %p204
      %p206 = scmp.ne.s32.totalorder %s194, %s195
      %p207 = scmp.eq.s32.totalorder %s38, 1
      %p208 = por %p206, %p207
      %p210 = scmp.ne.s32.totalorder %s195, %s209
      %p211 = scmp.eq.s32.totalorder %s38, 0
      %p212 = por %p210, %p211
      %s214 = sadd.s32 %s213, 1
      %p217 = scmp.eq.s32.totalorder %s32, 1
      %p218 = scmp.ne.s32.totalorder %s213, %s215
      %p219 = scmp.eq.s32.totalorder %s32, 0
      %p220 = por %p218, %p219
      %p221 = scmp.ne.s32.totalorder %s213, %s215
      %p222 = scmp.eq.s32.totalorder %s37, 1
      %p223 = por %p221, %p222
      %p224 = scmp.ne.s32.totalorder %s215, %s216
      %p225 = scmp.eq.s32.totalorder %s37, 0
      %p226 = por %p224, %p225
      %p227 = scmp.ne.s32.totalorder %s215, %s216
      %p228 = scmp.eq.s32.totalorder %s38, 1
      %p229 = por %p227, %p228
      %p231 = scmp.ne.s32.totalorder %s216, %s230
      %p232 = scmp.eq.s32.totalorder %s38, 0
      %p233 = por %p231, %p232
      %s235 = sadd.s32 %s234, 1
      %p238 = scmp.eq.s32.totalorder %s32, 1
      %p239 = scmp.ne.s32.totalorder %s234, %s236
      %p240 = scmp.eq.s32.totalorder %s32, 0
      %p241 = por %p239, %p240
      %p242 = scmp.ne.s32.totalorder %s234, %s236
      %p243 = scmp.eq.s32.totalorder %s37, 1
      %p244 = por %p242, %p243
      %p245 = scmp.ne.s32.totalorder %s236, %s237
      %p246 = scmp.eq.s32.totalorder %s37, 0
      %p247 = por %p245, %p246
      %p248 = scmp.ne.s32.totalorder %s236, %s237
      %p249 = scmp.eq.s32.totalorder %s38, 1
      %p250 = por %p248, %p249
      %p252 = scmp.ne.s32.totalorder %s237, %s251
      %p253 = scmp.eq.s32.totalorder %s38, 0
      %p254 = por %p252, %p253
      %s256 = sadd.s32 %s255, 1
      %p259 = scmp.eq.s32.totalorder %s32, 1
      %p260 = scmp.ne.s32.totalorder %s255, %s257
      %p261 = scmp.eq.s32.totalorder %s32, 0
      %p262 = por %p260, %p261
      %p263 = scmp.ne.s32.totalorder %s255, %s257
      %p264 = scmp.eq.s32.totalorder %s37, 1
      %p265 = por %p263, %p264
      %p266 = scmp.ne.s32.totalorder %s257, %s258
      %p267 = scmp.eq.s32.totalorder %s37, 0
      %p268 = por %p266, %p267
      %p269 = scmp.ne.s32.totalorder %s257, %s258
      %p270 = scmp.eq.s32.totalorder %s38, 1
      %p271 = por %p269, %p270
      %p273 = scmp.ne.s32.totalorder %s258, %s272
      %p274 = scmp.eq.s32.totalorder %s38, 0
      %p275 = por %p273, %p274
      %s277 = sadd.s32 %s276, 1
      %p280 = scmp.eq.s32.totalorder %s32, 1
      %p281 = scmp.ne.s32.totalorder %s276, %s278
      %p282 = scmp.eq.s32.totalorder %s32, 0
      %p283 = por %p281, %p282
      %p284 = scmp.ne.s32.totalorder %s276, %s278
      %p285 = scmp.eq.s32.totalorder %s37, 1
      %p286 = por %p284, %p285
      %p287 = scmp.ne.s32.totalorder %s278, %s279
      %p288 = scmp.eq.s32.totalorder %s37, 0
      %p289 = por %p287, %p288
      %p290 = scmp.ne.s32.totalorder %s278, %s279
      %p291 = scmp.eq.s32.totalorder %s38, 1
      %p292 = por %p290, %p291
      %p294 = scmp.ne.s32.totalorder %s279, %s293
      %p295 = scmp.eq.s32.totalorder %s38, 0
      %p296 = por %p294, %p295
      %s298 = sadd.s32 %s297, 1
      %p301 = scmp.eq.s32.totalorder %s32, 1
      %p302 = scmp.ne.s32.totalorder %s297, %s299
      %p303 = scmp.eq.s32.totalorder %s32, 0
      %p304 = por %p302, %p303
      %p305 = scmp.ne.s32.totalorder %s297, %s299
      %p306 = scmp.eq.s32.totalorder %s37, 1
      %p307 = por %p305, %p306
      %p308 = scmp.ne.s32.totalorder %s299, %s300
      %p309 = scmp.eq.s32.totalorder %s37, 0
      %p310 = por %p308, %p309
      %p311 = scmp.ne.s32.totalorder %s299, %s300
      %p312 = scmp.eq.s32.totalorder %s38, 1
      %p313 = por %p311, %p312
      %p315 = scmp.ne.s32.totalorder %s300, %s314
      %p316 = scmp.eq.s32.totalorder %s38, 0
      %p317 = por %p315, %p316
      %s319 = sadd.s32 %s318, 1
      %p322 = scmp.eq.s32.totalorder %s32, 1
      %p323 = scmp.ne.s32.totalorder %s318, %s320
      %p324 = scmp.eq.s32.totalorder %s32, 0
      %p325 = por %p323, %p324
      %p326 = scmp.ne.s32.totalorder %s318, %s320
      %p327 = scmp.eq.s32.totalorder %s37, 1
      %p328 = por %p326, %p327
      %p329 = scmp.ne.s32.totalorder %s320, %s321
      %p330 = scmp.eq.s32.totalorder %s37, 0
      %p331 = por %p329, %p330
      %p332 = scmp.ne.s32.totalorder %s320, %s321
      %p333 = scmp.eq.s32.totalorder %s38, 1
      %p334 = por %p332, %p333
      %p336 = scmp.ne.s32.totalorder %s321, %s335
      %p337 = scmp.eq.s32.totalorder %s38, 0
      %p338 = por %p336, %p337
      %s340 = sadd.s32 %s339, 1
      %p343 = scmp.eq.s32.totalorder %s32, 1
      %p344 = scmp.ne.s32.totalorder %s339, %s341
      %p345 = scmp.eq.s32.totalorder %s32, 0
      %p346 = por %p344, %p345
      %p347 = scmp.ne.s32.totalorder %s339, %s341
      %p348 = scmp.eq.s32.totalorder %s37, 1
      %p349 = por %p347, %p348
      %p350 = scmp.ne.s32.totalorder %s341, %s342
      %p351 = scmp.eq.s32.totalorder %s37, 0
      %p352 = por %p350, %p351
      %p353 = scmp.ne.s32.totalorder %s341, %s342
      %p354 = scmp.eq.s32.totalorder %s38, 1
      %p355 = por %p353, %p354
      %p357 = scmp.ne.s32.totalorder %s342, %s356
      %p358 = scmp.eq.s32.totalorder %s38, 0
      %p359 = por %p357, %p358
      %s360 = ssub.s32 %s32, %s39
      %p361 = scmp.eq.s32.totalorder %s360, 0
      %s363 = sadd.s32 %s362, 1
      %s364 = scalar_select %p361, %s362, %s363
      %p367 = pneg %p361
      %p368 = scmp.eq.s32.totalorder %s32, 1
      %p369 = por %p367, %p368
      %p370 = scmp.ne.s32.totalorder %s362, %s365
      %p371 = scmp.eq.s32.totalorder %s32, 0
      %p372 = por %p370, %p371
      %p373 = scmp.ne.s32.totalorder %s362, %s365
      %p374 = scmp.eq.s32.totalorder %s37, 1
      %p375 = por %p373, %p374
      %p376 = scmp.ne.s32.totalorder %s365, %s366
      %p377 = scmp.eq.s32.totalorder %s37, 0
      %p378 = por %p376, %p377
      %p379 = scmp.ne.s32.totalorder %s365, %s366
      %p380 = scmp.eq.s32.totalorder %s38, 1
      %p381 = por %p379, %p380
      %p383 = scmp.ne.s32.totalorder %s366, %s382
      %p384 = scmp.eq.s32.totalorder %s38, 0
      %p385 = por %p383, %p384
      %p386 = scmp.le.s32.totalorder 1, %s32
      %p387 = scmp.lt.s32.totalorder %s32, 3
      %p388 = pnand %p386, %p387
      %p389 = pneg %p388
      // Predicated region
      $region9: #{tpu_custom_call.1} parent=5 // pred_check
        _
      $region10: #{tpu_custom_call.1} parent=5 // pred_check_branch
        %391 = sbr.rel (%p388) target = $region12
      $region11: #{tpu_custom_call.1} parent=5 // pred_region
        %s392 = ssub.s32 %s32, 1
        // Predicated region
        $region13: #{tpu_custom_call.1} parent=11 // pred_check
          %p393 = pneg %p79
        $region14: #{tpu_custom_call.1} parent=11 // pred_check_branch
          %395 = sbr.rel (%p393) target = $region16
        $region15: #{tpu_custom_call.1} parent=11 // pred_region
          _
        $region16: #{tpu_custom_call.1} parent=11 // pred_fallthru
          _
        // Predicated region
        $region17: #{tpu_custom_call.1} parent=11 // pred_check
          %p396 = pneg %p100
        $region18: #{tpu_custom_call.1} parent=11 // pred_check_branch
          %398 = sbr.rel (%p396) target = $region20
        $region19: #{tpu_custom_call.1} parent=11 // pred_region
          %s400 = ssub.s32 16, 16
          %401 = vsyncadd [#allocation10], %s400
          %s403 = sshll.u32 [#allocation9], 4
          %s404 = int_to_ptr.vmem [resolvable:$true] %s403
          %406 = dma.hbm_to_vmem [thread:$0]  %s2, 16, %s404, [#allocation10]
        $region20: #{tpu_custom_call.1} parent=11 // pred_fallthru
          _
        // Predicated region
        $region21: #{tpu_custom_call.1} parent=11 // pred_check
          %p407 = pneg %p121
        $region22: #{tpu_custom_call.1} parent=11 // pred_check_branch
          %409 = sbr.rel (%p407) target = $region24
        $region23: #{tpu_custom_call.1} parent=11 // pred_region
          %s411 = ssub.s32 256, 256
          %412 = vsyncadd [#allocation10], %s411
          %s413 = sshll.u32 [#allocation11], 4
          %s414 = int_to_ptr.vmem [resolvable:$true] %s413
          %419 = dma.hbm_to_vmem [thread:$0]  %s3, 256, %s414, [#allocation10], 64, 64, 4
        $region24: #{tpu_custom_call.1} parent=11 // pred_fallthru
          _
        // Predicated region
        $region25: #{tpu_custom_call.1} parent=11 // pred_check
          %p420 = pneg %p142
        $region26: #{tpu_custom_call.1} parent=11 // pred_check_branch
          %422 = sbr.rel (%p420) target = $region28
        $region27: #{tpu_custom_call.1} parent=11 // pred_region
          %s424 = ssub.s32 16, 16
          %425 = vsyncadd [#allocation13], %s424
          %s427 = sshll.u32 [#allocation12], 4
          %s428 = int_to_ptr.vmem [resolvable:$true] %s427
          %430 = dma.hbm_to_vmem [thread:$0]  %s4, 16, %s428, [#allocation13]
        $region28: #{tpu_custom_call.1} parent=11 // pred_fallthru
          _
        // Predicated region
        $region29: #{tpu_custom_call.1} parent=11 // pred_check
          %p431 = pneg %p163
        $region30: #{tpu_custom_call.1} parent=11 // pred_check_branch
          %433 = sbr.rel (%p431) target = $region32
        $region31: #{tpu_custom_call.1} parent=11 // pred_region
          _
        $region32: #{tpu_custom_call.1} parent=11 // pred_fallthru
          _
        // Predicated region
        $region33: #{tpu_custom_call.1} parent=11 // pred_check
          %p434 = pneg %p184
        $region34: #{tpu_custom_call.1} parent=11 // pred_check_branch
          %436 = sbr.rel (%p434) target = $region36
        $region35: #{tpu_custom_call.1} parent=11 // pred_region
          %s438 = ssub.s32 16, 16
          %439 = vsyncadd [#allocation13], %s438
          %s441 = sshll.u32 [#allocation14], 4
          %s442 = int_to_ptr.vmem [resolvable:$true] %s441
          %444 = dma.hbm_to_vmem [thread:$0]  %s6, 16, %s442, [#allocation13]
        $region36: #{tpu_custom_call.1} parent=11 // pred_fallthru
          _
        // Predicated region
        $region37: #{tpu_custom_call.1} parent=11 // pred_check
          %p445 = pneg %p205
        $region38: #{tpu_custom_call.1} parent=11 // pred_check_branch
          %447 = sbr.rel (%p445) target = $region40
        $region39: #{tpu_custom_call.1} parent=11 // pred_region
          %s449 = ssub.s32 256, 256
          %450 = vsyncadd [#allocation16], %s449
          %s451 = sshll.u32 [#allocation15], 4
          %s452 = int_to_ptr.vmem [resolvable:$true] %s451
          %457 = dma.hbm_to_vmem [thread:$0]  %s7, 256, %s452, [#allocation16], 64, 64, 4
        $region40: #{tpu_custom_call.1} parent=11 // pred_fallthru
          _
        // Predicated region
        $region41: #{tpu_custom_call.1} parent=11 // pred_check
          %p458 = pneg %p226
        $region42: #{tpu_custom_call.1} parent=11 // pred_check_branch
          %460 = sbr.rel (%p458) target = $region44
        $region43: #{tpu_custom_call.1} parent=11 // pred_region
          %s462 = ssub.s32 16, 16
          %463 = vsyncadd [#allocation16], %s462
          %s465 = sshll.u32 [#allocation17], 4
          %s466 = int_to_ptr.vmem [resolvable:$true] %s465
          %468 = dma.hbm_to_vmem [thread:$0]  %s8, 16, %s466, [#allocation16]
        $region44: #{tpu_custom_call.1} parent=11 // pred_fallthru
          _
        // Predicated region
        $region45: #{tpu_custom_call.1} parent=11 // pred_check
          %p469 = pneg %p247
        $region46: #{tpu_custom_call.1} parent=11 // pred_check_branch
          %471 = sbr.rel (%p469) target = $region48
        $region47: #{tpu_custom_call.1} parent=11 // pred_region
          _
        $region48: #{tpu_custom_call.1} parent=11 // pred_fallthru
          _
        // Predicated region
        $region49: #{tpu_custom_call.1} parent=11 // pred_check
          %p472 = pneg %p268
        $region50: #{tpu_custom_call.1} parent=11 // pred_check_branch
          %474 = sbr.rel (%p472) target = $region52
        $region51: #{tpu_custom_call.1} parent=11 // pred_region
          %s476 = ssub.s32 16, 16
          %477 = vsyncadd [#allocation19], %s476
          %s479 = sshll.u32 [#allocation18], 4
          %s480 = int_to_ptr.vmem [resolvable:$true] %s479
          %482 = dma.hbm_to_vmem [thread:$0]  %s10, 16, %s480, [#allocation19]
        $region52: #{tpu_custom_call.1} parent=11 // pred_fallthru
          _
        // Predicated region
        $region53: #{tpu_custom_call.1} parent=11 // pred_check
          %p483 = pneg %p289
        $region54: #{tpu_custom_call.1} parent=11 // pred_check_branch
          %485 = sbr.rel (%p483) target = $region56
        $region55: #{tpu_custom_call.1} parent=11 // pred_region
          %s487 = ssub.s32 256, 256
          %488 = vsyncadd [#allocation19], %s487
          %s489 = sshll.u32 [#allocation20], 4
          %s490 = int_to_ptr.vmem [resolvable:$true] %s489
          %495 = dma.hbm_to_vmem [thread:$0]  %s11, 256, %s490, [#allocation19], 64, 64, 4
        $region56: #{tpu_custom_call.1} parent=11 // pred_fallthru
          _
        // Predicated region
        $region57: #{tpu_custom_call.1} parent=11 // pred_check
          %p496 = pneg %p310
        $region58: #{tpu_custom_call.1} parent=11 // pred_check_branch
          %498 = sbr.rel (%p496) target = $region60
        $region59: #{tpu_custom_call.1} parent=11 // pred_region
          %s500 = ssub.s32 16, 16
          %501 = vsyncadd [#allocation22], %s500
          %s503 = sshll.u32 [#allocation21], 4
          %s504 = int_to_ptr.vmem [resolvable:$true] %s503
          %506 = dma.hbm_to_vmem [thread:$0]  %s12, 16, %s504, [#allocation22]
        $region60: #{tpu_custom_call.1} parent=11 // pred_fallthru
          _
        // Predicated region
        $region61: #{tpu_custom_call.1} parent=11 // pred_check
          %p507 = pneg %p331
        $region62: #{tpu_custom_call.1} parent=11 // pred_check_branch
          %509 = sbr.rel (%p507) target = $region64
        $region63: #{tpu_custom_call.1} parent=11 // pred_region
          _
        $region64: #{tpu_custom_call.1} parent=11 // pred_fallthru
          _
        // Predicated region
        $region65: #{tpu_custom_call.1} parent=11 // pred_check
          %p510 = pneg %p352
        $region66: #{tpu_custom_call.1} parent=11 // pred_check_branch
          %512 = sbr.rel (%p510) target = $region68
        $region67: #{tpu_custom_call.1} parent=11 // pred_region
          _
        $region68: #{tpu_custom_call.1} parent=11 // pred_fallthru
          _
      $region12: #{tpu_custom_call.1} parent=5 // pred_fallthru
        _
      %p513 = scmp.lt.s32.totalorder %s32, 2
      // Predicated region
      $region69: #{tpu_custom_call.1} parent=5 // pred_check
        %p514 = pneg %p513
      $region70: #{tpu_custom_call.1} parent=5 // pred_check_branch
        %516 = sbr.rel (%p514) target = $region72
      $region71: #{tpu_custom_call.1} parent=5 // pred_region
        // Predicated region
        $region73: #{tpu_custom_call.1} parent=71 // pred_check
          %p517 = pneg %p52
        $region74: #{tpu_custom_call.1} parent=71 // pred_check_branch
          %519 = sbr.rel (%p517) target = $region76
        $region75: #{tpu_custom_call.1} parent=71 // pred_region
          %s520 = sand.u32 %s42, 1
          %s521 = scalar_lea.sflag [#allocation7], %s520
          %s522 = sand.u32 %s42, 1
          %s523 = smul.addr %s522, 8
          %s524 = scalar_lea.vmem [#allocation6], %s523
          %s526 = ssub.s32 128, 128
          %527 = vsyncadd %s521, %s526
          %s528 = smul.addr %s32, 128
          %s529 = scalar_lea.hbm %s0, %s528
          %s531 = sshll.u32 %s524, 4
          %s532 = int_to_ptr.vmem [resolvable:$true] %s531
          %534 = dma.hbm_to_vmem [thread:$0]  %s529, 128, %s532, %s521
        $region76: #{tpu_custom_call.1} parent=71 // pred_fallthru
          _
      $region72: #{tpu_custom_call.1} parent=5 // pred_fallthru
        _
      %p535 = scmp.le.s32.totalorder 1, %s32
      %p536 = scmp.lt.s32.totalorder %s32, 3
      %p537 = pnand %p535, %p536
      %p538 = pneg %p537
      // Predicated region
      $region77: #{tpu_custom_call.1} parent=5 // pred_check
        _
      $region78: #{tpu_custom_call.1} parent=5 // pred_check_branch
        %540 = sbr.rel (%p537) target = $region80
      $region79: #{tpu_custom_call.1} parent=5 // pred_region
        %s541 = ssub.s32 %s32, 1
        %s542 = sand.u32 %s45, 1
        %s543 = scalar_lea.sflag [#allocation7], %s542
        %s544 = sand.u32 %s45, 1
        %s545 = smul.addr %s544, 8
        %s546 = scalar_lea.vmem [#allocation6], %s545
        // Predicated region
        $region81: #{tpu_custom_call.1} parent=79 // pred_check
          %p547 = pneg %p58
        $region82: #{tpu_custom_call.1} parent=79 // pred_check_branch
          %549 = sbr.rel (%p547) target = $region84
        $region83: #{tpu_custom_call.1} parent=79 // pred_region
          %550 = dma.done %s543, 128
        $region84: #{tpu_custom_call.1} parent=79 // pred_fallthru
          _
        // Predicated region
        $region85: #{tpu_custom_call.1} parent=79 // pred_check
          %p551 = pneg %p100
        $region86: #{tpu_custom_call.1} parent=79 // pred_check_branch
          %553 = sbr.rel (%p551) target = $region88
        $region87: #{tpu_custom_call.1} parent=79 // pred_region
          %554 = dma.done [#allocation10], 16
        $region88: #{tpu_custom_call.1} parent=79 // pred_fallthru
          _
        // Predicated region
        $region89: #{tpu_custom_call.1} parent=79 // pred_check
          %p555 = pneg %p121
        $region90: #{tpu_custom_call.1} parent=79 // pred_check_branch
          %557 = sbr.rel (%p555) target = $region92
        $region91: #{tpu_custom_call.1} parent=79 // pred_region
          %558 = dma.done [#allocation10], 256
        $region92: #{tpu_custom_call.1} parent=79 // pred_fallthru
          _
        // Predicated region
        $region93: #{tpu_custom_call.1} parent=79 // pred_check
          %p559 = pneg %p142
        $region94: #{tpu_custom_call.1} parent=79 // pred_check_branch
          %561 = sbr.rel (%p559) target = $region96
        $region95: #{tpu_custom_call.1} parent=79 // pred_region
          %562 = dma.done [#allocation13], 16
        $region96: #{tpu_custom_call.1} parent=79 // pred_fallthru
          _
        // Predicated region
        $region97: #{tpu_custom_call.1} parent=79 // pred_check
          %p563 = pneg %p184
        $region98: #{tpu_custom_call.1} parent=79 // pred_check_branch
          %565 = sbr.rel (%p563) target = $region100
        $region99: #{tpu_custom_call.1} parent=79 // pred_region
          %566 = dma.done [#allocation13], 16
        $region100: #{tpu_custom_call.1} parent=79 // pred_fallthru
          _
        // Predicated region
        $region101: #{tpu_custom_call.1} parent=79 // pred_check
          %p567 = pneg %p205
        $region102: #{tpu_custom_call.1} parent=79 // pred_check_branch
          %569 = sbr.rel (%p567) target = $region104
        $region103: #{tpu_custom_call.1} parent=79 // pred_region
          %570 = dma.done [#allocation16], 256
        $region104: #{tpu_custom_call.1} parent=79 // pred_fallthru
          _
        // Predicated region
        $region105: #{tpu_custom_call.1} parent=79 // pred_check
          %p571 = pneg %p226
        $region106: #{tpu_custom_call.1} parent=79 // pred_check_branch
          %573 = sbr.rel (%p571) target = $region108
        $region107: #{tpu_custom_call.1} parent=79 // pred_region
          %574 = dma.done [#allocation16], 16
        $region108: #{tpu_custom_call.1} parent=79 // pred_fallthru
          _
        // Predicated region
        $region109: #{tpu_custom_call.1} parent=79 // pred_check
          %p575 = pneg %p268
        $region110: #{tpu_custom_call.1} parent=79 // pred_check_branch
          %577 = sbr.rel (%p575) target = $region112
        $region111: #{tpu_custom_call.1} parent=79 // pred_region
          %578 = dma.done [#allocation19], 16
        $region112: #{tpu_custom_call.1} parent=79 // pred_fallthru
          _
        // Predicated region
        $region113: #{tpu_custom_call.1} parent=79 // pred_check
          %p579 = pneg %p289
        $region114: #{tpu_custom_call.1} parent=79 // pred_check_branch
          %581 = sbr.rel (%p579) target = $region116
        $region115: #{tpu_custom_call.1} parent=79 // pred_region
          %582 = dma.done [#allocation19], 256
        $region116: #{tpu_custom_call.1} parent=79 // pred_fallthru
          _
        // Predicated region
        $region117: #{tpu_custom_call.1} parent=79 // pred_check
          %p583 = pneg %p310
        $region118: #{tpu_custom_call.1} parent=79 // pred_check_branch
          %585 = sbr.rel (%p583) target = $region120
        $region119: #{tpu_custom_call.1} parent=79 // pred_region
          %586 = dma.done [#allocation22], 16
        $region120: #{tpu_custom_call.1} parent=79 // pred_fallthru
          _
        %s587 = sand.u32 %s45, 1
        %s588 = scalar_lea.sflag [#allocation7], %s587
        %s589 = sand.u32 %s45, 1
        %s590 = smul.addr %s589, 8
        %s591 = scalar_lea.vmem [#allocation6], %s590
        %p592 = pneg %p58
        %p593 = pneg %p55
        %p594 = pneg %p79
        %p595 = pneg %p76
        %p596 = pneg %p100
        %p597 = pneg %p97
        %p598 = pneg %p121
        %p599 = pneg %p118
        %p600 = pneg %p142
        %p601 = pneg %p139
        %p602 = pneg %p163
        %p603 = pneg %p160
        %p604 = pneg %p184
        %p605 = pneg %p181
        %p606 = pneg %p205
        %p607 = pneg %p202
        %p608 = pneg %p226
        %p609 = pneg %p223
        %p610 = pneg %p247
        %p611 = pneg %p244
        %p612 = pneg %p268
        %p613 = pneg %p265
        %p614 = pneg %p289
        %p615 = pneg %p286
        %p616 = pneg %p310
        %p617 = pneg %p307
        %p618 = pneg %p331
        %p619 = pneg %p328
        %p620 = pneg %p352
        %p621 = pneg %p349
        %p622 = pneg %p378
        %p623 = pneg %p375
        %s624 = sand.u32 %s365, 1
        %s625 = scalar_lea.sflag [#allocation8], %s624
        %s626 = sand.u32 %s365, 1
        %s627 = smul.addr %s626, 8
        %s628 = scalar_lea.vmem [#allocation23], %s627
        %v630 = vld [vmem:[%s546] sm:$0xff]
        %vm631 = vcmask 261120
        %v632 = vsel %vm631, %v630, 0.0
        %633 = vadd.xlane.f32.xlu0 %v632
        %v634 = vpop.xlane.xlu0 %633
        %v635 = vrcp.pop 32.0
        %v636 = vmul.f32 %v634, %v635
        %v637 = vsub.f32 %v630, %v636
        %v638 = vmul.f32 %v637, %v637
        %v639 = vsel %vm631, %v638, 0.0
        %640 = vadd.xlane.f32.xlu0 %v639
        %v641 = vpop.xlane.xlu0 %640
        %v642 = vmul.f32 %v641, %v635
        %v643 = vadd.f32 %v642, 1e-05
        %v644 = vrsqrt.pop %v643
        %v645 = vmul.f32 %v637, %v644
        %v646 = vld [vmem:[%s1] sm:$0x1]
        %v648 = vlaneseq
        %v649 = vshrl.u32 %v648, 7
        %v650 = vsub.s32 0, %v649
        %v651 = vrot.slane %v646, %v650
        %v653 = vmul.f32 %v645, %v651
        %v654 = vld [vmem:[#allocation9] sm:$0x1]
        %v656 = vlaneseq
        %v657 = vshrl.u32 %v656, 7
        %v658 = vsub.s32 0, %v657
        %v659 = vrot.slane %v654, %v658
        %v661 = vadd.f32 %v653, %v659
        %v662 = vpack.c.bf16 %v661, %v661
        %v663 = vld [vmem:[#allocation11] sm:$0xf]
        %v664 = vld [vmem:[#allocation11 + $0x4] sm:$0xf]
        %v665 = vld [vmem:[#allocation11 + $0x8] sm:$0xf]
        %v666 = vld [vmem:[#allocation11 + $0xc] sm:$0xf]
        %v667 = vld [vmem:[#allocation12] sm:$0x1]
        %v669 = vlaneseq
        %v670 = vshrl.u32 %v669, 7
        %v671 = vsub.s32 0, %v670
        %v672 = vrot.slane %v667, %v671
        %v678 = vunpack.c.l.b16 %v663
        %v679 = vunpack.c.l.b16 %v664
        %v680 = vunpack.c.l.b16 %v665
        %v681 = vunpack.c.l.b16 %v666
        %v682 = vpack.c.b16 %v679, %v678
        %v683 = vpack.c.b16 %v681, %v680
        %v687 = vsel %vm631, %v662, 0
        %689 = vmatprep.subr.bf16.mxu0 0
        %690 = vmatpush1.bf16.msra.mxu0 %v682
        %691 = vmatprep.subr.bf16.mxu0 0
        %692 = vmatpush1.bf16.msra.mxu0 %v683
        %693 = vmatprep.subr.bf16.mxu0 0
        %694 = vmatpush1.bf16.msra.mxu0 0
        %695 = vmatprep.subr.bf16.mxu0 0
        %696 = vmatpush1.bf16.msra.mxu0 0
        %697 = vmatprep.subr.bf16.mxu0 0
        %698 = vmatpush1.bf16.msra.mxu0 0
        %699 = vmatprep.subr.bf16.mxu0 0
        %700 = vmatpush1.bf16.msra.mxu0 0
        %701 = vmatprep.subr.bf16.mxu0 0
        %702 = vmatpush1.bf16.msra.mxu0 0
        %703 = vmatprep.subr.bf16.mxu0 0
        %704 = vmatpush1.bf16.msra.mxu0 0
        %705 = vmatprep.subr.bf16.mxu0 0
        %706 = vmatpush1.bf16.msra.mxu0 0
        %707 = vmatprep.subr.bf16.mxu0 0
        %708 = vmatpush1.bf16.msra.mxu0 0
        %709 = vmatprep.subr.bf16.mxu0 0
        %710 = vmatpush1.bf16.msra.mxu0 0
        %711 = vmatprep.subr.bf16.mxu0 0
        %712 = vmatpush1.bf16.msra.mxu0 0
        %713 = vmatprep.subr.bf16.mxu0 0
        %714 = vmatpush1.bf16.msra.mxu0 0
        %715 = vmatprep.subr.bf16.mxu0 0
        %716 = vmatpush1.bf16.msra.mxu0 0
        %717 = vmatprep.subr.bf16.mxu0 0
        %718 = vmatpush1.bf16.msra.mxu0 0
        %719 = vmatprep.subr.bf16.mxu0 0
        %720 = vmatpush1.bf16.msra.mxu0 0
        %721 = vmatprep.mubr.bf16.mxu0 0
        %722 = vmatmul.mubr.bf16.gmra.mrb[0].mxu0 %v687
        %v723 = vpop.f32.mrb[0].mxu0
        %v724 = vadd.f32 %v672, %v723
        %v725 = vpop.f32.mrb[0].mxu0
        %v726 = vpop.f32.mrb[0].mxu0
        %v727 = vpop.f32.mrb[0].mxu0
        %728 = vdwg.mxu0
        %v729 = vpack.c.bf16 %v724, %v724
        %v730 = vld [vmem:[%s5] sm:$0xf]
        %v731 = vld [vmem:[%s5 + $0x4] sm:$0xf]
        %v732 = vld [vmem:[%s5 + $0x8] sm:$0xf]
        %v733 = vld [vmem:[%s5 + $0xc] sm:$0xf]
        %v734 = vld [vmem:[#allocation14] sm:$0x1]
        %v736 = vlaneseq
        %v737 = vshrl.u32 %v736, 7
        %v738 = vsub.s32 0, %v737
        %v739 = vrot.slane %v734, %v738
        %742 = vrot.lane.b32.xlu0 %v729, 96
        %v743 = vpop.permute.xlu0 %742
        %v748 = vunpack.c.l.b16 %v730
        %v749 = vunpack.c.l.b16 %v731
        %v750 = vunpack.c.l.b16 %v732
        %v751 = vunpack.c.l.b16 %v733
        %v752 = vpack.c.b16 %v749, %v748
        %v753 = vpack.c.b16 %v751, %v750
        %v757 = vsel %vm631, %v743, 0
        %759 = vmatprep.subr.bf16.mxu0 0
        %760 = vmatpush1.bf16.msra.mxu0 %v752
        %761 = vmatprep.subr.bf16.mxu0 0
        %762 = vmatpush1.bf16.msra.mxu0 %v753
        %763 = vmatprep.subr.bf16.mxu0 0
        %764 = vmatpush1.bf16.msra.mxu0 0
        %765 = vmatprep.subr.bf16.mxu0 0
        %766 = vmatpush1.bf16.msra.mxu0 0
        %767 = vmatprep.subr.bf16.mxu0 0
        %768 = vmatpush1.bf16.msra.mxu0 0
        %769 = vmatprep.subr.bf16.mxu0 0
        %770 = vmatpush1.bf16.msra.mxu0 0
        %771 = vmatprep.subr.bf16.mxu0 0
        %772 = vmatpush1.bf16.msra.mxu0 0
        %773 = vmatprep.subr.bf16.mxu0 0
        %774 = vmatpush1.bf16.msra.mxu0 0
        %775 = vmatprep.subr.bf16.mxu0 0
        %776 = vmatpush1.bf16.msra.mxu0 0
        %777 = vmatprep.subr.bf16.mxu0 0
        %778 = vmatpush1.bf16.msra.mxu0 0
        %779 = vmatprep.subr.bf16.mxu0 0
        %780 = vmatpush1.bf16.msra.mxu0 0
        %781 = vmatprep.subr.bf16.mxu0 0
        %782 = vmatpush1.bf16.msra.mxu0 0
        %783 = vmatprep.subr.bf16.mxu0 0
        %784 = vmatpush1.bf16.msra.mxu0 0
        %785 = vmatprep.subr.bf16.mxu0 0
        %786 = vmatpush1.bf16.msra.mxu0 0
        %787 = vmatprep.subr.bf16.mxu0 0
        %788 = vmatpush1.bf16.msra.mxu0 0
        %789 = vmatprep.subr.bf16.mxu0 0
        %790 = vmatpush1.bf16.msra.mxu0 0
        %791 = vmatprep.mubr.bf16.mxu0 0
        %792 = vmatmul.mubr.bf16.gmra.mrb[0].mxu0 %v757
        %v793 = vpop.f32.mrb[0].mxu0
        %v794 = vadd.f32 %v739, %v793
        %v795 = vpop.f32.mrb[0].mxu0
        %v796 = vpop.f32.mrb[0].mxu0
        %v797 = vpop.f32.mrb[0].mxu0
        %798 = vdwg.mxu0
        %v799 = vmax.f32 %v794, 0.0
        %vm800 = vcmp.ne.f32.partialorder %v794, %v794
        %v801 = vadd.f32 %v794, 0.0
        %v802 = vand.u32 2147483647, %v794
        %v803 = vsub.f32 0.0, %v802
        %v804 = vmul.f32 %v803, 1.442695
        %v805 = vpow.pop %v804
        %v806 = vadd.f32 %v805, 1.0
        %v807 = vlog2.pop %v806
        %v808 = vmul.f32 %v807, 0.6931472
        %v809 = vmul.f32 -0.5, %v805
        %v810 = vadd.f32 %v809, 1.0
        %v811 = vmul.f32 %v810, %v805
        %v812 = vand.u32 2147483647, %v805
        %vm813 = vcmp.lt.f32.partialorder %v812, 0.0004427343
        %v814 = vsel %vm813, %v811, %v808
        %v815 = vadd.f32 %v799, %v814
        %v816 = vsel %vm800, %v801, %v815
        %v817 = vpack.c.bf16 %v816, %v816
        %v818 = vld [vmem:[#allocation15] sm:$0xf]
        %v819 = vld [vmem:[#allocation15 + $0x4] sm:$0xf]
        %v820 = vld [vmem:[#allocation15 + $0x8] sm:$0xf]
        %v821 = vld [vmem:[#allocation15 + $0xc] sm:$0xf]
        %v826 = vunpack.c.l.b16 %v818
        %v827 = vunpack.c.l.b16 %v819
        %v828 = vunpack.c.l.b16 %v820
        %v829 = vunpack.c.l.b16 %v821
        %v830 = vpack.c.b16 %v827, %v826
        %v831 = vpack.c.b16 %v829, %v828
        %v835 = vsel %vm631, %v817, 0
        %837 = vmatprep.subr.bf16.mxu0 0
        %838 = vmatpush1.bf16.msra.mxu0 %v830
        %839 = vmatprep.subr.bf16.mxu0 0
        %840 = vmatpush1.bf16.msra.mxu0 %v831
        %841 = vmatprep.subr.bf16.mxu0 0
        %842 = vmatpush1.bf16.msra.mxu0 0
        %843 = vmatprep.subr.bf16.mxu0 0
        %844 = vmatpush1.bf16.msra.mxu0 0
        %845 = vmatprep.subr.bf16.mxu0 0
        %846 = vmatpush1.bf16.msra.mxu0 0
        %847 = vmatprep.subr.bf16.mxu0 0
        %848 = vmatpush1.bf16.msra.mxu0 0
        %849 = vmatprep.subr.bf16.mxu0 0
        %850 = vmatpush1.bf16.msra.mxu0 0
        %851 = vmatprep.subr.bf16.mxu0 0
        %852 = vmatpush1.bf16.msra.mxu0 0
        %853 = vmatprep.subr.bf16.mxu0 0
        %854 = vmatpush1.bf16.msra.mxu0 0
        %855 = vmatprep.subr.bf16.mxu0 0
        %856 = vmatpush1.bf16.msra.mxu0 0
        %857 = vmatprep.subr.bf16.mxu0 0
        %858 = vmatpush1.bf16.msra.mxu0 0
        %859 = vmatprep.subr.bf16.mxu0 0
        %860 = vmatpush1.bf16.msra.mxu0 0
        %861 = vmatprep.subr.bf16.mxu0 0
        %862 = vmatpush1.bf16.msra.mxu0 0
        %863 = vmatprep.subr.bf16.mxu0 0
        %864 = vmatpush1.bf16.msra.mxu0 0
        %865 = vmatprep.subr.bf16.mxu0 0
        %866 = vmatpush1.bf16.msra.mxu0 0
        %867 = vmatprep.subr.bf16.mxu0 0
        %868 = vmatpush1.bf16.msra.mxu0 0
        %869 = vmatprep.mubr.bf16.mxu0 0
        %870 = vmatmul.mubr.bf16.gmra.mrb[0].mxu0 %v835
        %v871 = vpop.f32.mrb[0].mxu0
        %v872 = vadd.f32 0.0, %v871
        %v873 = vpop.f32.mrb[0].mxu0
        %v874 = vpop.f32.mrb[0].mxu0
        %v875 = vpop.f32.mrb[0].mxu0
        %876 = vdwg.mxu0
        %v877 = vld [vmem:[#allocation17] sm:$0x1]
        %v879 = vlaneseq
        %v880 = vshrl.u32 %v879, 7
        %v881 = vsub.s32 0, %v880
        %v882 = vrot.slane %v877, %v881
        %v884 = vadd.f32 %v872, %v882
        %v885 = vmax.f32 %v884, 0.0
        %vm886 = vcmp.ne.f32.partialorder %v884, %v884
        %v887 = vadd.f32 %v884, 0.0
        %v888 = vand.u32 2147483647, %v884
        %v889 = vsub.f32 0.0, %v888
        %v890 = vmul.f32 %v889, 1.442695
        %v891 = vpow.pop %v890
        %v892 = vadd.f32 %v891, 1.0
        %v893 = vlog2.pop %v892
        %v894 = vmul.f32 %v893, 0.6931472
        %v895 = vmul.f32 -0.5, %v891
        %v896 = vadd.f32 %v895, 1.0
        %v897 = vmul.f32 %v896, %v891
        %v898 = vand.u32 2147483647, %v891
        %vm899 = vcmp.lt.f32.partialorder %v898, 0.0004427343
        %v900 = vsel %vm899, %v897, %v894
        %v901 = vadd.f32 %v885, %v900
        %v902 = vsel %vm886, %v887, %v901
        %v904 = vcombine.high %v902, %v902
        %v906 = vunpack.c.l.s4 1966171168
        %v907 = vunpack.c.0.s8 %v906
        %v908 = vlaneseq
        %v909 = vshrl.u32 %v908, 7
        %v910 = vsub.s32 %v907, %v909
        %v911 = vrot.slane %v902, %v910
        %v913 = vunpack.c.l.s4 1966171168
        %v914 = vunpack.c.0.s8 %v913
        %v915 = vlaneseq
        %v916 = vshrl.u32 %v915, 7
        %v917 = vsub.s32 %v914, %v916
        %v918 = vrot.slane %v904, %v917
        %v919 = vcombine.high %v911, %v911
        %v920 = vcombine.high %v918, %v918
        %v922 = vunpack.c.l.s4 1966171168
        %v923 = vunpack.c.0.s8 %v922
        %v924 = vlaneseq
        %v925 = vshrl.u32 %v924, 7
        %v926 = vsub.s32 %v923, %v925
        %v927 = vrot.slane %v911, %v926
        %v929 = vunpack.c.l.s4 1966171168
        %v930 = vunpack.c.0.s8 %v929
        %v931 = vlaneseq
        %v932 = vshrl.u32 %v931, 7
        %v933 = vsub.s32 %v930, %v932
        %v934 = vrot.slane %v918, %v933
        %v936 = vunpack.c.l.s4 1966171168
        %v937 = vunpack.c.0.s8 %v936
        %v938 = vlaneseq
        %v939 = vshrl.u32 %v938, 7
        %v940 = vsub.s32 %v937, %v939
        %v941 = vrot.slane %v919, %v940
        %v943 = vunpack.c.l.s4 1966171168
        %v944 = vunpack.c.0.s8 %v943
        %v945 = vlaneseq
        %v946 = vshrl.u32 %v945, 7
        %v947 = vsub.s32 %v944, %v946
        %v948 = vrot.slane %v920, %v947
        %v949 = vcombine.high %v927, %v927
        %v950 = vcombine.high %v934, %v934
        %v951 = vcombine.high %v941, %v941
        %v952 = vcombine.high %v948, %v948
        %v953 = vld [vmem:[%s9] sm:$0xff]
        %v954 = vld [vmem:[%s9 + $0x8] sm:$0xff]
        %v955 = vlaneseq
        %v956 = vshrl.u32 %v955, 7
        %v957 = vsub.s32 0, %v956
        %v958 = vrot.slane %v927, %v957
        %v959 = vlaneseq
        %v960 = vshrl.u32 %v959, 7
        %v961 = vsub.s32 0, %v960
        %v962 = vrot.slane %v941, %v961
        %v963 = vlaneseq
        %v964 = vshrl.u32 %v963, 7
        %v965 = vsub.s32 0, %v964
        %v966 = vrot.slane %v949, %v965
        %v967 = vlaneseq
        %v968 = vshrl.u32 %v967, 7
        %v969 = vsub.s32 0, %v968
        %v970 = vrot.slane %v951, %v969
        %v971 = vlaneseq
        %v972 = vshrl.u32 %v971, 7
        %v973 = vsub.s32 0, %v972
        %v974 = vrot.slane %v934, %v973
        %v975 = vlaneseq
        %v976 = vshrl.u32 %v975, 7
        %v977 = vsub.s32 0, %v976
        %v978 = vrot.slane %v948, %v977
        %v979 = vlaneseq
        %v980 = vshrl.u32 %v979, 7
        %v981 = vsub.s32 0, %v980
        %v982 = vrot.slane %v950, %v981
        %v983 = vlaneseq
        %v984 = vshrl.u32 %v983, 7
        %v985 = vsub.s32 0, %v984
        %v986 = vrot.slane %v952, %v985
        %v995 = vmul.f32 %v958, %v953
        %v996 = vmul.f32 %v958, %v954
        %v997 = vmul.f32 %v962, %v953
        %v998 = vmul.f32 %v962, %v954
        %v999 = vmul.f32 %v966, %v953
        %v1000 = vmul.f32 %v966, %v954
        %v1001 = vmul.f32 %v970, %v953
        %v1002 = vmul.f32 %v970, %v954
        %v1003 = vmul.f32 %v974, %v953
        %v1004 = vmul.f32 %v974, %v954
        %v1005 = vmul.f32 %v978, %v953
        %v1006 = vmul.f32 %v978, %v954
        %v1007 = vmul.f32 %v982, %v953
        %v1008 = vmul.f32 %v982, %v954
        %v1009 = vmul.f32 %v986, %v953
        %v1010 = vmul.f32 %v986, %v954
        %v1011 = vmul.f32 %v995, 1.442695
        %v1012 = vpow.pop %v1011
        %v1013 = vmul.f32 %v996, 1.442695
        %v1014 = vpow.pop %v1013
        %v1015 = vmul.f32 %v997, 1.442695
        %v1016 = vpow.pop %v1015
        %v1017 = vmul.f32 %v998, 1.442695
        %v1018 = vpow.pop %v1017
        %v1019 = vmul.f32 %v999, 1.442695
        %v1020 = vpow.pop %v1019
        %v1021 = vmul.f32 %v1000, 1.442695
        %v1022 = vpow.pop %v1021
        %v1023 = vmul.f32 %v1001, 1.442695
        %v1024 = vpow.pop %v1023
        %v1025 = vmul.f32 %v1002, 1.442695
        %v1026 = vpow.pop %v1025
        %v1027 = vmul.f32 %v1003, 1.442695
        %v1028 = vpow.pop %v1027
        %v1029 = vmul.f32 %v1004, 1.442695
        %v1030 = vpow.pop %v1029
        %v1031 = vmul.f32 %v1005, 1.442695
        %v1032 = vpow.pop %v1031
        %v1033 = vmul.f32 %v1006, 1.442695
        %v1034 = vpow.pop %v1033
        %v1035 = vmul.f32 %v1007, 1.442695
        %v1036 = vpow.pop %v1035
        %v1037 = vmul.f32 %v1008, 1.442695
        %v1038 = vpow.pop %v1037
        %v1039 = vmul.f32 %v1009, 1.442695
        %v1040 = vpow.pop %v1039
        %v1041 = vmul.f32 %v1010, 1.442695
        %v1042 = vpow.pop %v1041
        %1043 = vst.msk [vmem:[#allocation2] sm:$0xff] %vm631, %v1012
        %1044 = vst.msk [vmem:[#allocation2 + $0x8] sm:$0xff] %vm631, %v1014
        %1045 = vst.msk [vmem:[#allocation2 + $0x10] sm:$0xff] %vm631, %v1016
        %1046 = vst.msk [vmem:[#allocation2 + $0x18] sm:$0xff] %vm631, %v1018
        %1047 = vst.msk [vmem:[#allocation2 + $0x20] sm:$0xff] %vm631, %v1020
        %1048 = vst.msk [vmem:[#allocation2 + $0x28] sm:$0xff] %vm631, %v1022
        %1049 = vst.msk [vmem:[#allocation2 + $0x30] sm:$0xff] %vm631, %v1024
        %1050 = vst.msk [vmem:[#allocation2 + $0x38] sm:$0xff] %vm631, %v1026
        %1051 = vst.msk [vmem:[#allocation2 + $0x40] sm:$0xff] %vm631, %v1028
        %1052 = vst.msk [vmem:[#allocation2 + $0x48] sm:$0xff] %vm631, %v1030
        %1053 = vst.msk [vmem:[#allocation2 + $0x50] sm:$0xff] %vm631, %v1032
        %1054 = vst.msk [vmem:[#allocation2 + $0x58] sm:$0xff] %vm631, %v1034
        %1055 = vst.msk [vmem:[#allocation2 + $0x60] sm:$0xff] %vm631, %v1036
        %1056 = vst.msk [vmem:[#allocation2 + $0x68] sm:$0xff] %vm631, %v1038
        %1057 = vst.msk [vmem:[#allocation2 + $0x70] sm:$0xff] %vm631, %v1040
        %1058 = vst.msk [vmem:[#allocation2 + $0x78] sm:$0xff] %vm631, %v1042
        %v1059 = vmul.f32 %v902, %v816
        %v1061 = vcombine.high %v1059, %v1059
        %v1063 = vunpack.c.l.s4 1966171168
        %v1064 = vunpack.c.0.s8 %v1063
        %v1065 = vlaneseq
        %v1066 = vshrl.u32 %v1065, 7
        %v1067 = vsub.s32 %v1064, %v1066
        %v1068 = vrot.slane %v1059, %v1067
        %v1070 = vunpack.c.l.s4 1966171168
        %v1071 = vunpack.c.0.s8 %v1070
        %v1072 = vlaneseq
        %v1073 = vshrl.u32 %v1072, 7
        %v1074 = vsub.s32 %v1071, %v1073
        %v1075 = vrot.slane %v1061, %v1074
        %v1076 = vcombine.high %v1068, %v1068
        %v1077 = vcombine.high %v1075, %v1075
        %v1079 = vunpack.c.l.s4 1966171168
        %v1080 = vunpack.c.0.s8 %v1079
        %v1081 = vlaneseq
        %v1082 = vshrl.u32 %v1081, 7
        %v1083 = vsub.s32 %v1080, %v1082
        %v1084 = vrot.slane %v1068, %v1083
        %v1086 = vunpack.c.l.s4 1966171168
        %v1087 = vunpack.c.0.s8 %v1086
        %v1088 = vlaneseq
        %v1089 = vshrl.u32 %v1088, 7
        %v1090 = vsub.s32 %v1087, %v1089
        %v1091 = vrot.slane %v1075, %v1090
        %v1093 = vunpack.c.l.s4 1966171168
        %v1094 = vunpack.c.0.s8 %v1093
        %v1095 = vlaneseq
        %v1096 = vshrl.u32 %v1095, 7
        %v1097 = vsub.s32 %v1094, %v1096
        %v1098 = vrot.slane %v1076, %v1097
        %v1100 = vunpack.c.l.s4 1966171168
        %v1101 = vunpack.c.0.s8 %v1100
        %v1102 = vlaneseq
        %v1103 = vshrl.u32 %v1102, 7
        %v1104 = vsub.s32 %v1101, %v1103
        %v1105 = vrot.slane %v1077, %v1104
        %v1106 = vcombine.high %v1084, %v1084
        %v1107 = vcombine.high %v1091, %v1091
        %v1108 = vcombine.high %v1098, %v1098
        %v1109 = vcombine.high %v1105, %v1105
        %v1110 = vlaneseq
        %v1111 = vshrl.u32 %v1110, 7
        %v1112 = vsub.s32 0, %v1111
        %v1113 = vrot.slane %v872, %v1112
        %s1115 = sor.u32 256, 32
        %1116 = vbcast.lane.b32.xlu0 %v1113, %s1115
        %v1117 = vpop.permute.xlu0 %1116
        %s1119 = sor.u32 256, 40
        %1120 = vbcast.lane.b32.xlu0 %v1113, %s1119
        %v1121 = vpop.permute.xlu0 %1120
        %v1122 = vlaneseq
        %v1123 = vshrl.u32 %v1122, 7
        %v1124 = vsub.s32 1, %v1123
        %v1125 = vrot.slane %v872, %v1124
        %s1127 = sor.u32 256, 32
        %1128 = vbcast.lane.b32.xlu0 %v1125, %s1127
        %v1129 = vpop.permute.xlu0 %1128
        %s1131 = sor.u32 256, 40
        %1132 = vbcast.lane.b32.xlu0 %v1125, %s1131
        %v1133 = vpop.permute.xlu0 %1132
        %v1134 = vlaneseq
        %v1135 = vshrl.u32 %v1134, 7
        %v1136 = vsub.s32 2, %v1135
        %v1137 = vrot.slane %v872, %v1136
        %s1139 = sor.u32 256, 32
        %1140 = vbcast.lane.b32.xlu0 %v1137, %s1139
        %v1141 = vpop.permute.xlu0 %1140
        %s1143 = sor.u32 256, 40
        %1144 = vbcast.lane.b32.xlu0 %v1137, %s1143
        %v1145 = vpop.permute.xlu0 %1144
        %v1146 = vlaneseq
        %v1147 = vshrl.u32 %v1146, 7
        %v1148 = vsub.s32 3, %v1147
        %v1149 = vrot.slane %v872, %v1148
        %s1151 = sor.u32 256, 32
        %1152 = vbcast.lane.b32.xlu0 %v1149, %s1151
        %v1153 = vpop.permute.xlu0 %1152
        %s1155 = sor.u32 256, 40
        %1156 = vbcast.lane.b32.xlu0 %v1149, %s1155
        %v1157 = vpop.permute.xlu0 %1156
        %v1158 = vlaneseq
        %v1159 = vshrl.u32 %v1158, 7
        %v1160 = vsub.s32 4, %v1159
        %v1161 = vrot.slane %v872, %v1160
        %s1163 = sor.u32 256, 32
        %1164 = vbcast.lane.b32.xlu0 %v1161, %s1163
        %v1165 = vpop.permute.xlu0 %1164
        %s1167 = sor.u32 256, 40
        %1168 = vbcast.lane.b32.xlu0 %v1161, %s1167
        %v1169 = vpop.permute.xlu0 %1168
        %v1170 = vlaneseq
        %v1171 = vshrl.u32 %v1170, 7
        %v1172 = vsub.s32 5, %v1171
        %v1173 = vrot.slane %v872, %v1172
        %s1175 = sor.u32 256, 32
        %1176 = vbcast.lane.b32.xlu0 %v1173, %s1175
        %v1177 = vpop.permute.xlu0 %1176
        %s1179 = sor.u32 256, 40
        %1180 = vbcast.lane.b32.xlu0 %v1173, %s1179
        %v1181 = vpop.permute.xlu0 %1180
        %v1182 = vlaneseq
        %v1183 = vshrl.u32 %v1182, 7
        %v1184 = vsub.s32 6, %v1183
        %v1185 = vrot.slane %v872, %v1184
        %s1187 = sor.u32 256, 32
        %1188 = vbcast.lane.b32.xlu0 %v1185, %s1187
        %v1189 = vpop.permute.xlu0 %1188
        %s1191 = sor.u32 256, 40
        %1192 = vbcast.lane.b32.xlu0 %v1185, %s1191
        %v1193 = vpop.permute.xlu0 %1192
        %v1194 = vlaneseq
        %v1195 = vshrl.u32 %v1194, 7
        %v1196 = vsub.s32 7, %v1195
        %v1197 = vrot.slane %v872, %v1196
        %s1199 = sor.u32 256, 32
        %1200 = vbcast.lane.b32.xlu0 %v1197, %s1199
        %v1201 = vpop.permute.xlu0 %1200
        %s1203 = sor.u32 256, 40
        %1204 = vbcast.lane.b32.xlu0 %v1197, %s1203
        %v1205 = vpop.permute.xlu0 %1204
        %v1206 = vlaneseq
        %v1207 = vshrl.u32 %v1206, 7
        %v1208 = vsub.s32 0, %v1207
        %v1209 = vrot.slane %v1084, %v1208
        %v1210 = vlaneseq
        %v1211 = vshrl.u32 %v1210, 7
        %v1212 = vsub.s32 0, %v1211
        %v1213 = vrot.slane %v1098, %v1212
        %v1214 = vlaneseq
        %v1215 = vshrl.u32 %v1214, 7
        %v1216 = vsub.s32 0, %v1215
        %v1217 = vrot.slane %v1106, %v1216
        %v1218 = vlaneseq
        %v1219 = vshrl.u32 %v1218, 7
        %v1220 = vsub.s32 0, %v1219
        %v1221 = vrot.slane %v1108, %v1220
        %v1222 = vlaneseq
        %v1223 = vshrl.u32 %v1222, 7
        %v1224 = vsub.s32 0, %v1223
        %v1225 = vrot.slane %v1091, %v1224
        %v1226 = vlaneseq
        %v1227 = vshrl.u32 %v1226, 7
        %v1228 = vsub.s32 0, %v1227
        %v1229 = vrot.slane %v1105, %v1228
        %v1230 = vlaneseq
        %v1231 = vshrl.u32 %v1230, 7
        %v1232 = vsub.s32 0, %v1231
        %v1233 = vrot.slane %v1107, %v1232
        %v1234 = vlaneseq
        %v1235 = vshrl.u32 %v1234, 7
        %v1236 = vsub.s32 0, %v1235
        %v1237 = vrot.slane %v1109, %v1236
        %v1246 = vmul.f32 %v1209, %v1117
        %v1247 = vmul.f32 %v1209, %v1121
        %v1248 = vmul.f32 %v1213, %v1129
        %v1249 = vmul.f32 %v1213, %v1133
        %v1250 = vmul.f32 %v1217, %v1141
        %v1251 = vmul.f32 %v1217, %v1145
        %v1252 = vmul.f32 %v1221, %v1153
        %v1253 = vmul.f32 %v1221, %v1157
        %v1254 = vmul.f32 %v1225, %v1165
        %v1255 = vmul.f32 %v1225, %v1169
        %v1256 = vmul.f32 %v1229, %v1177
        %v1257 = vmul.f32 %v1229, %v1181
        %v1258 = vmul.f32 %v1233, %v1189
        %v1259 = vmul.f32 %v1233, %v1193
        %v1260 = vmul.f32 %v1237, %v1201
        %v1261 = vmul.f32 %v1237, %v1205
        %1262 = vst.msk [vmem:[#allocation3] sm:$0xff] %vm631, %v1246
        %1263 = vst.msk [vmem:[#allocation3 + $0x8] sm:$0xff] %vm631, %v1247
        %1264 = vst.msk [vmem:[#allocation3 + $0x10] sm:$0xff] %vm631, %v1248
        %1265 = vst.msk [vmem:[#allocation3 + $0x18] sm:$0xff] %vm631, %v1249
        %1266 = vst.msk [vmem:[#allocation3 + $0x20] sm:$0xff] %vm631, %v1250
        %1267 = vst.msk [vmem:[#allocation3 + $0x28] sm:$0xff] %vm631, %v1251
        %1268 = vst.msk [vmem:[#allocation3 + $0x30] sm:$0xff] %vm631, %v1252
        %1269 = vst.msk [vmem:[#allocation3 + $0x38] sm:$0xff] %vm631, %v1253
        %1270 = vst.msk [vmem:[#allocation3 + $0x40] sm:$0xff] %vm631, %v1254
        %1271 = vst.msk [vmem:[#allocation3 + $0x48] sm:$0xff] %vm631, %v1255
        %1272 = vst.msk [vmem:[#allocation3 + $0x50] sm:$0xff] %vm631, %v1256
        %1273 = vst.msk [vmem:[#allocation3 + $0x58] sm:$0xff] %vm631, %v1257
        %1274 = vst.msk [vmem:[#allocation3 + $0x60] sm:$0xff] %vm631, %v1258
        %1275 = vst.msk [vmem:[#allocation3 + $0x68] sm:$0xff] %vm631, %v1259
        %1276 = vst.msk [vmem:[#allocation3 + $0x70] sm:$0xff] %vm631, %v1260
        %1277 = vst.msk [vmem:[#allocation3 + $0x78] sm:$0xff] %vm631, %v1261
        %v1278 = vld [vmem:[#allocation20] sm:$0xf]
        %v1279 = vld [vmem:[#allocation20 + $0x4] sm:$0xf]
        %v1280 = vld [vmem:[#allocation20 + $0x8] sm:$0xf]
        %v1281 = vld [vmem:[#allocation20 + $0xc] sm:$0xf]
        %1283 = vrot.lane.b32.xlu0 %v817, 96
        %v1284 = vpop.permute.xlu0 %1283
        %v1289 = vunpack.c.l.b16 %v1278
        %v1290 = vunpack.c.l.b16 %v1279
        %v1291 = vunpack.c.l.b16 %v1280
        %v1292 = vunpack.c.l.b16 %v1281
        %v1293 = vpack.c.b16 %v1290, %v1289
        %v1294 = vpack.c.b16 %v1292, %v1291
        %v1298 = vsel %vm631, %v1284, 0
        %1300 = vmatprep.subr.bf16.mxu0 0
        %1301 = vmatpush1.bf16.msra.mxu0 %v1293
        %1302 = vmatprep.subr.bf16.mxu0 0
        %1303 = vmatpush1.bf16.msra.mxu0 %v1294
        %1304 = vmatprep.subr.bf16.mxu0 0
        %1305 = vmatpush1.bf16.msra.mxu0 0
        %1306 = vmatprep.subr.bf16.mxu0 0
        %1307 = vmatpush1.bf16.msra.mxu0 0
        %1308 = vmatprep.subr.bf16.mxu0 0
        %1309 = vmatpush1.bf16.msra.mxu0 0
        %1310 = vmatprep.subr.bf16.mxu0 0
        %1311 = vmatpush1.bf16.msra.mxu0 0
        %1312 = vmatprep.subr.bf16.mxu0 0
        %1313 = vmatpush1.bf16.msra.mxu0 0
        %1314 = vmatprep.subr.bf16.mxu0 0
        %1315 = vmatpush1.bf16.msra.mxu0 0
        %1316 = vmatprep.subr.bf16.mxu0 0
        %1317 = vmatpush1.bf16.msra.mxu0 0
        %1318 = vmatprep.subr.bf16.mxu0 0
        %1319 = vmatpush1.bf16.msra.mxu0 0
        %1320 = vmatprep.subr.bf16.mxu0 0
        %1321 = vmatpush1.bf16.msra.mxu0 0
        %1322 = vmatprep.subr.bf16.mxu0 0
        %1323 = vmatpush1.bf16.msra.mxu0 0
        %1324 = vmatprep.subr.bf16.mxu0 0
        %1325 = vmatpush1.bf16.msra.mxu0 0
        %1326 = vmatprep.subr.bf16.mxu0 0
        %1327 = vmatpush1.bf16.msra.mxu0 0
        %1328 = vmatprep.subr.bf16.mxu0 0
        %1329 = vmatpush1.bf16.msra.mxu0 0
        %1330 = vmatprep.subr.bf16.mxu0 0
        %1331 = vmatpush1.bf16.msra.mxu0 0
        %1332 = vmatprep.mubr.bf16.mxu0 0
        %1333 = vmatmul.mubr.bf16.gmra.mrb[0].mxu0 %v1298
        %v1334 = vpop.f32.mrb[0].mxu0
        %v1335 = vadd.f32 0.0, %v1334
        %v1336 = vpop.f32.mrb[0].mxu0
        %v1337 = vpop.f32.mrb[0].mxu0
        %v1338 = vpop.f32.mrb[0].mxu0
        %1339 = vdwg.mxu0
        %v1340 = vld [vmem:[#allocation21] sm:$0x1]
        %v1342 = vlaneseq
        %v1343 = vshrl.u32 %v1342, 7
        %v1344 = vsub.s32 0, %v1343
        %v1345 = vrot.slane %v1340, %v1344
        %v1347 = vadd.f32 %v1335, %v1345
        %v1348 = vmax.f32 %v1347, 0.0
        %vm1349 = vcmp.ne.f32.partialorder %v1347, %v1347
        %v1350 = vadd.f32 %v1347, 0.0
        %v1351 = vand.u32 2147483647, %v1347
        %v1352 = vsub.f32 0.0, %v1351
        %v1353 = vmul.f32 %v1352, 1.442695
        %v1354 = vpow.pop %v1353
        %v1355 = vadd.f32 %v1354, 1.0
        %v1356 = vlog2.pop %v1355
        %v1357 = vmul.f32 %v1356, 0.6931472
        %v1358 = vmul.f32 -0.5, %v1354
        %v1359 = vadd.f32 %v1358, 1.0
        %v1360 = vmul.f32 %v1359, %v1354
        %v1361 = vand.u32 2147483647, %v1354
        %vm1362 = vcmp.lt.f32.partialorder %v1361, 0.0004427343
        %v1363 = vsel %vm1362, %v1360, %v1357
        %v1364 = vadd.f32 %v1348, %v1363
        %v1365 = vsel %vm1349, %v1350, %v1364
        %v1367 = vcombine.high %v1365, %v1365
        %v1369 = vunpack.c.l.s4 1966171168
        %v1370 = vunpack.c.0.s8 %v1369
        %v1371 = vlaneseq
        %v1372 = vshrl.u32 %v1371, 7
        %v1373 = vsub.s32 %v1370, %v1372
        %v1374 = vrot.slane %v1365, %v1373
        %v1376 = vunpack.c.l.s4 1966171168
        %v1377 = vunpack.c.0.s8 %v1376
        %v1378 = vlaneseq
        %v1379 = vshrl.u32 %v1378, 7
        %v1380 = vsub.s32 %v1377, %v1379
        %v1381 = vrot.slane %v1367, %v1380
        %v1382 = vcombine.high %v1374, %v1374
        %v1383 = vcombine.high %v1381, %v1381
        %v1385 = vunpack.c.l.s4 1966171168
        %v1386 = vunpack.c.0.s8 %v1385
        %v1387 = vlaneseq
        %v1388 = vshrl.u32 %v1387, 7
        %v1389 = vsub.s32 %v1386, %v1388
        %v1390 = vrot.slane %v1374, %v1389
        %v1392 = vunpack.c.l.s4 1966171168
        %v1393 = vunpack.c.0.s8 %v1392
        %v1394 = vlaneseq
        %v1395 = vshrl.u32 %v1394, 7
        %v1396 = vsub.s32 %v1393, %v1395
        %v1397 = vrot.slane %v1381, %v1396
        %v1399 = vunpack.c.l.s4 1966171168
        %v1400 = vunpack.c.0.s8 %v1399
        %v1401 = vlaneseq
        %v1402 = vshrl.u32 %v1401, 7
        %v1403 = vsub.s32 %v1400, %v1402
        %v1404 = vrot.slane %v1382, %v1403
        %v1406 = vunpack.c.l.s4 1966171168
        %v1407 = vunpack.c.0.s8 %v1406
        %v1408 = vlaneseq
        %v1409 = vshrl.u32 %v1408, 7
        %v1410 = vsub.s32 %v1407, %v1409
        %v1411 = vrot.slane %v1383, %v1410
        %v1412 = vcombine.high %v1390, %v1390
        %v1413 = vcombine.high %v1397, %v1397
        %v1414 = vcombine.high %v1404, %v1404
        %v1415 = vcombine.high %v1411, %v1411
        %v1416 = vld [vmem:[%s13] sm:$0xff]
        %v1417 = vld [vmem:[%s13 + $0x8] sm:$0xff]
        %v1418 = vlaneseq
        %v1419 = vshrl.u32 %v1418, 7
        %v1420 = vsub.s32 0, %v1419
        %v1421 = vrot.slane %v1390, %v1420
        %v1422 = vlaneseq
        %v1423 = vshrl.u32 %v1422, 7
        %v1424 = vsub.s32 0, %v1423
        %v1425 = vrot.slane %v1404, %v1424
        %v1426 = vlaneseq
        %v1427 = vshrl.u32 %v1426, 7
        %v1428 = vsub.s32 0, %v1427
        %v1429 = vrot.slane %v1412, %v1428
        %v1430 = vlaneseq
        %v1431 = vshrl.u32 %v1430, 7
        %v1432 = vsub.s32 0, %v1431
        %v1433 = vrot.slane %v1414, %v1432
        %v1434 = vlaneseq
        %v1435 = vshrl.u32 %v1434, 7
        %v1436 = vsub.s32 0, %v1435
        %v1437 = vrot.slane %v1397, %v1436
        %v1438 = vlaneseq
        %v1439 = vshrl.u32 %v1438, 7
        %v1440 = vsub.s32 0, %v1439
        %v1441 = vrot.slane %v1411, %v1440
        %v1442 = vlaneseq
        %v1443 = vshrl.u32 %v1442, 7
        %v1444 = vsub.s32 0, %v1443
        %v1445 = vrot.slane %v1413, %v1444
        %v1446 = vlaneseq
        %v1447 = vshrl.u32 %v1446, 7
        %v1448 = vsub.s32 0, %v1447
        %v1449 = vrot.slane %v1415, %v1448
        %v1458 = vmul.f32 %v1421, %v1416
        %v1459 = vmul.f32 %v1421, %v1417
        %v1460 = vmul.f32 %v1425, %v1416
        %v1461 = vmul.f32 %v1425, %v1417
        %v1462 = vmul.f32 %v1429, %v1416
        %v1463 = vmul.f32 %v1429, %v1417
        %v1464 = vmul.f32 %v1433, %v1416
        %v1465 = vmul.f32 %v1433, %v1417
        %v1466 = vmul.f32 %v1437, %v1416
        %v1467 = vmul.f32 %v1437, %v1417
        %v1468 = vmul.f32 %v1441, %v1416
        %v1469 = vmul.f32 %v1441, %v1417
        %v1470 = vmul.f32 %v1445, %v1416
        %v1471 = vmul.f32 %v1445, %v1417
        %v1472 = vmul.f32 %v1449, %v1416
        %v1473 = vmul.f32 %v1449, %v1417
        %v1474 = vmul.f32 %v1458, 1.442695
        %v1475 = vpow.pop %v1474
        %v1476 = vmul.f32 %v1459, 1.442695
        %v1477 = vpow.pop %v1476
        %v1478 = vmul.f32 %v1460, 1.442695
        %v1479 = vpow.pop %v1478
        %v1480 = vmul.f32 %v1461, 1.442695
        %v1481 = vpow.pop %v1480
        %v1482 = vmul.f32 %v1462, 1.442695
        %v1483 = vpow.pop %v1482
        %v1484 = vmul.f32 %v1463, 1.442695
        %v1485 = vpow.pop %v1484
        %v1486 = vmul.f32 %v1464, 1.442695
        %v1487 = vpow.pop %v1486
        %v1488 = vmul.f32 %v1465, 1.442695
        %v1489 = vpow.pop %v1488
        %v1490 = vmul.f32 %v1466, 1.442695
        %v1491 = vpow.pop %v1490
        %v1492 = vmul.f32 %v1467, 1.442695
        %v1493 = vpow.pop %v1492
        %v1494 = vmul.f32 %v1468, 1.442695
        %v1495 = vpow.pop %v1494
        %v1496 = vmul.f32 %v1469, 1.442695
        %v1497 = vpow.pop %v1496
        %v1498 = vmul.f32 %v1470, 1.442695
        %v1499 = vpow.pop %v1498
        %v1500 = vmul.f32 %v1471, 1.442695
        %v1501 = vpow.pop %v1500
        %v1502 = vmul.f32 %v1472, 1.442695
        %v1503 = vpow.pop %v1502
        %v1504 = vmul.f32 %v1473, 1.442695
        %v1505 = vpow.pop %v1504
        %1506 = vst.msk [vmem:[#allocation4] sm:$0xff] %vm631, %v1475
        %1507 = vst.msk [vmem:[#allocation4 + $0x8] sm:$0xff] %vm631, %v1477
        %1508 = vst.msk [vmem:[#allocation4 + $0x10] sm:$0xff] %vm631, %v1479
        %1509 = vst.msk [vmem:[#allocation4 + $0x18] sm:$0xff] %vm631, %v1481
        %1510 = vst.msk [vmem:[#allocation4 + $0x20] sm:$0xff] %vm631, %v1483
        %1511 = vst.msk [vmem:[#allocation4 + $0x28] sm:$0xff] %vm631, %v1485
        %1512 = vst.msk [vmem:[#allocation4 + $0x30] sm:$0xff] %vm631, %v1487
        %1513 = vst.msk [vmem:[#allocation4 + $0x38] sm:$0xff] %vm631, %v1489
        %1514 = vst.msk [vmem:[#allocation4 + $0x40] sm:$0xff] %vm631, %v1491
        %1515 = vst.msk [vmem:[#allocation4 + $0x48] sm:$0xff] %vm631, %v1493
        %1516 = vst.msk [vmem:[#allocation4 + $0x50] sm:$0xff] %vm631, %v1495
        %1517 = vst.msk [vmem:[#allocation4 + $0x58] sm:$0xff] %vm631, %v1497
        %1518 = vst.msk [vmem:[#allocation4 + $0x60] sm:$0xff] %vm631, %v1499
        %1519 = vst.msk [vmem:[#allocation4 + $0x68] sm:$0xff] %vm631, %v1501
        %1520 = vst.msk [vmem:[#allocation4 + $0x70] sm:$0xff] %vm631, %v1503
        %1521 = vst.msk [vmem:[#allocation4 + $0x78] sm:$0xff] %vm631, %v1505
        %1523 = vrot.lane.b32.xlu0 %v816, 96
        %v1524 = vpop.permute.xlu0 %1523
        %v1526 = vmul.f32 %v1365, %v1524
        %v1528 = vcombine.high %v1526, %v1526
        %v1530 = vunpack.c.l.s4 1966171168
        %v1531 = vunpack.c.0.s8 %v1530
        %v1532 = vlaneseq
        %v1533 = vshrl.u32 %v1532, 7
        %v1534 = vsub.s32 %v1531, %v1533
        %v1535 = vrot.slane %v1526, %v1534
        %v1537 = vunpack.c.l.s4 1966171168
        %v1538 = vunpack.c.0.s8 %v1537
        %v1539 = vlaneseq
        %v1540 = vshrl.u32 %v1539, 7
        %v1541 = vsub.s32 %v1538, %v1540
        %v1542 = vrot.slane %v1528, %v1541
        %v1543 = vcombine.high %v1535, %v1535
        %v1544 = vcombine.high %v1542, %v1542
        %v1546 = vunpack.c.l.s4 1966171168
        %v1547 = vunpack.c.0.s8 %v1546
        %v1548 = vlaneseq
        %v1549 = vshrl.u32 %v1548, 7
        %v1550 = vsub.s32 %v1547, %v1549
        %v1551 = vrot.slane %v1535, %v1550
        %v1553 = vunpack.c.l.s4 1966171168
        %v1554 = vunpack.c.0.s8 %v1553
        %v1555 = vlaneseq
        %v1556 = vshrl.u32 %v1555, 7
        %v1557 = vsub.s32 %v1554, %v1556
        %v1558 = vrot.slane %v1542, %v1557
        %v1560 = vunpack.c.l.s4 1966171168
        %v1561 = vunpack.c.0.s8 %v1560
        %v1562 = vlaneseq
        %v1563 = vshrl.u32 %v1562, 7
        %v1564 = vsub.s32 %v1561, %v1563
        %v1565 = vrot.slane %v1543, %v1564
        %v1567 = vunpack.c.l.s4 1966171168
        %v1568 = vunpack.c.0.s8 %v1567
        %v1569 = vlaneseq
        %v1570 = vshrl.u32 %v1569, 7
        %v1571 = vsub.s32 %v1568, %v1570
        %v1572 = vrot.slane %v1544, %v1571
        %v1573 = vcombine.high %v1551, %v1551
        %v1574 = vcombine.high %v1558, %v1558
        %v1575 = vcombine.high %v1565, %v1565
        %v1576 = vcombine.high %v1572, %v1572
        %v1577 = vlaneseq
        %v1578 = vshrl.u32 %v1577, 7
        %v1579 = vsub.s32 0, %v1578
        %v1580 = vrot.slane %v1335, %v1579
        %s1582 = sor.u32 256, 32
        %1583 = vbcast.lane.b32.xlu0 %v1580, %s1582
        %v1584 = vpop.permute.xlu0 %1583
        %s1586 = sor.u32 256, 40
        %1587 = vbcast.lane.b32.xlu0 %v1580, %s1586
        %v1588 = vpop.permute.xlu0 %1587
        %v1589 = vlaneseq
        %v1590 = vshrl.u32 %v1589, 7
        %v1591 = vsub.s32 1, %v1590
        %v1592 = vrot.slane %v1335, %v1591
        %s1594 = sor.u32 256, 32
        %1595 = vbcast.lane.b32.xlu0 %v1592, %s1594
        %v1596 = vpop.permute.xlu0 %1595
        %s1598 = sor.u32 256, 40
        %1599 = vbcast.lane.b32.xlu0 %v1592, %s1598
        %v1600 = vpop.permute.xlu0 %1599
        %v1601 = vlaneseq
        %v1602 = vshrl.u32 %v1601, 7
        %v1603 = vsub.s32 2, %v1602
        %v1604 = vrot.slane %v1335, %v1603
        %s1606 = sor.u32 256, 32
        %1607 = vbcast.lane.b32.xlu0 %v1604, %s1606
        %v1608 = vpop.permute.xlu0 %1607
        %s1610 = sor.u32 256, 40
        %1611 = vbcast.lane.b32.xlu0 %v1604, %s1610
        %v1612 = vpop.permute.xlu0 %1611
        %v1613 = vlaneseq
        %v1614 = vshrl.u32 %v1613, 7
        %v1615 = vsub.s32 3, %v1614
        %v1616 = vrot.slane %v1335, %v1615
        %s1618 = sor.u32 256, 32
        %1619 = vbcast.lane.b32.xlu0 %v1616, %s1618
        %v1620 = vpop.permute.xlu0 %1619
        %s1622 = sor.u32 256, 40
        %1623 = vbcast.lane.b32.xlu0 %v1616, %s1622
        %v1624 = vpop.permute.xlu0 %1623
        %v1625 = vlaneseq
        %v1626 = vshrl.u32 %v1625, 7
        %v1627 = vsub.s32 4, %v1626
        %v1628 = vrot.slane %v1335, %v1627
        %s1630 = sor.u32 256, 32
        %1631 = vbcast.lane.b32.xlu0 %v1628, %s1630
        %v1632 = vpop.permute.xlu0 %1631
        %s1634 = sor.u32 256, 40
        %1635 = vbcast.lane.b32.xlu0 %v1628, %s1634
        %v1636 = vpop.permute.xlu0 %1635
        %v1637 = vlaneseq
        %v1638 = vshrl.u32 %v1637, 7
        %v1639 = vsub.s32 5, %v1638
        %v1640 = vrot.slane %v1335, %v1639
        %s1642 = sor.u32 256, 32
        %1643 = vbcast.lane.b32.xlu0 %v1640, %s1642
        %v1644 = vpop.permute.xlu0 %1643
        %s1646 = sor.u32 256, 40
        %1647 = vbcast.lane.b32.xlu0 %v1640, %s1646
        %v1648 = vpop.permute.xlu0 %1647
        %v1649 = vlaneseq
        %v1650 = vshrl.u32 %v1649, 7
        %v1651 = vsub.s32 6, %v1650
        %v1652 = vrot.slane %v1335, %v1651
        %s1654 = sor.u32 256, 32
        %1655 = vbcast.lane.b32.xlu0 %v1652, %s1654
        %v1656 = vpop.permute.xlu0 %1655
        %s1658 = sor.u32 256, 40
        %1659 = vbcast.lane.b32.xlu0 %v1652, %s1658
        %v1660 = vpop.permute.xlu0 %1659
        %v1661 = vlaneseq
        %v1662 = vshrl.u32 %v1661, 7
        %v1663 = vsub.s32 7, %v1662
        %v1664 = vrot.slane %v1335, %v1663
        %s1666 = sor.u32 256, 32
        %1667 = vbcast.lane.b32.xlu0 %v1664, %s1666
        %v1668 = vpop.permute.xlu0 %1667
        %s1670 = sor.u32 256, 40
        %1671 = vbcast.lane.b32.xlu0 %v1664, %s1670
        %v1672 = vpop.permute.xlu0 %1671
        %v1673 = vlaneseq
        %v1674 = vshrl.u32 %v1673, 7
        %v1675 = vsub.s32 0, %v1674
        %v1676 = vrot.slane %v1551, %v1675
        %v1677 = vlaneseq
        %v1678 = vshrl.u32 %v1677, 7
        %v1679 = vsub.s32 0, %v1678
        %v1680 = vrot.slane %v1565, %v1679
        %v1681 = vlaneseq
        %v1682 = vshrl.u32 %v1681, 7
        %v1683 = vsub.s32 0, %v1682
        %v1684 = vrot.slane %v1573, %v1683
        %v1685 = vlaneseq
        %v1686 = vshrl.u32 %v1685, 7
        %v1687 = vsub.s32 0, %v1686
        %v1688 = vrot.slane %v1575, %v1687
        %v1689 = vlaneseq
        %v1690 = vshrl.u32 %v1689, 7
        %v1691 = vsub.s32 0, %v1690
        %v1692 = vrot.slane %v1558, %v1691
        %v1693 = vlaneseq
        %v1694 = vshrl.u32 %v1693, 7
        %v1695 = vsub.s32 0, %v1694
        %v1696 = vrot.slane %v1572, %v1695
        %v1697 = vlaneseq
        %v1698 = vshrl.u32 %v1697, 7
        %v1699 = vsub.s32 0, %v1698
        %v1700 = vrot.slane %v1574, %v1699
        %v1701 = vlaneseq
        %v1702 = vshrl.u32 %v1701, 7
        %v1703 = vsub.s32 0, %v1702
        %v1704 = vrot.slane %v1576, %v1703
        %v1713 = vmul.f32 %v1676, %v1584
        %v1714 = vmul.f32 %v1676, %v1588
        %v1715 = vmul.f32 %v1680, %v1596
        %v1716 = vmul.f32 %v1680, %v1600
        %v1717 = vmul.f32 %v1684, %v1608
        %v1718 = vmul.f32 %v1684, %v1612
        %v1719 = vmul.f32 %v1688, %v1620
        %v1720 = vmul.f32 %v1688, %v1624
        %v1721 = vmul.f32 %v1692, %v1632
        %v1722 = vmul.f32 %v1692, %v1636
        %v1723 = vmul.f32 %v1696, %v1644
        %v1724 = vmul.f32 %v1696, %v1648
        %v1725 = vmul.f32 %v1700, %v1656
        %v1726 = vmul.f32 %v1700, %v1660
        %v1727 = vmul.f32 %v1704, %v1668
        %v1728 = vmul.f32 %v1704, %v1672
        %1729 = vst.msk [vmem:[#allocation5] sm:$0xff] %vm631, %v1713
        %1730 = vst.msk [vmem:[#allocation5 + $0x8] sm:$0xff] %vm631, %v1714
        %1731 = vst.msk [vmem:[#allocation5 + $0x10] sm:$0xff] %vm631, %v1715
        %1732 = vst.msk [vmem:[#allocation5 + $0x18] sm:$0xff] %vm631, %v1716
        %1733 = vst.msk [vmem:[#allocation5 + $0x20] sm:$0xff] %vm631, %v1717
        %1734 = vst.msk [vmem:[#allocation5 + $0x28] sm:$0xff] %vm631, %v1718
        %1735 = vst.msk [vmem:[#allocation5 + $0x30] sm:$0xff] %vm631, %v1719
        %1736 = vst.msk [vmem:[#allocation5 + $0x38] sm:$0xff] %vm631, %v1720
        %1737 = vst.msk [vmem:[#allocation5 + $0x40] sm:$0xff] %vm631, %v1721
        %1738 = vst.msk [vmem:[#allocation5 + $0x48] sm:$0xff] %vm631, %v1722
        %1739 = vst.msk [vmem:[#allocation5 + $0x50] sm:$0xff] %vm631, %v1723
        %1740 = vst.msk [vmem:[#allocation5 + $0x58] sm:$0xff] %vm631, %v1724
        %1741 = vst.msk [vmem:[#allocation5 + $0x60] sm:$0xff] %vm631, %v1725
        %1742 = vst.msk [vmem:[#allocation5 + $0x68] sm:$0xff] %vm631, %v1726
        %1743 = vst.msk [vmem:[#allocation5 + $0x70] sm:$0xff] %vm631, %v1727
        %1744 = vst.msk [vmem:[#allocation5 + $0x78] sm:$0xff] %vm631, %v1728
        %v1745 = vld [vmem:[#allocation2] sm:$0xff]
        %v1746 = vld [vmem:[#allocation2 + $0x8] sm:$0xff]
        %v1747 = vmul.f32 %v1745, 0.0
        %v1748 = vmul.f32 %v1746, 0.0
        %v1749 = vld [vmem:[#allocation3] sm:$0xff]
        %v1750 = vld [vmem:[#allocation3 + $0x8] sm:$0xff]
        %v1751 = vadd.f32 %v1747, %v1749
        %v1752 = vadd.f32 %v1748, %v1750
        %1753 = vst.msk [vmem:[#allocation3] sm:$0xff] %vm631, %v1751
        %1754 = vst.msk [vmem:[#allocation3 + $0x8] sm:$0xff] %vm631, %v1752
        %s1755 = scalar_lea.vmem [#allocation4], 112
        %v1756 = vld [vmem:[%s1755] sm:$0xff]
        %v1757 = vld [vmem:[%s1755 + $0x8] sm:$0xff]
        %v1758 = vmul.f32 %v1756, 0.0
        %v1759 = vmul.f32 %v1757, 0.0
        %s1760 = scalar_lea.vmem [#allocation5], 112
        %v1761 = vld [vmem:[%s1760] sm:$0xff]
        %v1762 = vld [vmem:[%s1760 + $0x8] sm:$0xff]
        %v1763 = vadd.f32 %v1758, %v1761
        %v1764 = vadd.f32 %v1759, %v1762
        %1765 = vst.msk [vmem:[%s1760] sm:$0xff] %vm631, %v1763
        %1766 = vst.msk [vmem:[%s1760 + $0x8] sm:$0xff] %vm631, %v1764
        %s1767 = scalar_lea.vmem [#allocation2], 16
        %v1768 = vld [vmem:[%s1767] sm:$0xff]
        %v1769 = vld [vmem:[%s1767 + $0x8] sm:$0xff]
        %v1770 = vmul.f32 %v1768, %v1751
        %v1771 = vmul.f32 %v1769, %v1752
        %s1772 = scalar_lea.vmem [#allocation3], 16
        %v1773 = vld [vmem:[%s1772] sm:$0xff]
        %v1774 = vld [vmem:[%s1772 + $0x8] sm:$0xff]
        %v1775 = vadd.f32 %v1770, %v1773
        %v1776 = vadd.f32 %v1771, %v1774
        %1777 = vst.msk [vmem:[%s1772] sm:$0xff] %vm631, %v1775
        %1778 = vst.msk [vmem:[%s1772 + $0x8] sm:$0xff] %vm631, %v1776
        %s1779 = scalar_lea.vmem [#allocation4], 96
        %v1780 = vld [vmem:[%s1779] sm:$0xff]
        %v1781 = vld [vmem:[%s1779 + $0x8] sm:$0xff]
        %v1782 = vmul.f32 %v1780, %v1763
        %v1783 = vmul.f32 %v1781, %v1764
        %s1784 = scalar_lea.vmem [#allocation5], 96
        %v1785 = vld [vmem:[%s1784] sm:$0xff]
        %v1786 = vld [vmem:[%s1784 + $0x8] sm:$0xff]
        %v1787 = vadd.f32 %v1782, %v1785
        %v1788 = vadd.f32 %v1783, %v1786
        %1789 = vst.msk [vmem:[%s1784] sm:$0xff] %vm631, %v1787
        %1790 = vst.msk [vmem:[%s1784 + $0x8] sm:$0xff] %vm631, %v1788
        %s1791 = scalar_lea.vmem [#allocation2], 32
        %v1792 = vld [vmem:[%s1791] sm:$0xff]
        %v1793 = vld [vmem:[%s1791 + $0x8] sm:$0xff]
        %v1794 = vmul.f32 %v1792, %v1775
        %v1795 = vmul.f32 %v1793, %v1776
        %s1796 = scalar_lea.vmem [#allocation3], 32
        %v1797 = vld [vmem:[%s1796] sm:$0xff]
        %v1798 = vld [vmem:[%s1796 + $0x8] sm:$0xff]
        %v1799 = vadd.f32 %v1794, %v1797
        %v1800 = vadd.f32 %v1795, %v1798
        %1801 = vst.msk [vmem:[%s1796] sm:$0xff] %vm631, %v1799
        %1802 = vst.msk [vmem:[%s1796 + $0x8] sm:$0xff] %vm631, %v1800
        %s1803 = scalar_lea.vmem [#allocation4], 80
        %v1804 = vld [vmem:[%s1803] sm:$0xff]
        %v1805 = vld [vmem:[%s1803 + $0x8] sm:$0xff]
        %v1806 = vmul.f32 %v1804, %v1787
        %v1807 = vmul.f32 %v1805, %v1788
        %s1808 = scalar_lea.vmem [#allocation5], 80
        %v1809 = vld [vmem:[%s1808] sm:$0xff]
        %v1810 = vld [vmem:[%s1808 + $0x8] sm:$0xff]
        %v1811 = vadd.f32 %v1806, %v1809
        %v1812 = vadd.f32 %v1807, %v1810
        %1813 = vst.msk [vmem:[%s1808] sm:$0xff] %vm631, %v1811
        %1814 = vst.msk [vmem:[%s1808 + $0x8] sm:$0xff] %vm631, %v1812
        %s1815 = scalar_lea.vmem [#allocation2], 48
        %v1816 = vld [vmem:[%s1815] sm:$0xff]
        %v1817 = vld [vmem:[%s1815 + $0x8] sm:$0xff]
        %v1818 = vmul.f32 %v1816, %v1799
        %v1819 = vmul.f32 %v1817, %v1800
        %s1820 = scalar_lea.vmem [#allocation3], 48
        %v1821 = vld [vmem:[%s1820] sm:$0xff]
        %v1822 = vld [vmem:[%s1820 + $0x8] sm:$0xff]
        %v1823 = vadd.f32 %v1818, %v1821
        %v1824 = vadd.f32 %v1819, %v1822
        %1825 = vst.msk [vmem:[%s1820] sm:$0xff] %vm631, %v1823
        %1826 = vst.msk [vmem:[%s1820 + $0x8] sm:$0xff] %vm631, %v1824
        %s1827 = scalar_lea.vmem [#allocation4], 64
        %v1828 = vld [vmem:[%s1827] sm:$0xff]
        %v1829 = vld [vmem:[%s1827 + $0x8] sm:$0xff]
        %v1830 = vmul.f32 %v1828, %v1811
        %v1831 = vmul.f32 %v1829, %v1812
        %s1832 = scalar_lea.vmem [#allocation5], 64
        %v1833 = vld [vmem:[%s1832] sm:$0xff]
        %v1834 = vld [vmem:[%s1832 + $0x8] sm:$0xff]
        %v1835 = vadd.f32 %v1830, %v1833
        %v1836 = vadd.f32 %v1831, %v1834
        %1837 = vst.msk [vmem:[%s1832] sm:$0xff] %vm631, %v1835
        %1838 = vst.msk [vmem:[%s1832 + $0x8] sm:$0xff] %vm631, %v1836
        %s1839 = scalar_lea.vmem [#allocation2], 64
        %v1840 = vld [vmem:[%s1839] sm:$0xff]
        %v1841 = vld [vmem:[%s1839 + $0x8] sm:$0xff]
        %v1842 = vmul.f32 %v1840, %v1823
        %v1843 = vmul.f32 %v1841, %v1824
        %s1844 = scalar_lea.vmem [#allocation3], 64
        %v1845 = vld [vmem:[%s1844] sm:$0xff]
        %v1846 = vld [vmem:[%s1844 + $0x8] sm:$0xff]
        %v1847 = vadd.f32 %v1842, %v1845
        %v1848 = vadd.f32 %v1843, %v1846
        %1849 = vst.msk [vmem:[%s1844] sm:$0xff] %vm631, %v1847
        %1850 = vst.msk [vmem:[%s1844 + $0x8] sm:$0xff] %vm631, %v1848
        %s1851 = scalar_lea.vmem [#allocation4], 48
        %v1852 = vld [vmem:[%s1851] sm:$0xff]
        %v1853 = vld [vmem:[%s1851 + $0x8] sm:$0xff]
        %v1854 = vmul.f32 %v1852, %v1835
        %v1855 = vmul.f32 %v1853, %v1836
        %s1856 = scalar_lea.vmem [#allocation5], 48
        %v1857 = vld [vmem:[%s1856] sm:$0xff]
        %v1858 = vld [vmem:[%s1856 + $0x8] sm:$0xff]
        %v1859 = vadd.f32 %v1854, %v1857
        %v1860 = vadd.f32 %v1855, %v1858
        %1861 = vst.msk [vmem:[%s1856] sm:$0xff] %vm631, %v1859
        %1862 = vst.msk [vmem:[%s1856 + $0x8] sm:$0xff] %vm631, %v1860
        %s1863 = scalar_lea.vmem [#allocation2], 80
        %v1864 = vld [vmem:[%s1863] sm:$0xff]
        %v1865 = vld [vmem:[%s1863 + $0x8] sm:$0xff]
        %v1866 = vmul.f32 %v1864, %v1847
        %v1867 = vmul.f32 %v1865, %v1848
        %s1868 = scalar_lea.vmem [#allocation3], 80
        %v1869 = vld [vmem:[%s1868] sm:$0xff]
        %v1870 = vld [vmem:[%s1868 + $0x8] sm:$0xff]
        %v1871 = vadd.f32 %v1866, %v1869
        %v1872 = vadd.f32 %v1867, %v1870
        %1873 = vst.msk [vmem:[%s1868] sm:$0xff] %vm631, %v1871
        %1874 = vst.msk [vmem:[%s1868 + $0x8] sm:$0xff] %vm631, %v1872
        %s1875 = scalar_lea.vmem [#allocation4], 32
        %v1876 = vld [vmem:[%s1875] sm:$0xff]
        %v1877 = vld [vmem:[%s1875 + $0x8] sm:$0xff]
        %v1878 = vmul.f32 %v1876, %v1859
        %v1879 = vmul.f32 %v1877, %v1860
        %s1880 = scalar_lea.vmem [#allocation5], 32
        %v1881 = vld [vmem:[%s1880] sm:$0xff]
        %v1882 = vld [vmem:[%s1880 + $0x8] sm:$0xff]
        %v1883 = vadd.f32 %v1878, %v1881
        %v1884 = vadd.f32 %v1879, %v1882
        %1885 = vst.msk [vmem:[%s1880] sm:$0xff] %vm631, %v1883
        %1886 = vst.msk [vmem:[%s1880 + $0x8] sm:$0xff] %vm631, %v1884
        %s1887 = scalar_lea.vmem [#allocation2], 96
        %v1888 = vld [vmem:[%s1887] sm:$0xff]
        %v1889 = vld [vmem:[%s1887 + $0x8] sm:$0xff]
        %v1890 = vmul.f32 %v1888, %v1871
        %v1891 = vmul.f32 %v1889, %v1872
        %s1892 = scalar_lea.vmem [#allocation3], 96
        %v1893 = vld [vmem:[%s1892] sm:$0xff]
        %v1894 = vld [vmem:[%s1892 + $0x8] sm:$0xff]
        %v1895 = vadd.f32 %v1890, %v1893
        %v1896 = vadd.f32 %v1891, %v1894
        %1897 = vst.msk [vmem:[%s1892] sm:$0xff] %vm631, %v1895
        %1898 = vst.msk [vmem:[%s1892 + $0x8] sm:$0xff] %vm631, %v1896
        %s1899 = scalar_lea.vmem [#allocation4], 16
        %v1900 = vld [vmem:[%s1899] sm:$0xff]
        %v1901 = vld [vmem:[%s1899 + $0x8] sm:$0xff]
        %v1902 = vmul.f32 %v1900, %v1883
        %v1903 = vmul.f32 %v1901, %v1884
        %s1904 = scalar_lea.vmem [#allocation5], 16
        %v1905 = vld [vmem:[%s1904] sm:$0xff]
        %v1906 = vld [vmem:[%s1904 + $0x8] sm:$0xff]
        %v1907 = vadd.f32 %v1902, %v1905
        %v1908 = vadd.f32 %v1903, %v1906
        %1909 = vst.msk [vmem:[%s1904] sm:$0xff] %vm631, %v1907
        %1910 = vst.msk [vmem:[%s1904 + $0x8] sm:$0xff] %vm631, %v1908
        %s1911 = scalar_lea.vmem [#allocation2], 112
        %v1912 = vld [vmem:[%s1911] sm:$0xff]
        %v1913 = vld [vmem:[%s1911 + $0x8] sm:$0xff]
        %v1914 = vmul.f32 %v1912, %v1895
        %v1915 = vmul.f32 %v1913, %v1896
        %s1916 = scalar_lea.vmem [#allocation3], 112
        %v1917 = vld [vmem:[%s1916] sm:$0xff]
        %v1918 = vld [vmem:[%s1916 + $0x8] sm:$0xff]
        %v1919 = vadd.f32 %v1914, %v1917
        %v1920 = vadd.f32 %v1915, %v1918
        %1921 = vst.msk [vmem:[%s1916] sm:$0xff] %vm631, %v1919
        %1922 = vst.msk [vmem:[%s1916 + $0x8] sm:$0xff] %vm631, %v1920
        %v1923 = vld [vmem:[#allocation4] sm:$0xff]
        %v1924 = vld [vmem:[#allocation4 + $0x8] sm:$0xff]
        %v1925 = vmul.f32 %v1923, %v1907
        %v1926 = vmul.f32 %v1924, %v1908
        %v1927 = vld [vmem:[#allocation5] sm:$0xff]
        %v1928 = vld [vmem:[#allocation5 + $0x8] sm:$0xff]
        %v1929 = vadd.f32 %v1925, %v1927
        %v1930 = vadd.f32 %v1926, %v1928
        %1931 = vst.msk [vmem:[#allocation5] sm:$0xff] %vm631, %v1929
        %1932 = vst.msk [vmem:[#allocation5 + $0x8] sm:$0xff] %vm631, %v1930
        %v1933 = vld [vmem:[#allocation3] sm:$0xff]
        %v1934 = vld [vmem:[#allocation3 + $0x8] sm:$0xff]
        %v1935 = vld [vmem:[#allocation3 + $0x10] sm:$0xff]
        %v1936 = vld [vmem:[#allocation3 + $0x18] sm:$0xff]
        %v1937 = vld [vmem:[#allocation3 + $0x20] sm:$0xff]
        %v1938 = vld [vmem:[#allocation3 + $0x28] sm:$0xff]
        %v1939 = vld [vmem:[#allocation3 + $0x30] sm:$0xff]
        %v1940 = vld [vmem:[#allocation3 + $0x38] sm:$0xff]
        %v1941 = vld [vmem:[#allocation3 + $0x40] sm:$0xff]
        %v1942 = vld [vmem:[#allocation3 + $0x48] sm:$0xff]
        %v1943 = vld [vmem:[#allocation3 + $0x50] sm:$0xff]
        %v1944 = vld [vmem:[#allocation3 + $0x58] sm:$0xff]
        %v1945 = vld [vmem:[#allocation3 + $0x60] sm:$0xff]
        %v1946 = vld [vmem:[#allocation3 + $0x68] sm:$0xff]
        %v1947 = vld [vmem:[#allocation3 + $0x70] sm:$0xff]
        %v1948 = vld [vmem:[#allocation3 + $0x78] sm:$0xff]
        %s1950 = sor.u32 256, 48
        %1951 = vbcast.lane.b32.xlu0 %v1113, %s1950
        %v1952 = vpop.permute.xlu0 %1951
        %s1954 = sor.u32 256, 56
        %1955 = vbcast.lane.b32.xlu0 %v1113, %s1954
        %v1956 = vpop.permute.xlu0 %1955
        %s1958 = sor.u32 256, 48
        %1959 = vbcast.lane.b32.xlu0 %v1125, %s1958
        %v1960 = vpop.permute.xlu0 %1959
        %s1962 = sor.u32 256, 56
        %1963 = vbcast.lane.b32.xlu0 %v1125, %s1962
        %v1964 = vpop.permute.xlu0 %1963
        %s1966 = sor.u32 256, 48
        %1967 = vbcast.lane.b32.xlu0 %v1137, %s1966
        %v1968 = vpop.permute.xlu0 %1967
        %s1970 = sor.u32 256, 56
        %1971 = vbcast.lane.b32.xlu0 %v1137, %s1970
        %v1972 = vpop.permute.xlu0 %1971
        %s1974 = sor.u32 256, 48
        %1975 = vbcast.lane.b32.xlu0 %v1149, %s1974
        %v1976 = vpop.permute.xlu0 %1975
        %s1978 = sor.u32 256, 56
        %1979 = vbcast.lane.b32.xlu0 %v1149, %s1978
        %v1980 = vpop.permute.xlu0 %1979
        %s1982 = sor.u32 256, 48
        %1983 = vbcast.lane.b32.xlu0 %v1161, %s1982
        %v1984 = vpop.permute.xlu0 %1983
        %s1986 = sor.u32 256, 56
        %1987 = vbcast.lane.b32.xlu0 %v1161, %s1986
        %v1988 = vpop.permute.xlu0 %1987
        %s1990 = sor.u32 256, 48
        %1991 = vbcast.lane.b32.xlu0 %v1173, %s1990
        %v1992 = vpop.permute.xlu0 %1991
        %s1994 = sor.u32 256, 56
        %1995 = vbcast.lane.b32.xlu0 %v1173, %s1994
        %v1996 = vpop.permute.xlu0 %1995
        %s1998 = sor.u32 256, 48
        %1999 = vbcast.lane.b32.xlu0 %v1185, %s1998
        %v2000 = vpop.permute.xlu0 %1999
        %s2002 = sor.u32 256, 56
        %2003 = vbcast.lane.b32.xlu0 %v1185, %s2002
        %v2004 = vpop.permute.xlu0 %2003
        %s2006 = sor.u32 256, 48
        %2007 = vbcast.lane.b32.xlu0 %v1197, %s2006
        %v2008 = vpop.permute.xlu0 %2007
        %s2010 = sor.u32 256, 56
        %2011 = vbcast.lane.b32.xlu0 %v1197, %s2010
        %v2012 = vpop.permute.xlu0 %2011
        %v2013 = vmul.f32 %v1933, %v1952
        %v2014 = vmul.f32 %v1934, %v1956
        %v2015 = vmul.f32 %v1935, %v1960
        %v2016 = vmul.f32 %v1936, %v1964
        %v2017 = vmul.f32 %v1937, %v1968
        %v2018 = vmul.f32 %v1938, %v1972
        %v2019 = vmul.f32 %v1939, %v1976
        %v2020 = vmul.f32 %v1940, %v1980
        %v2021 = vmul.f32 %v1941, %v1984
        %v2022 = vmul.f32 %v1942, %v1988
        %v2023 = vmul.f32 %v1943, %v1992
        %v2024 = vmul.f32 %v1944, %v1996
        %v2025 = vmul.f32 %v1945, %v2000
        %v2026 = vmul.f32 %v1946, %v2004
        %v2027 = vmul.f32 %v1947, %v2008
        %v2028 = vmul.f32 %v1948, %v2012
        %v2029 = vsel %vm631, %v2013, 0.0
        %v2030 = vsel %vm631, %v2014, 0.0
        %v2031 = vadd.f32 %v2029, %v2030
        %v2032 = vrot.slane %v2031, 4
        %v2033 = vadd.f32 %v2031, %v2032
        %v2034 = vrot.slane %v2033, 2
        %v2035 = vadd.f32 %v2033, %v2034
        %v2036 = vrot.slane %v2035, 1
        %v2037 = vadd.f32 %v2035, %v2036
        %v2038 = vsel %vm631, %v2015, 0.0
        %v2039 = vsel %vm631, %v2016, 0.0
        %v2040 = vadd.f32 %v2038, %v2039
        %v2041 = vrot.slane %v2040, 4
        %v2042 = vadd.f32 %v2040, %v2041
        %v2043 = vrot.slane %v2042, 2
        %v2044 = vadd.f32 %v2042, %v2043
        %v2045 = vrot.slane %v2044, 1
        %v2046 = vadd.f32 %v2044, %v2045
        %v2047 = vsel %vm631, %v2017, 0.0
        %v2048 = vsel %vm631, %v2018, 0.0
        %v2049 = vadd.f32 %v2047, %v2048
        %v2050 = vrot.slane %v2049, 4
        %v2051 = vadd.f32 %v2049, %v2050
        %v2052 = vrot.slane %v2051, 2
        %v2053 = vadd.f32 %v2051, %v2052
        %v2054 = vrot.slane %v2053, 1
        %v2055 = vadd.f32 %v2053, %v2054
        %v2056 = vsel %vm631, %v2019, 0.0
        %v2057 = vsel %vm631, %v2020, 0.0
        %v2058 = vadd.f32 %v2056, %v2057
        %v2059 = vrot.slane %v2058, 4
        %v2060 = vadd.f32 %v2058, %v2059
        %v2061 = vrot.slane %v2060, 2
        %v2062 = vadd.f32 %v2060, %v2061
        %v2063 = vrot.slane %v2062, 1
        %v2064 = vadd.f32 %v2062, %v2063
        %v2065 = vsel %vm631, %v2021, 0.0
        %v2066 = vsel %vm631, %v2022, 0.0
        %v2067 = vadd.f32 %v2065, %v2066
        %v2068 = vrot.slane %v2067, 4
        %v2069 = vadd.f32 %v2067, %v2068
        %v2070 = vrot.slane %v2069, 2
        %v2071 = vadd.f32 %v2069, %v2070
        %v2072 = vrot.slane %v2071, 1
        %v2073 = vadd.f32 %v2071, %v2072
        %v2074 = vsel %vm631, %v2023, 0.0
        %v2075 = vsel %vm631, %v2024, 0.0
        %v2076 = vadd.f32 %v2074, %v2075
        %v2077 = vrot.slane %v2076, 4
        %v2078 = vadd.f32 %v2076, %v2077
        %v2079 = vrot.slane %v2078, 2
        %v2080 = vadd.f32 %v2078, %v2079
        %v2081 = vrot.slane %v2080, 1
        %v2082 = vadd.f32 %v2080, %v2081
        %v2083 = vsel %vm631, %v2025, 0.0
        %v2084 = vsel %vm631, %v2026, 0.0
        %v2085 = vadd.f32 %v2083, %v2084
        %v2086 = vrot.slane %v2085, 4
        %v2087 = vadd.f32 %v2085, %v2086
        %v2088 = vrot.slane %v2087, 2
        %v2089 = vadd.f32 %v2087, %v2088
        %v2090 = vrot.slane %v2089, 1
        %v2091 = vadd.f32 %v2089, %v2090
        %v2092 = vsel %vm631, %v2027, 0.0
        %v2093 = vsel %vm631, %v2028, 0.0
        %v2094 = vadd.f32 %v2092, %v2093
        %v2095 = vrot.slane %v2094, 4
        %v2096 = vadd.f32 %v2094, %v2095
        %v2097 = vrot.slane %v2096, 2
        %v2098 = vadd.f32 %v2096, %v2097
        %v2099 = vrot.slane %v2098, 1
        %v2100 = vadd.f32 %v2098, %v2099
        %v2101 = vld [vmem:[#allocation5] sm:$0xff]
        %v2102 = vld [vmem:[#allocation5 + $0x8] sm:$0xff]
        %v2103 = vld [vmem:[#allocation5 + $0x10] sm:$0xff]
        %v2104 = vld [vmem:[#allocation5 + $0x18] sm:$0xff]
        %v2105 = vld [vmem:[#allocation5 + $0x20] sm:$0xff]
        %v2106 = vld [vmem:[#allocation5 + $0x28] sm:$0xff]
        %v2107 = vld [vmem:[#allocation5 + $0x30] sm:$0xff]
        %v2108 = vld [vmem:[#allocation5 + $0x38] sm:$0xff]
        %v2109 = vld [vmem:[#allocation5 + $0x40] sm:$0xff]
        %v2110 = vld [vmem:[#allocation5 + $0x48] sm:$0xff]
        %v2111 = vld [vmem:[#allocation5 + $0x50] sm:$0xff]
        %v2112 = vld [vmem:[#allocation5 + $0x58] sm:$0xff]
        %v2113 = vld [vmem:[#allocation5 + $0x60] sm:$0xff]
        %v2114 = vld [vmem:[#allocation5 + $0x68] sm:$0xff]
        %v2115 = vld [vmem:[#allocation5 + $0x70] sm:$0xff]
        %v2116 = vld [vmem:[#allocation5 + $0x78] sm:$0xff]
        %s2118 = sor.u32 256, 48
        %2119 = vbcast.lane.b32.xlu0 %v1580, %s2118
        %v2120 = vpop.permute.xlu0 %2119
        %s2122 = sor.u32 256, 56
        %2123 = vbcast.lane.b32.xlu0 %v1580, %s2122
        %v2124 = vpop.permute.xlu0 %2123
        %s2126 = sor.u32 256, 48
        %2127 = vbcast.lane.b32.xlu0 %v1592, %s2126
        %v2128 = vpop.permute.xlu0 %2127
        %s2130 = sor.u32 256, 56
        %2131 = vbcast.lane.b32.xlu0 %v1592, %s2130
        %v2132 = vpop.permute.xlu0 %2131
        %s2134 = sor.u32 256, 48
        %2135 = vbcast.lane.b32.xlu0 %v1604, %s2134
        %v2136 = vpop.permute.xlu0 %2135
        %s2138 = sor.u32 256, 56
        %2139 = vbcast.lane.b32.xlu0 %v1604, %s2138
        %v2140 = vpop.permute.xlu0 %2139
        %s2142 = sor.u32 256, 48
        %2143 = vbcast.lane.b32.xlu0 %v1616, %s2142
        %v2144 = vpop.permute.xlu0 %2143
        %s2146 = sor.u32 256, 56
        %2147 = vbcast.lane.b32.xlu0 %v1616, %s2146
        %v2148 = vpop.permute.xlu0 %2147
        %s2150 = sor.u32 256, 48
        %2151 = vbcast.lane.b32.xlu0 %v1628, %s2150
        %v2152 = vpop.permute.xlu0 %2151
        %s2154 = sor.u32 256, 56
        %2155 = vbcast.lane.b32.xlu0 %v1628, %s2154
        %v2156 = vpop.permute.xlu0 %2155
        %s2158 = sor.u32 256, 48
        %2159 = vbcast.lane.b32.xlu0 %v1640, %s2158
        %v2160 = vpop.permute.xlu0 %2159
        %s2162 = sor.u32 256, 56
        %2163 = vbcast.lane.b32.xlu0 %v1640, %s2162
        %v2164 = vpop.permute.xlu0 %2163
        %s2166 = sor.u32 256, 48
        %2167 = vbcast.lane.b32.xlu0 %v1652, %s2166
        %v2168 = vpop.permute.xlu0 %2167
        %s2170 = sor.u32 256, 56
        %2171 = vbcast.lane.b32.xlu0 %v1652, %s2170
        %v2172 = vpop.permute.xlu0 %2171
        %s2174 = sor.u32 256, 48
        %2175 = vbcast.lane.b32.xlu0 %v1664, %s2174
        %v2176 = vpop.permute.xlu0 %2175
        %s2178 = sor.u32 256, 56
        %2179 = vbcast.lane.b32.xlu0 %v1664, %s2178
        %v2180 = vpop.permute.xlu0 %2179
        %v2181 = vmul.f32 %v2101, %v2120
        %v2182 = vmul.f32 %v2102, %v2124
        %v2183 = vmul.f32 %v2103, %v2128
        %v2184 = vmul.f32 %v2104, %v2132
        %v2185 = vmul.f32 %v2105, %v2136
        %v2186 = vmul.f32 %v2106, %v2140
        %v2187 = vmul.f32 %v2107, %v2144
        %v2188 = vmul.f32 %v2108, %v2148
        %v2189 = vmul.f32 %v2109, %v2152
        %v2190 = vmul.f32 %v2110, %v2156
        %v2191 = vmul.f32 %v2111, %v2160
        %v2192 = vmul.f32 %v2112, %v2164
        %v2193 = vmul.f32 %v2113, %v2168
        %v2194 = vmul.f32 %v2114, %v2172
        %v2195 = vmul.f32 %v2115, %v2176
        %v2196 = vmul.f32 %v2116, %v2180
        %v2197 = vsel %vm631, %v2181, 0.0
        %v2198 = vsel %vm631, %v2182, 0.0
        %v2199 = vadd.f32 %v2197, %v2198
        %v2200 = vrot.slane %v2199, 4
        %v2201 = vadd.f32 %v2199, %v2200
        %v2202 = vrot.slane %v2201, 2
        %v2203 = vadd.f32 %v2201, %v2202
        %v2204 = vrot.slane %v2203, 1
        %v2205 = vadd.f32 %v2203, %v2204
        %v2206 = vsel %vm631, %v2183, 0.0
        %v2207 = vsel %vm631, %v2184, 0.0
        %v2208 = vadd.f32 %v2206, %v2207
        %v2209 = vrot.slane %v2208, 4
        %v2210 = vadd.f32 %v2208, %v2209
        %v2211 = vrot.slane %v2210, 2
        %v2212 = vadd.f32 %v2210, %v2211
        %v2213 = vrot.slane %v2212, 1
        %v2214 = vadd.f32 %v2212, %v2213
        %v2215 = vsel %vm631, %v2185, 0.0
        %v2216 = vsel %vm631, %v2186, 0.0
        %v2217 = vadd.f32 %v2215, %v2216
        %v2218 = vrot.slane %v2217, 4
        %v2219 = vadd.f32 %v2217, %v2218
        %v2220 = vrot.slane %v2219, 2
        %v2221 = vadd.f32 %v2219, %v2220
        %v2222 = vrot.slane %v2221, 1
        %v2223 = vadd.f32 %v2221, %v2222
        %v2224 = vsel %vm631, %v2187, 0.0
        %v2225 = vsel %vm631, %v2188, 0.0
        %v2226 = vadd.f32 %v2224, %v2225
        %v2227 = vrot.slane %v2226, 4
        %v2228 = vadd.f32 %v2226, %v2227
        %v2229 = vrot.slane %v2228, 2
        %v2230 = vadd.f32 %v2228, %v2229
        %v2231 = vrot.slane %v2230, 1
        %v2232 = vadd.f32 %v2230, %v2231
        %v2233 = vsel %vm631, %v2189, 0.0
        %v2234 = vsel %vm631, %v2190, 0.0
        %v2235 = vadd.f32 %v2233, %v2234
        %v2236 = vrot.slane %v2235, 4
        %v2237 = vadd.f32 %v2235, %v2236
        %v2238 = vrot.slane %v2237, 2
        %v2239 = vadd.f32 %v2237, %v2238
        %v2240 = vrot.slane %v2239, 1
        %v2241 = vadd.f32 %v2239, %v2240
        %v2242 = vsel %vm631, %v2191, 0.0
        %v2243 = vsel %vm631, %v2192, 0.0
        %v2244 = vadd.f32 %v2242, %v2243
        %v2245 = vrot.slane %v2244, 4
        %v2246 = vadd.f32 %v2244, %v2245
        %v2247 = vrot.slane %v2246, 2
        %v2248 = vadd.f32 %v2246, %v2247
        %v2249 = vrot.slane %v2248, 1
        %v2250 = vadd.f32 %v2248, %v2249
        %v2251 = vsel %vm631, %v2193, 0.0
        %v2252 = vsel %vm631, %v2194, 0.0
        %v2253 = vadd.f32 %v2251, %v2252
        %v2254 = vrot.slane %v2253, 4
        %v2255 = vadd.f32 %v2253, %v2254
        %v2256 = vrot.slane %v2255, 2
        %v2257 = vadd.f32 %v2255, %v2256
        %v2258 = vrot.slane %v2257, 1
        %v2259 = vadd.f32 %v2257, %v2258
        %v2260 = vsel %vm631, %v2195, 0.0
        %v2261 = vsel %vm631, %v2196, 0.0
        %v2262 = vadd.f32 %v2260, %v2261
        %v2263 = vrot.slane %v2262, 4
        %v2264 = vadd.f32 %v2262, %v2263
        %v2265 = vrot.slane %v2264, 2
        %v2266 = vadd.f32 %v2264, %v2265
        %v2267 = vrot.slane %v2266, 1
        %v2268 = vadd.f32 %v2266, %v2267
        %v2269 = vld [vmem:[#allocation18] sm:$0x1]
        %v2271 = vlaneseq
        %v2272 = vshrl.u32 %v2271, 7
        %v2273 = vsub.s32 0, %v2272
        %v2274 = vrot.slane %v2269, %v2273
        %v2276 = vmul.f32 %v816, %v2274
        %v2278 = vrot.slane %v2276, 1
        %v2279 = vrot.slane %v2276, 2
        %v2280 = vrot.slane %v2276, 3
        %v2281 = vrot.slane %v2276, 4
        %v2282 = vrot.slane %v2276, 5
        %v2283 = vrot.slane %v2276, 6
        %v2284 = vrot.slane %v2276, 7
        %v2293 = vadd.f32 %v2037, %v2276
        %v2294 = vadd.f32 %v2046, %v2278
        %v2295 = vadd.f32 %v2055, %v2279
        %v2296 = vadd.f32 %v2064, %v2280
        %v2297 = vadd.f32 %v2073, %v2281
        %v2298 = vadd.f32 %v2082, %v2282
        %v2299 = vadd.f32 %v2091, %v2283
        %v2300 = vadd.f32 %v2100, %v2284
        %v2301 = vld [vmem:[%s14] sm:$0x1]
        %v2303 = vlaneseq
        %v2304 = vshrl.u32 %v2303, 7
        %v2305 = vsub.s32 0, %v2304
        %v2306 = vrot.slane %v2301, %v2305
        %2307 = vrot.lane.b32.xlu0 %v2306, 32
        %v2308 = vpop.permute.xlu0 %2307
        %v2310 = vmul.f32 %v816, %v2308
        %v2312 = vrot.slane %v2310, 1
        %v2313 = vrot.slane %v2310, 2
        %v2314 = vrot.slane %v2310, 3
        %v2315 = vrot.slane %v2310, 4
        %v2316 = vrot.slane %v2310, 5
        %v2317 = vrot.slane %v2310, 6
        %v2318 = vrot.slane %v2310, 7
        %2319 = vrot.lane.b32.xlu0 %v2310, 96
        %v2320 = vpop.permute.xlu0 %2319
        %2321 = vrot.lane.b32.xlu0 %v2312, 96
        %v2322 = vpop.permute.xlu0 %2321
        %2323 = vrot.lane.b32.xlu0 %v2313, 96
        %v2324 = vpop.permute.xlu0 %2323
        %2325 = vrot.lane.b32.xlu0 %v2314, 96
        %v2326 = vpop.permute.xlu0 %2325
        %2327 = vrot.lane.b32.xlu0 %v2315, 96
        %v2328 = vpop.permute.xlu0 %2327
        %2329 = vrot.lane.b32.xlu0 %v2316, 96
        %v2330 = vpop.permute.xlu0 %2329
        %2331 = vrot.lane.b32.xlu0 %v2317, 96
        %v2332 = vpop.permute.xlu0 %2331
        %2333 = vrot.lane.b32.xlu0 %v2318, 96
        %v2334 = vpop.permute.xlu0 %2333
        %v2343 = vadd.f32 %v2205, %v2320
        %v2344 = vadd.f32 %v2214, %v2322
        %v2345 = vadd.f32 %v2223, %v2324
        %v2346 = vadd.f32 %v2232, %v2326
        %v2347 = vadd.f32 %v2241, %v2328
        %v2348 = vadd.f32 %v2250, %v2330
        %v2349 = vadd.f32 %v2259, %v2332
        %v2350 = vadd.f32 %v2268, %v2334
        %v2351 = vxor.u32 %v724, 2147483648
        %v2352 = vmul.f32 %v2351, 1.442695
        %v2353 = vpow.pop %v2352
        %v2354 = vadd.f32 %v2353, 1.0
        %v2355 = vrcp.pop %v2354
        %v2356 = vmul.f32 1.0, %v2355
        %v2357 = vmul.f32 %v724, %v2356
        %v2358 = vadd.f32 %v2293, %v2343
        %v2359 = vadd.f32 %v2294, %v2344
        %v2360 = vadd.f32 %v2295, %v2345
        %v2361 = vadd.f32 %v2296, %v2346
        %v2362 = vadd.f32 %v2297, %v2347
        %v2363 = vadd.f32 %v2298, %v2348
        %v2364 = vadd.f32 %v2299, %v2349
        %v2365 = vadd.f32 %v2300, %v2350
        %v2367 = vrot.slane %v2357, 1
        %v2368 = vrot.slane %v2357, 2
        %v2369 = vrot.slane %v2357, 3
        %v2370 = vrot.slane %v2357, 4
        %v2371 = vrot.slane %v2357, 5
        %v2372 = vrot.slane %v2357, 6
        %v2373 = vrot.slane %v2357, 7
        %v2382 = vmul.f32 %v2358, %v2357
        %v2383 = vmul.f32 %v2359, %v2367
        %v2384 = vmul.f32 %v2360, %v2368
        %v2385 = vmul.f32 %v2361, %v2369
        %v2386 = vmul.f32 %v2362, %v2370
        %v2387 = vmul.f32 %v2363, %v2371
        %v2388 = vmul.f32 %v2364, %v2372
        %v2389 = vmul.f32 %v2365, %v2373
        %v2391 = vrot.slane %v630, 1
        %v2392 = vrot.slane %v630, 2
        %v2393 = vrot.slane %v630, 3
        %v2394 = vrot.slane %v630, 4
        %v2395 = vrot.slane %v630, 5
        %v2396 = vrot.slane %v630, 6
        %v2397 = vrot.slane %v630, 7
        %v2406 = vadd.f32 %v2382, %v630
        %v2407 = vadd.f32 %v2383, %v2391
        %v2408 = vadd.f32 %v2384, %v2392
        %v2409 = vadd.f32 %v2385, %v2393
        %v2410 = vadd.f32 %v2386, %v2394
        %v2411 = vadd.f32 %v2387, %v2395
        %v2412 = vadd.f32 %v2388, %v2396
        %v2413 = vadd.f32 %v2389, %v2397
        %v2422 = vrot.slane %v2407, 7
        %vm2423 = vcmask 1041409
        %v2424 = vsel %vm2423, %v2422, %v2406
        %v2425 = vrot.slane %v2408, 6
        %vm2426 = vcmask 1042434
        %v2427 = vsel %vm2426, %v2425, %v2424
        %v2428 = vrot.slane %v2409, 5
        %vm2429 = vcmask 1043459
        %v2430 = vsel %vm2429, %v2428, %v2427
        %v2431 = vrot.slane %v2410, 4
        %vm2432 = vcmask 1044484
        %v2433 = vsel %vm2432, %v2431, %v2430
        %v2434 = vrot.slane %v2411, 3
        %vm2435 = vcmask 1045509
        %v2436 = vsel %vm2435, %v2434, %v2433
        %v2437 = vrot.slane %v2412, 2
        %vm2438 = vcmask 1046534
        %v2439 = vsel %vm2438, %v2437, %v2436
        %v2440 = vrot.slane %v2413, 1
        %vm2441 = vcmask 1047559
        %v2442 = vsel %vm2441, %v2440, %v2439
        %2444 = vst.msk [vmem:[%s628] sm:$0xff] %vm631, %v2442
        %s2445 = sand.u32 %s365, 1
        %s2446 = scalar_lea.sflag [#allocation8], %s2445
        %s2447 = sand.u32 %s365, 1
        %s2448 = smul.addr %s2447, 8
        %s2449 = scalar_lea.vmem [#allocation23], %s2448
        // Predicated region
        $region121: #{tpu_custom_call.1} parent=79 // pred_check
          %p2450 = pneg %p375
        $region122: #{tpu_custom_call.1} parent=79 // pred_check_branch
          %2452 = sbr.rel (%p2450) target = $region124
        $region123: #{tpu_custom_call.1} parent=79 // pred_region
          %s2454 = ssub.s32 128, 128
          %2455 = vsyncadd %s2446, %s2454
          %s2456 = smul.addr %s37, 128
          %s2457 = scalar_lea.hbm %s15, %s2456
          %s2459 = sshll.u32 %s2449, 4
          %s2460 = int_to_ptr.vmem [resolvable:$true] %s2459
          %2462 = dma.vmem_to_hbm [thread:$0]  %s2460, 128, %s2457, %s2446
        $region124: #{tpu_custom_call.1} parent=79 // pred_fallthru
          _
      $region80: #{tpu_custom_call.1} parent=5 // pred_fallthru
        _
      %p2463 = scmp.le.s32.totalorder 2, %s32
      // Predicated region
      $region125: #{tpu_custom_call.1} parent=5 // pred_check
        %p2464 = pneg %p2463
      $region126: #{tpu_custom_call.1} parent=5 // pred_check_branch
        %2466 = sbr.rel (%p2464) target = $region128
      $region127: #{tpu_custom_call.1} parent=5 // pred_region
        %s2467 = ssub.s32 %s32, 2
        // Predicated region
        $region129: #{tpu_custom_call.1} parent=127 // pred_check
          %p2468 = pneg %p381
        $region130: #{tpu_custom_call.1} parent=127 // pred_check_branch
          %2470 = sbr.rel (%p2468) target = $region132
        $region131: #{tpu_custom_call.1} parent=127 // pred_region
          %s2471 = sand.u32 %s366, 1
          %s2472 = scalar_lea.sflag [#allocation8], %s2471
          %s2473 = sand.u32 %s366, 1
          %s2474 = smul.addr %s2473, 8
          %s2475 = scalar_lea.vmem [#allocation23], %s2474
          %2476 = dma.done %s2472, 128
        $region132: #{tpu_custom_call.1} parent=127 // pred_fallthru
          _
      $region128: #{tpu_custom_call.1} parent=5 // pred_fallthru
        _
    $region6: #{tpu_custom_call.1} parent=1 // loop_footer
      %s36 = sadd.s32 1, %s32
    $region7: #{tpu_custom_call.1} parent=1 // loop_footer_branch
      %31 = sbr.rel target = $region3
    $region8: #{tpu_custom_call.1} parent=1 // loop_exit
      _
    %2477 = vsyncpa [#allocation7], 1
    %s2478 = scalar_lea.sflag [#allocation7], 1
    %2479 = vsyncpa %s2478, 1
    %2480 = vsyncpa [#allocation10], 1
    %2481 = vsyncpa [#allocation13], 1
    %2482 = vsyncpa [#allocation16], 1
    %2483 = vsyncpa [#allocation19], 1
    %2484 = vsyncpa [#allocation22], 1
    %2485 = vsyncpa [#allocation8], 1
    %s2486 = scalar_lea.sflag [#allocation8], 1
    %2487 = vsyncpa %s2486, 1

</llo_original>
